<compile_context>
chip_gen: v5e
topology: v5e:2x2
jax: 0.10.0
libtpu: 0.0.40
codegen_flags: <defaults>
</compile_context>

<pallas_src>
import functools

import jax
import jax.numpy as jnp
from jax.experimental import pallas as pl
from jax.experimental.pallas import tpu as pltpu


LANE = 128


# ----------------------------------------------------------------------------
# Tiling / VMEM budgeting helpers (generation aware)
# ----------------------------------------------------------------------------
def _round_up(x, m):
  return (x + m - 1) // m * m


def _cdiv(a, b):
  return -(-a // b)


def _vmem_budget_bytes():
  """VMEM budget with headroom under the physical per-core capacity."""
  try:
    cap = int(pltpu.get_tpu_info().vmem_capacity_bytes)
  except Exception:
    cap = 64 * 1024 * 1024          # conservative (v7x-sized) fallback
  return (cap * 3) // 4             # ~48 MiB on v7x, ~96 MiB on v5e/v6e


def _choose_tiling(C, P, max_lane_tile, vmem_budget):
  """Pick lane tile TP (multiple of 128), tile count NT, padded len NT*TP."""
  p128 = _round_up(P, LANE)
  # Reserve ~half the budget for the double-buffered IO pipeline plus live
  # intermediates (~64*C bytes per lane column, conservative).
  tp_budget = max(LANE, ((vmem_budget // 2) // (64 * C)) // LANE * LANE)
  tp = max(LANE, min(_round_up(max_lane_tile, LANE), tp_budget, p128))
  nt = _cdiv(p128, tp)
  # Keep TP as chosen (only the final tile is partial); the partial-tile mask
  # in the kernel handles the padded columns.
  return tp, nt, tp * nt


def _choose_stash_dtype(C, TP, P_pad, vmem_budget, use_stash):
  """dtype of the (2C, P_pad) stage-0 stash, or None -> recompute fallback."""
  if use_stash is False:
    return None
  C2 = 2 * C
  io_bytes = 4 * 2 * C * TP * 4          # 4 IO arrays, double-buffered, f32
  weight_bytes = 4 * C2 * C2 * 4         # generous bound for packed weights
  headroom = 4 * 1024 * 1024
  avail = vmem_budget - io_bytes - weight_bytes - headroom
  if use_stash is True or 2 * C2 * P_pad * 4 <= avail:
    return jnp.float32
  if 2 * C2 * P_pad * 2 <= avail:        # halve the stash footprint (v7x)
    return jnp.bfloat16
  return None


# ----------------------------------------------------------------------------
# Pallas kernel
# ----------------------------------------------------------------------------
def _make_fsda_kernel(C, TP, NT, P_true, P_pad, stash_dtype):
  C2 = 2 * C
  inv_p = 1.0 / float(P_true)            # python float -> inlined literal
  padded = P_pad != P_true
  use_stash = stash_dtype is not None

  def kernel(re_ref, im_ref, w1_ref, b1_ref, sw1_ref, sw2_ref,
             w2_ref, b2_ref, real_out_ref, imag_out_ref, *scratch):
    if use_stash:
      mp_stash, y_stash, sum_ref, w2g_ref = scratch
    else:
      sum_ref, w2g_ref = scratch

    stage = pl.program_id(1)
    pt = pl.program_id(2)

    def compute_mp_y():
      re = re_ref[0]                               # (C, TP)
      im = im_ref[0]                               # (C, TP)
      # Note: plain sqrt(re^2+im^2) (not hypot); can over/underflow only for
      # |re|,|im| ~ 1e19+, which never happens for image-scale FFTs.
      mag = jnp.sqrt(re * re + im * im)            # torch.abs
      pha = jnp.arctan2(im, re)                    # torch.angle
      mp = jnp.concatenate([mag, pha], axis=0)     # (2C, TP) stacked branches
      # Fused block-diagonal 1x1 conv (mag & pha in one MXU push) + LeakyReLU.
      y = jnp.dot(w1_ref[...], mp,
                  preferred_element_type=jnp.float32) + b1_ref[...]
      y = jnp.maximum(y, 0.1 * y)                  # LeakyReLU(0.1)
      return mp, y

    @pl.when(stage == 0)
    def _accumulate():
      mp, y = compute_mp_y()

      @pl.when(pt == 0)
      def _reset():
        sum_ref[...] = jnp.zeros_like(sum_ref)

      if padded:
        # Only the final lane tile can contain padded columns; mask them out
        # of the SE pool there and keep full (cheap) sums everywhere else.
        @pl.when(pt != NT - 1)
        def _full_tile():
          sum_ref[...] += jnp.sum(y, axis=1, keepdims=True)

        @pl.when(pt == NT - 1)
        def _partial_tile():
          col = (NT - 1) * TP + jax.lax.broadcasted_iota(
              jnp.int32, (C2, TP), 1)
          sum_ref[...] += jnp.sum(jnp.where(col < P_true, y, 0.0),
                                  axis=1, keepdims=True)
      else:
        sum_ref[...] += jnp.sum(y, axis=1, keepdims=True)

      if use_stash:
        off = pl.multiple_of(pt * TP, TP)
        mp_stash[:, pl.ds(off, TP)] = mp.astype(stash_dtype)
        y_stash[:, pl.ds(off, TP)] = y.astype(stash_dtype)

    @pl.when(stage == 1)
    def _apply():
      @pl.when(pt == 0)
      def _gate():
        s = sum_ref[...] * inv_p                                   # (2C, 1)
        h = jnp.maximum(
            jnp.dot(sw1_ref[...], s, preferred_element_type=jnp.float32),
            0.0)                                                   # (2Cr, 1)
        gate = jax.nn.sigmoid(
            jnp.dot(sw2_ref[...], h, preferred_element_type=jnp.float32))
        # Fold the SE gate into the conv2 weight: w2_g = w2 @ diag(gate), so
        # stage 1 needs no per-element gate multiply.
        eye = (jax.lax.broadcasted_iota(jnp.int32, (C2, C2), 0) ==
               jax.lax.broadcasted_iota(jnp.int32, (C2, C2), 1))
        diag_g = jnp.where(eye, gate, 0.0)
        w2g_ref[...] = jnp.dot(w2_ref[...], diag_g,
                               preferred_element_type=jnp.float32)

      if use_stash:
        off = pl.multiple_of(pt * TP, TP)
        mp = mp_stash[:, pl.ds(off, TP)].astype(jnp.float32)
        y = y_stash[:, pl.ds(off, TP)].astype(jnp.float32)
      else:
        mp, y = compute_mp_y()       # recompute fallback (stash didn't fit)

      out = mp + jnp.dot(w2g_ref[...], y,
                         preferred_element_type=jnp.float32) + b2_ref[...]
      mag_out = out[:C]
      pha_out = out[C:]
      real_out_ref[0] = mag_out * jnp.cos(pha_out)
      imag_out_ref[0] = mag_out * jnp.sin(pha_out)

  return kernel


# ----------------------------------------------------------------------------
# Weight packing: block-diagonal fusion of the mag / pha branches
# ----------------------------------------------------------------------------
def _pack_params(params):
  def blockdiag(a, b):
    ra, ca = a.shape
    rb, cb = b.shape
    top = jnp.concatenate([a, jnp.zeros((ra, cb), a.dtype)], axis=1)
    bot = jnp.concatenate([jnp.zeros((rb, ca), b.dtype), b], axis=1)
    return jnp.concatenate([top, bot], axis=0)

  w1 = blockdiag(params["w1m"], params["w1p"])
  b1 = jnp.concatenate([params["b1m"], params["b1p"]], axis=0)
  sw1 = blockdiag(params["sw1m"], params["sw1p"])
  sw2 = blockdiag(params["sw2m"], params["sw2p"])
  w2 = blockdiag(params["w2m"], params["w2p"])
  b2 = jnp.concatenate([params["b2m"], params["b2p"]], axis=0)
  return w1, b1, sw1, sw2, w2, b2


# ----------------------------------------------------------------------------
# pallas_call wrapper
# ----------------------------------------------------------------------------
def fsda_freq_pallas(re, im, params, *, max_lane_tile=4096, use_stash=None):
  """re, im: (B, C, P) float32.  Returns (real, imag), each (B, C, P)."""
  B, C, P = re.shape
  w1, b1, sw1, sw2, w2, b2 = _pack_params(params)
  C2 = 2 * C
  Cr2 = sw1.shape[0]

  vmem_budget = _vmem_budget_bytes()
  TP, NT, P_pad = _choose_tiling(C, P, max_lane_tile, vmem_budget)
  stash_dtype = _choose_stash_dtype(C, TP, P_pad, vmem_budget, use_stash)

  if P_pad != P:
    pad = P_pad - P
    re = jnp.pad(re, ((0, 0), (0, 0), (0, pad)))
    im = jnp.pad(im, ((0, 0), (0, 0), (0, pad)))

  kernel = _make_fsda_kernel(C, TP, NT, P, P_pad, stash_dtype)

  def full(shape):
    return pl.BlockSpec(shape, lambda b, s, p: (0,) * len(shape))

  if stash_dtype is not None:
    # Stage 1 reads everything from the VMEM stash, so pin the re/im block
    # index to the last stage-0 tile -> no input DMA at all during stage 1.
    in_map = lambda b, s, p: (b, 0, (1 - s) * p + s * (NT - 1))
  else:
    in_map = lambda b, s, p: (b, 0, p)
  io_in = pl.BlockSpec((1, C, TP), in_map)

  # Stage 0 never writes outputs; the output block index is pinned to tile 0
  # during stage 0 so no un-written block is ever flushed (stage 1 tile 0
  # fully overwrites it before the block index changes).  Covered by the
  # NT>1 / B>1 tests below.
  io_out = pl.BlockSpec((1, C, TP), lambda b, s, p: (b, 0, s * p))

  scratch = []
  if stash_dtype is not None:
    scratch += [pltpu.VMEM((C2, P_pad), stash_dtype),
                pltpu.VMEM((C2, P_pad), stash_dtype)]
  scratch += [pltpu.VMEM((C2, 1), jnp.float32),      # SE sums
              pltpu.VMEM((C2, C2), jnp.float32)]     # gate-folded conv2 weight

  fn = pl.pallas_call(
      kernel,
      out_shape=(jax.ShapeDtypeStruct((B, C, P_pad), jnp.float32),
                 jax.ShapeDtypeStruct((B, C, P_pad), jnp.float32)),
      grid_spec=pltpu.PrefetchScalarGridSpec(
          num_scalar_prefetch=0,
          grid=(B, 2, NT),
          in_specs=[io_in, io_in,
                    full((C2, C2)), full((C2, 1)),
                    full((Cr2, C2)), full((C2, Cr2)),
                    full((C2, C2)), full((C2, 1))],
          out_specs=(io_out, io_out),
          scratch_shapes=scratch,
      ),
      compiler_params=pltpu.CompilerParams(
          dimension_semantics=("parallel", "arbitrary", "arbitrary"),
          vmem_limit_bytes=vmem_budget,
      ),
  )
  real_p, imag_p = fn(re, im, w1, b1, sw1, sw2, w2, b2)
  if P_pad != P:
    real_p = real_p[:, :, :P]
    imag_p = imag_p[:, :, :P]
  return real_p, imag_p


# ----------------------------------------------------------------------------
# Full module forward: rfft2 -> Pallas freq-domain processing -> irfft2
# ----------------------------------------------------------------------------
@functools.partial(jax.jit, static_argnames=("max_lane_tile", "use_stash"))
def fsda_forward(x, params, max_lane_tile=4096, use_stash=None):
  B, C, H, W = x.shape
  # TODO(synk): rfft2/irfft2 have no Pallas TPU equivalent; kept in XLA.
  x_freq = jnp.fft.rfft2(x, norm="backward")           # (B, C, H, W//2+1)
  Wf = W // 2 + 1
  P = H * Wf
  re = jnp.real(x_freq).astype(jnp.float32).reshape(B, C, P)
  im = jnp.imag(x_freq).astype(jnp.float32).reshape(B, C, P)

  real_out, imag_out = fsda_freq_pallas(
      re, im, params, max_lane_tile=max_lane_tile, use_stash=use_stash)

  x_out = (real_out + 1j * imag_out).reshape(B, C, H, Wf)
  return jnp.fft.irfft2(x_out, s=(H, W), norm="backward")


# ----------------------------------------------------------------------------
# Pure-JAX reference (mirrors the PyTorch module) for correctness checking
# ----------------------------------------------------------------------------
def fsda_reference(x, params):
  B, C, H, W = x.shape
  xf = jnp.fft.rfft2(x, norm="backward")
  mag = jnp.abs(xf).astype(jnp.float32)
  pha = jnp.angle(xf).astype(jnp.float32)

  def branch(t, w1, b1, sw1, sw2, w2, b2):
    y = jnp.einsum("oc,bchw->bohw", w1, t) + b1[None, :, None, None]
    y = jnp.where(y >= 0.0, y, 0.1 * y)
    s = jnp.mean(y, axis=(2, 3))                       # (B, C)
    h = jnp.maximum(s @ sw1.T, 0.0)                    # (B, Cr)
    g = jax.nn.sigmoid(h @ sw2.T)                      # (B, C)
    y = y * g[:, :, None, None]
    y = jnp.einsum("oc,bchw->bohw", w2, y) + b2[None, :, None, None]
    return y

  mag_out = mag + branch(mag, params["w1m"], params["b1m"][:, 0],
                         params["sw1m"], params["sw2m"],
                         params["w2m"], params["b2m"][:, 0])
  pha_out = pha + branch(pha, params["w1p"], params["b1p"][:, 0],
                         params["sw1p"], params["sw2p"],
                         params["w2p"], params["b2p"][:, 0])
  x_out = mag_out * jnp.cos(pha_out) + 1j * (mag_out * jnp.sin(pha_out))
  return jnp.fft.irfft2(x_out, s=(H, W), norm="backward")


def make_params(key, nc, reduction=16):
  cr = max(nc // reduction, 1)
  ks = jax.random.split(key, 12)
  scale_c = 1.0 / jnp.sqrt(nc)
  scale_cr = 1.0 / jnp.sqrt(cr)
  return {
      "w1m": jax.random.normal(ks[0], (nc, nc), jnp.float32) * scale_c,
      "b1m": jax.random.normal(ks[1], (nc, 1), jnp.float32) * scale_c,
      "sw1m": jax.random.normal(ks[2], (cr, nc), jnp.float32) * scale_c,
      "sw2m": jax.random.normal(ks[3], (nc, cr), jnp.float32) * scale_cr,
      "w2m": jax.random.normal(ks[4], (nc, nc), jnp.float32) * scale_c,
      "b2m": jax.random.normal(ks[5], (nc, 1), jnp.float32) * scale_c,
      "w1p": jax.random.normal(ks[6], (nc, nc), jnp.float32) * scale_c,
      "b1p": jax.random.normal(ks[7], (nc, 1), jnp.float32) * scale_c,
      "sw1p": jax.random.normal(ks[8], (cr, nc), jnp.float32) * scale_c,
      "sw2p": jax.random.normal(ks[9], (nc, cr), jnp.float32) * scale_cr,
      "w2p": jax.random.normal(ks[10], (nc, nc), jnp.float32) * scale_c,
      "b2p": jax.random.normal(ks[11], (nc, 1), jnp.float32) * scale_c,
  }


if __name__ == "__main__":
  key = jax.random.PRNGKey(0)
  k_x, k_p = jax.random.split(key)

  B, C, H, W = 2, 32, 16, 16       # nc=32 -> SE hidden = 2, P = 16*9 = 144
  x = jax.random.normal(k_x, (B, C, H, W), jnp.float32)
  params = make_params(k_p, C)

  ref = jax.block_until_ready(fsda_reference(x, params))

  # Default tiling: P padded 144 -> 256, single 256-lane tile per batch elem,
  # f32 VMEM stash.
  out = jax.block_until_ready(fsda_forward(x, params))
  assert out.shape == (B, C, H, W)
  assert jnp.allclose(out, ref, rtol=1e-3, atol=2e-3), (
      float(jnp.max(jnp.abs(out - ref))))

  # Multi-tile path (two 128-lane tiles): exercises the two-stage SE
  # accumulation, the partial-tile mask and the stash dynamic-slice indexing.
  out2 = jax.block_until_ready(fsda_forward(x, params, max_lane_tile=128))
  assert jnp.allclose(out2, ref, rtol=1e-3, atol=2e-3), (
      float(jnp.max(jnp.abs(out2 - ref))))

  # Recompute fallback (stash disabled), used when the (2C, P_pad) stash does
  # not fit the VMEM budget.
  out3 = jax.block_until_ready(
      fsda_forward(x, params, max_lane_tile=128, use_stash=False))
  assert jnp.allclose(out3, ref, rtol=1e-3, atol=2e-3), (
      float(jnp.max(jnp.abs(out3 - ref))))

  print("KERNEL_OK")
</pallas_src>

<mosaic_0001>
module attributes {stable_mosaic.version = 11 : i64} {
  func.func @kernel(%arg0: i32, %arg1: i32, %arg2: i32, %arg3: memref<1x32x256xf32, #tpu.memory_space<vmem>>, %arg4: memref<1x32x256xf32, #tpu.memory_space<vmem>>, %arg5: memref<64x64xf32, #tpu.memory_space<vmem>>, %arg6: memref<64x1xf32, #tpu.memory_space<vmem>>, %arg7: memref<4x64xf32, #tpu.memory_space<vmem>>, %arg8: memref<64x4xf32, #tpu.memory_space<vmem>>, %arg9: memref<64x64xf32, #tpu.memory_space<vmem>>, %arg10: memref<64x1xf32, #tpu.memory_space<vmem>>, %arg11: memref<1x32x256xf32, #tpu.memory_space<vmem>>, %arg12: memref<1x32x256xf32, #tpu.memory_space<vmem>>, %arg13: memref<64x256xf32, #tpu.memory_space<vmem>>, %arg14: memref<64x256xf32, #tpu.memory_space<vmem>>, %arg15: memref<64x1xf32, #tpu.memory_space<vmem>>, %arg16: memref<64x64xf32, #tpu.memory_space<vmem>>) attributes {dimension_semantics = [#tpu.dimension_semantics<parallel>, #tpu.dimension_semantics<arbitrary>, #tpu.dimension_semantics<arbitrary>], iteration_bounds = array<i64: 2, 2, 1>, scalar_prefetch = 0 : i64, scratch_operands = 4 : i64, tpu.core_type = #tpu.core_type<tc>, window_params = [{transform_indices = @transform_0, window_bounds = array<i64: 1, 32, 256>}, {transform_indices = @transform_1, window_bounds = array<i64: 1, 32, 256>}, {pipeline_mode = #tpu.pipeline_mode<synchronous>, transform_indices = @transform_2, window_bounds = array<i64: 64, 64>}, {pipeline_mode = #tpu.pipeline_mode<synchronous>, transform_indices = @transform_3, window_bounds = array<i64: 64, 1>}, {pipeline_mode = #tpu.pipeline_mode<synchronous>, transform_indices = @transform_4, window_bounds = array<i64: 4, 64>}, {pipeline_mode = #tpu.pipeline_mode<synchronous>, transform_indices = @transform_5, window_bounds = array<i64: 64, 4>}, {pipeline_mode = #tpu.pipeline_mode<synchronous>, transform_indices = @transform_6, window_bounds = array<i64: 64, 64>}, {pipeline_mode = #tpu.pipeline_mode<synchronous>, transform_indices = @transform_7, window_bounds = array<i64: 64, 1>}, {transform_indices = @transform_8, window_bounds = array<i64: 1, 32, 256>}, {transform_indices = @transform_9, window_bounds = array<i64: 1, 32, 256>}]} {
    %c0_i32 = arith.constant 0 : i32
    %0 = arith.cmpi eq, %arg1, %c0_i32 : i32
    %1 = arith.extui %0 : i1 to i32
    %c0_i32_0 = arith.constant 0 : i32
    %2 = arith.cmpi ne, %1, %c0_i32_0 : i32
    scf.if %2 {
      %c0 = arith.constant 0 : index
      %c0_2 = arith.constant 0 : index
      %c0_3 = arith.constant 0 : index
      %6 = vector.load %arg3[%c0, %c0_2, %c0_3] : memref<1x32x256xf32, #tpu.memory_space<vmem>>, vector<1x32x256xf32>
      %7 = vector.shape_cast %6 : vector<1x32x256xf32> to vector<32x256xf32>
      %c0_4 = arith.constant 0 : index
      %c0_5 = arith.constant 0 : index
      %c0_6 = arith.constant 0 : index
      %8 = vector.load %arg4[%c0_4, %c0_5, %c0_6] : memref<1x32x256xf32, #tpu.memory_space<vmem>>, vector<1x32x256xf32>
      %9 = vector.shape_cast %8 : vector<1x32x256xf32> to vector<32x256xf32>
      %10 = arith.mulf %7, %7 : vector<32x256xf32>
      %11 = arith.mulf %9, %9 : vector<32x256xf32>
      %12 = arith.addf %10, %11 : vector<32x256xf32>
      %13 = math.sqrt %12 : vector<32x256xf32>
      %14 = math.atan2 %9, %7 : vector<32x256xf32>
      %15 = tpu.concatenate %13, %14 in 0 : vector<32x256xf32>, vector<32x256xf32> -> vector<64x256xf32>
      %c0_7 = arith.constant 0 : index
      %c0_8 = arith.constant 0 : index
      %16 = vector.load %arg5[%c0_7, %c0_8] : memref<64x64xf32, #tpu.memory_space<vmem>>, vector<64x64xf32>
      %cst = arith.constant dense<0.000000e+00> : vector<64x256xf32>
      %17 = tpu.matmul %16, %15, %cst {dimension_numbers = #tpu.dot_dimension_numbers<[1], [0], [0], [1], [0, 0, 1, 1], [], []>} : vector<64x64xf32>, vector<64x256xf32>, vector<64x256xf32> -> vector<64x256xf32>
      %c0_9 = arith.constant 0 : index
      %c0_10 = arith.constant 0 : index
      %18 = vector.load %arg6[%c0_9, %c0_10] : memref<64x1xf32, #tpu.memory_space<vmem>>, vector<64x1xf32>
      %19 = vector.broadcast %18 : vector<64x1xf32> to vector<64x256xf32>
      %20 = arith.addf %17, %19 : vector<64x256xf32>
      %cst_11 = arith.constant 1.000000e-01 : f32
      %21 = vector.broadcast %cst_11 : f32 to vector<64x256xf32>
      %22 = arith.mulf %21, %20 : vector<64x256xf32>
      %23 = arith.maximumf %20, %22 : vector<64x256xf32>
      %c0_i32_12 = arith.constant 0 : i32
      %24 = arith.cmpi eq, %arg2, %c0_i32_12 : i32
      %25 = arith.extui %24 : i1 to i32
      %c0_i32_13 = arith.constant 0 : i32
      %26 = arith.cmpi ne, %25, %c0_i32_13 : i32
      scf.if %26 {
        %cst_20 = arith.constant 0.000000e+00 : f32
        %39 = vector.broadcast %cst_20 : f32 to vector<64x1xf32>
        %c0_21 = arith.constant 0 : index
        %c0_22 = arith.constant 0 : index
        %40 = vector.load %arg15[%c0_21, %c0_22] : memref<64x1xf32, #tpu.memory_space<vmem>>, vector<64x1xf32>
        tpu.vector_store %arg15[%c0_21, %c0_22], %39 {strides = array<i32>} : memref<64x1xf32, #tpu.memory_space<vmem>>, vector<64x1xf32>,
      } else {
      }
      %c0_i32_14 = arith.constant 0 : i32
      %27 = arith.cmpi ne, %arg2, %c0_i32_14 : i32
      %28 = arith.extui %27 : i1 to i32
      %c0_i32_15 = arith.constant 0 : i32
      %29 = arith.cmpi ne, %28, %c0_i32_15 : i32
      scf.if %29 {
        %c0_20 = arith.constant 0 : index
        %c0_21 = arith.constant 0 : index
        %39 = vector.load %arg15[%c0_20, %c0_21] : memref<64x1xf32, #tpu.memory_space<vmem>>, vector<64x1xf32>
        %cst_22 = arith.constant dense<0.000000e+00> : vector<64xf32>
        %40 = vector.multi_reduction <add>, %23, %cst_22 [1] : vector<64x256xf32> to vector<64xf32>
        %41 = vector.shape_cast %40 : vector<64xf32> to vector<64x1xf32>
        %42 = arith.addf %39, %41 : vector<64x1xf32>
        %c0_23 = arith.constant 0 : index
        %c0_24 = arith.constant 0 : index
        %43 = vector.load %arg15[%c0_23, %c0_24] : memref<64x1xf32, #tpu.memory_space<vmem>>, vector<64x1xf32>
        tpu.vector_store %arg15[%c0_23, %c0_24], %42 {strides = array<i32>} : memref<64x1xf32, #tpu.memory_space<vmem>>, vector<64x1xf32>,
      } else {
      }
      %c0_i32_16 = arith.constant 0 : i32
      %30 = arith.cmpi eq, %arg2, %c0_i32_16 : i32
      %31 = arith.extui %30 : i1 to i32
      %c0_i32_17 = arith.constant 0 : i32
      %32 = arith.cmpi ne, %31, %c0_i32_17 : i32
      scf.if %32 {
        %39 = tpu.iota {dimensions = array<i32: 1>} : vector<64x256xi32>
        %c0_i32_20 = arith.constant 0 : i32
        %40 = vector.broadcast %c0_i32_20 : i32 to vector<64x256xi32>
        %41 = arith.addi %40, %39 : vector<64x256xi32>
        %c0_21 = arith.constant 0 : index
        %c0_22 = arith.constant 0 : index
        %42 = vector.load %arg15[%c0_21, %c0_22] : memref<64x1xf32, #tpu.memory_space<vmem>>, vector<64x1xf32>
        %c144_i32 = arith.constant 144 : i32
        %43 = vector.broadcast %c144_i32 : i32 to vector<64x256xi32>
        %44 = arith.cmpi slt, %41, %43 : vector<64x256xi32>
        %cst_23 = arith.constant 0.000000e+00 : f32
        %45 = vector.broadcast %cst_23 : f32 to vector<64x256xf32>
        %46 = arith.select %44, %23, %45 : vector<64x256xi1>, vector<64x256xf32>
        %cst_24 = arith.constant dense<0.000000e+00> : vector<64xf32>
        %47 = vector.multi_reduction <add>, %46, %cst_24 [1] : vector<64x256xf32> to vector<64xf32>
        %48 = vector.shape_cast %47 : vector<64xf32> to vector<64x1xf32>
        %49 = arith.addf %42, %48 : vector<64x1xf32>
        %c0_25 = arith.constant 0 : index
        %c0_26 = arith.constant 0 : index
        %50 = vector.load %arg15[%c0_25, %c0_26] : memref<64x1xf32, #tpu.memory_space<vmem>>, vector<64x1xf32>
        tpu.vector_store %arg15[%c0_25, %c0_26], %49 {strides = array<i32>} : memref<64x1xf32, #tpu.memory_space<vmem>>, vector<64x1xf32>,
      } else {
      }
      %c256_i32 = arith.constant 256 : i32
      %33 = arith.muli %arg2, %c256_i32 : i32
      %34 = tpu.assume_multiple %33, 256 : i32
      %c0_18 = arith.constant 0 : index
      %35 = arith.index_cast %34 : i32 to index
      %36 = vector.load %arg13[%c0_18, %35] : memref<64x256xf32, #tpu.memory_space<vmem>>, vector<64x256xf32>
      tpu.vector_store %arg13[%c0_18, %35], %15 {strides = array<i32>} : memref<64x256xf32, #tpu.memory_space<vmem>>, vector<64x256xf32>,
      %c0_19 = arith.constant 0 : index
      %37 = arith.index_cast %34 : i32 to index
      %38 = vector.load %arg14[%c0_19, %37] : memref<64x256xf32, #tpu.memory_space<vmem>>, vector<64x256xf32>
      tpu.vector_store %arg14[%c0_19, %37], %23 {strides = array<i32>} : memref<64x256xf32, #tpu.memory_space<vmem>>, vector<64x256xf32>,
    } else {
    }
    %c1_i32 = arith.constant 1 : i32
    %3 = arith.cmpi eq, %arg1, %c1_i32 : i32
    %4 = arith.extui %3 : i1 to i32
    %c0_i32_1 = arith.constant 0 : i32
    %5 = arith.cmpi ne, %4, %c0_i32_1 : i32
    scf.if %5 {
      %c0_i32_2 = arith.constant 0 : i32
      %6 = arith.cmpi eq, %arg2, %c0_i32_2 : i32
      %7 = arith.extui %6 : i1 to i32
      %c0_i32_3 = arith.constant 0 : i32
      %8 = arith.cmpi ne, %7, %c0_i32_3 : i32
      scf.if %8 {
        %c0_15 = arith.constant 0 : index
        %c0_16 = arith.constant 0 : index
        %33 = vector.load %arg15[%c0_15, %c0_16] : memref<64x1xf32, #tpu.memory_space<vmem>>, vector<64x1xf32>
        %cst_17 = arith.constant 0.0069444445 : f32
        %34 = vector.broadcast %cst_17 : f32 to vector<64x1xf32>
        %35 = arith.mulf %33, %34 : vector<64x1xf32>
        %c0_18 = arith.constant 0 : index
        %c0_19 = arith.constant 0 : index
        %36 = vector.load %arg7[%c0_18, %c0_19] : memref<4x64xf32, #tpu.memory_space<vmem>>, vector<4x64xf32>
        %cst_20 = arith.constant dense<0.000000e+00> : vector<4x1xf32>
        %37 = tpu.matmul %36, %35, %cst_20 {dimension_numbers = #tpu.dot_dimension_numbers<[1], [0], [0], [1], [0, 0, 1, 1], [], []>} : vector<4x64xf32>, vector<64x1xf32>, vector<4x1xf32> -> vector<4x1xf32>
        %cst_21 = arith.constant 0.000000e+00 : f32
        %38 = vector.broadcast %cst_21 : f32 to vector<4x1xf32>
        %39 = arith.maximumf %37, %38 : vector<4x1xf32>
        %c0_22 = arith.constant 0 : index
        %c0_23 = arith.constant 0 : index
        %40 = vector.load %arg8[%c0_22, %c0_23] : memref<64x4xf32, #tpu.memory_space<vmem>>, vector<64x4xf32>
        %cst_24 = arith.constant dense<0.000000e+00> : vector<64x1xf32>
        %41 = tpu.matmul %40, %39, %cst_24 {dimension_numbers = #tpu.dot_dimension_numbers<[1], [0], [0], [1], [0, 0, 1, 1], [], []>} : vector<64x4xf32>, vector<4x1xf32>, vector<64x1xf32> -> vector<64x1xf32>
        %42 = arith.negf %41 : vector<64x1xf32>
        %43 = math.exp %42 : vector<64x1xf32>
        %cst_25 = arith.constant 1.000000e+00 : f32
        %44 = vector.broadcast %cst_25 : f32 to vector<64x1xf32>
        %45 = arith.addf %44, %43 : vector<64x1xf32>
        %46 = arith.divf %44, %45 : vector<64x1xf32>
        %47 = tpu.iota {dimensions = array<i32: 0>} : vector<64x64xi32>
        %48 = tpu.iota {dimensions = array<i32: 1>} : vector<64x64xi32>
        %49 = arith.cmpi eq, %47, %48 : vector<64x64xi32>
        %cst_26 = arith.constant 0.000000e+00 : f32
        %50 = vector.shape_cast %46 : vector<64x1xf32> to vector<64x1xf32>
        %51 = vector.broadcast %50 : vector<64x1xf32> to vector<64x64xf32>
        %52 = vector.broadcast %cst_26 : f32 to vector<64x64xf32>
        %53 = arith.select %49, %51, %52 : vector<64x64xi1>, vector<64x64xf32>
        %c0_27 = arith.constant 0 : index
        %c0_28 = arith.constant 0 : index
        %54 = vector.load %arg9[%c0_27, %c0_28] : memref<64x64xf32, #tpu.memory_space<vmem>>, vector<64x64xf32>
        %cst_29 = arith.constant dense<0.000000e+00> : vector<64x64xf32>
        %55 = tpu.matmul %54, %53, %cst_29 {dimension_numbers = #tpu.dot_dimension_numbers<[1], [0], [0], [1], [0, 0, 1, 1], [], []>} : vector<64x64xf32>, vector<64x64xf32>, vector<64x64xf32> -> vector<64x64xf32>
        %c0_30 = arith.constant 0 : index
        %c0_31 = arith.constant 0 : index
        %56 = vector.load %arg16[%c0_30, %c0_31] : memref<64x64xf32, #tpu.memory_space<vmem>>, vector<64x64xf32>
        tpu.vector_store %arg16[%c0_30, %c0_31], %55 {strides = array<i32>} : memref<64x64xf32, #tpu.memory_space<vmem>>, vector<64x64xf32>,
      } else {
      }
      %c256_i32 = arith.constant 256 : i32
      %9 = arith.muli %arg2, %c256_i32 : i32
      %10 = tpu.assume_multiple %9, 256 : i32
      %c0 = arith.constant 0 : index
      %11 = arith.index_cast %10 : i32 to index
      %12 = vector.load %arg13[%c0, %11] : memref<64x256xf32, #tpu.memory_space<vmem>>, vector<64x256xf32>
      %c0_4 = arith.constant 0 : index
      %13 = arith.index_cast %10 : i32 to index
      %14 = vector.load %arg14[%c0_4, %13] : memref<64x256xf32, #tpu.memory_space<vmem>>, vector<64x256xf32>
      %c0_5 = arith.constant 0 : index
      %c0_6 = arith.constant 0 : index
      %15 = vector.load %arg16[%c0_5, %c0_6] : memref<64x64xf32, #tpu.memory_space<vmem>>, vector<64x64xf32>
      %cst = arith.constant dense<0.000000e+00> : vector<64x256xf32>
      %16 = tpu.matmul %15, %14, %cst {dimension_numbers = #tpu.dot_dimension_numbers<[1], [0], [0], [1], [0, 0, 1, 1], [], []>} : vector<64x64xf32>, vector<64x256xf32>, vector<64x256xf32> -> vector<64x256xf32>
      %17 = arith.addf %12, %16 : vector<64x256xf32>
      %c0_7 = arith.constant 0 : index
      %c0_8 = arith.constant 0 : index
      %18 = vector.load %arg10[%c0_7, %c0_8] : memref<64x1xf32, #tpu.memory_space<vmem>>, vector<64x1xf32>
      %19 = vector.broadcast %18 : vector<64x1xf32> to vector<64x256xf32>
      %20 = arith.addf %17, %19 : vector<64x256xf32>
      %21 = vector.extract_strided_slice %20 {offsets = [0, 0], sizes = [32, 256], strides = [1, 1]} : vector<64x256xf32> to vector<32x256xf32>
      %22 = vector.extract_strided_slice %20 {offsets = [32, 0], sizes = [32, 256], strides = [1, 1]} : vector<64x256xf32> to vector<32x256xf32>
      %23 = math.cos %22 : vector<32x256xf32>
      %24 = arith.mulf %21, %23 : vector<32x256xf32>
      %c0_9 = arith.constant 0 : index
      %c0_10 = arith.constant 0 : index
      %c0_11 = arith.constant 0 : index
      %25 = vector.load %arg11[%c0_9, %c0_10, %c0_11] : memref<1x32x256xf32, #tpu.memory_space<vmem>>, vector<1x32x256xf32>
      %26 = vector.shape_cast %25 : vector<1x32x256xf32> to vector<32x256xf32>
      %27 = vector.shape_cast %24 : vector<32x256xf32> to vector<1x32x256xf32>
      tpu.vector_store %arg11[%c0_9, %c0_10, %c0_11], %27 {strides = array<i32>} : memref<1x32x256xf32, #tpu.memory_space<vmem>>, vector<1x32x256xf32>,
      %28 = math.sin %22 : vector<32x256xf32>
      %29 = arith.mulf %21, %28 : vector<32x256xf32>
      %c0_12 = arith.constant 0 : index
      %c0_13 = arith.constant 0 : index
      %c0_14 = arith.constant 0 : index
      %30 = vector.load %arg12[%c0_12, %c0_13, %c0_14] : memref<1x32x256xf32, #tpu.memory_space<vmem>>, vector<1x32x256xf32>
      %31 = vector.shape_cast %30 : vector<1x32x256xf32> to vector<32x256xf32>
      %32 = vector.shape_cast %29 : vector<32x256xf32> to vector<1x32x256xf32>
      tpu.vector_store %arg12[%c0_12, %c0_13, %c0_14], %32 {strides = array<i32>} : memref<1x32x256xf32, #tpu.memory_space<vmem>>, vector<1x32x256xf32>,
    } else {
    }
    return
  }
  func.func @transform_0(%arg0: i32, %arg1: i32, %arg2: i32) -> (i32, i32, i32) {
    %c1_i32 = arith.constant 1 : i32
    %0 = arith.subi %c1_i32, %arg1 : i32
    %1 = arith.muli %0, %arg2 : i32
    %c0_i32 = arith.constant 0 : i32
    %2 = arith.muli %arg1, %c0_i32 : i32
    %3 = arith.addi %1, %2 : i32
    %c0_i32_0 = arith.constant 0 : i32
    %c0_i32_1 = arith.constant 0 : i32
    return %arg0, %c0_i32_0, %3 : i32, i32, i32
  }
  func.func @transform_1(%arg0: i32, %arg1: i32, %arg2: i32) -> (i32, i32, i32) {
    %c1_i32 = arith.constant 1 : i32
    %0 = arith.subi %c1_i32, %arg1 : i32
    %1 = arith.muli %0, %arg2 : i32
    %c0_i32 = arith.constant 0 : i32
    %2 = arith.muli %arg1, %c0_i32 : i32
    %3 = arith.addi %1, %2 : i32
    %c0_i32_0 = arith.constant 0 : i32
    %c0_i32_1 = arith.constant 0 : i32
    return %arg0, %c0_i32_0, %3 : i32, i32, i32
  }
  func.func @transform_2(%arg0: i32, %arg1: i32, %arg2: i32) -> (i32, i32) {
    %c0_i32 = arith.constant 0 : i32
    %c0_i32_0 = arith.constant 0 : i32
    %c0_i32_1 = arith.constant 0 : i32
    return %c0_i32, %c0_i32_0 : i32, i32
  }
  func.func @transform_3(%arg0: i32, %arg1: i32, %arg2: i32) -> (i32, i32) {
    %c0_i32 = arith.constant 0 : i32
    %c0_i32_0 = arith.constant 0 : i32
    %c0_i32_1 = arith.constant 0 : i32
    return %c0_i32, %c0_i32_0 : i32, i32
  }
  func.func @transform_4(%arg0: i32, %arg1: i32, %arg2: i32) -> (i32, i32) {
    %c0_i32 = arith.constant 0 : i32
    %c0_i32_0 = arith.constant 0 : i32
    %c0_i32_1 = arith.constant 0 : i32
    return %c0_i32, %c0_i32_0 : i32, i32
  }
  func.func @transform_5(%arg0: i32, %arg1: i32, %arg2: i32) -> (i32, i32) {
    %c0_i32 = arith.constant 0 : i32
    %c0_i32_0 = arith.constant 0 : i32
    %c0_i32_1 = arith.constant 0 : i32
    return %c0_i32, %c0_i32_0 : i32, i32
  }
  func.func @transform_6(%arg0: i32, %arg1: i32, %arg2: i32) -> (i32, i32) {
    %c0_i32 = arith.constant 0 : i32
    %c0_i32_0 = arith.constant 0 : i32
    %c0_i32_1 = arith.constant 0 : i32
    return %c0_i32, %c0_i32_0 : i32, i32
  }
  func.func @transform_7(%arg0: i32, %arg1: i32, %arg2: i32) -> (i32, i32) {
    %c0_i32 = arith.constant 0 : i32
    %c0_i32_0 = arith.constant 0 : i32
    %c0_i32_1 = arith.constant 0 : i32
    return %c0_i32, %c0_i32_0 : i32, i32
  }
  func.func @transform_8(%arg0: i32, %arg1: i32, %arg2: i32) -> (i32, i32, i32) {
    %0 = arith.muli %arg1, %arg2 : i32
    %c0_i32 = arith.constant 0 : i32
    %c0_i32_0 = arith.constant 0 : i32
    return %arg0, %c0_i32, %0 : i32, i32, i32
  }
  func.func @transform_9(%arg0: i32, %arg1: i32, %arg2: i32) -> (i32, i32, i32) {
    %0 = arith.muli %arg1, %arg2 : i32
    %c0_i32 = arith.constant 0 : i32
    %c0_i32_0 = arith.constant 0 : i32
    return %arg0, %c0_i32, %0 : i32, i32, i32
  }
}

</mosaic_0001>

<llo_original>
// kernel: reverse.1
$region0: #{reverse.1}
  #allocation0 [shape = 's32[1]{0}', space=sflag, size = 0x4, scoped, tag = 'scoped memory for reverse.1']
  %s0 = inlined_call_operand.vmem [shape: f32[2,32,16,7], index: 0, kind: input, shape index: {}]
  %s1 = inlined_call_operand.vmem [shape: f32[2,32,16,7], index: 1, kind: output, shape index: {}]
  %s2 = scalar_lea.vmem %s0, 96
  %v3 = vld [vmem:[%s2] sm:$0xff]
  %4 = vst [vmem:[%s1] sm:$0xff] %v3
  %s5 = scalar_lea.vmem %s0, 208
  %v6 = vld [vmem:[%s5] sm:$0xff]
  %s7 = scalar_lea.vmem %s1, 112
  %8 = vst [vmem:[%s7] sm:$0xff] %v6
  %s9 = scalar_lea.vmem %s0, 80
  %v10 = vld [vmem:[%s9] sm:$0xff]
  %s11 = scalar_lea.vmem %s1, 16
  %12 = vst [vmem:[%s11] sm:$0xff] %v10
  %s13 = scalar_lea.vmem %s0, 192
  %v14 = vld [vmem:[%s13] sm:$0xff]
  %s15 = scalar_lea.vmem %s1, 128
  %16 = vst [vmem:[%s15] sm:$0xff] %v14
  %s17 = scalar_lea.vmem %s0, 64
  %v18 = vld [vmem:[%s17] sm:$0xff]
  %s19 = scalar_lea.vmem %s1, 32
  %20 = vst [vmem:[%s19] sm:$0xff] %v18
  %s21 = scalar_lea.vmem %s0, 176
  %v22 = vld [vmem:[%s21] sm:$0xff]
  %s23 = scalar_lea.vmem %s1, 144
  %24 = vst [vmem:[%s23] sm:$0xff] %v22
  %s25 = scalar_lea.vmem %s0, 48
  %v26 = vld [vmem:[%s25] sm:$0xff]
  %s27 = scalar_lea.vmem %s1, 48
  %28 = vst [vmem:[%s27] sm:$0xff] %v26
  %s29 = scalar_lea.vmem %s0, 160
  %v30 = vld [vmem:[%s29] sm:$0xff]
  %s31 = scalar_lea.vmem %s1, 160
  %32 = vst [vmem:[%s31] sm:$0xff] %v30
  %s33 = scalar_lea.vmem %s0, 32
  %v34 = vld [vmem:[%s33] sm:$0xff]
  %s35 = scalar_lea.vmem %s1, 64
  %36 = vst [vmem:[%s35] sm:$0xff] %v34
  %s37 = scalar_lea.vmem %s0, 144
  %v38 = vld [vmem:[%s37] sm:$0xff]
  %s39 = scalar_lea.vmem %s1, 176
  %40 = vst [vmem:[%s39] sm:$0xff] %v38
  %s41 = scalar_lea.vmem %s0, 16
  %v42 = vld [vmem:[%s41] sm:$0xff]
  %s43 = scalar_lea.vmem %s1, 80
  %44 = vst [vmem:[%s43] sm:$0xff] %v42
  %s45 = scalar_lea.vmem %s0, 128
  %v46 = vld [vmem:[%s45] sm:$0xff]
  %s47 = scalar_lea.vmem %s1, 192
  %48 = vst [vmem:[%s47] sm:$0xff] %v46
  %v49 = vld [vmem:[%s0] sm:$0xff]
  %s50 = scalar_lea.vmem %s1, 96
  %51 = vst [vmem:[%s50] sm:$0xff] %v49
  %s52 = scalar_lea.vmem %s0, 112
  %v53 = vld [vmem:[%s52] sm:$0xff]
  %s54 = scalar_lea.vmem %s1, 208
  %55 = vst [vmem:[%s54] sm:$0xff] %v53
  %s56 = scalar_lea.vmem %s0, 104
  %v57 = vld [vmem:[%s56] sm:$0xff]
  %s58 = scalar_lea.vmem %s1, 8
  %59 = vst [vmem:[%s58] sm:$0xff] %v57
  %s60 = scalar_lea.vmem %s0, 216
  %v61 = vld [vmem:[%s60] sm:$0xff]
  %s62 = scalar_lea.vmem %s1, 120
  %63 = vst [vmem:[%s62] sm:$0xff] %v61
  %s64 = scalar_lea.vmem %s0, 88
  %v65 = vld [vmem:[%s64] sm:$0xff]
  %s66 = scalar_lea.vmem %s1, 24
  %67 = vst [vmem:[%s66] sm:$0xff] %v65
  %s68 = scalar_lea.vmem %s0, 200
  %v69 = vld [vmem:[%s68] sm:$0xff]
  %s70 = scalar_lea.vmem %s1, 136
  %71 = vst [vmem:[%s70] sm:$0xff] %v69
  %s72 = scalar_lea.vmem %s0, 72
  %v73 = vld [vmem:[%s72] sm:$0xff]
  %s74 = scalar_lea.vmem %s1, 40
  %75 = vst [vmem:[%s74] sm:$0xff] %v73
  %s76 = scalar_lea.vmem %s0, 184
  %v77 = vld [vmem:[%s76] sm:$0xff]
  %s78 = scalar_lea.vmem %s1, 152
  %79 = vst [vmem:[%s78] sm:$0xff] %v77
  %s80 = scalar_lea.vmem %s0, 56
  %v81 = vld [vmem:[%s80] sm:$0xff]
  %s82 = scalar_lea.vmem %s1, 56
  %83 = vst [vmem:[%s82] sm:$0xff] %v81
  %s84 = scalar_lea.vmem %s0, 168
  %v85 = vld [vmem:[%s84] sm:$0xff]
  %s86 = scalar_lea.vmem %s1, 168
  %87 = vst [vmem:[%s86] sm:$0xff] %v85
  %s88 = scalar_lea.vmem %s0, 40
  %v89 = vld [vmem:[%s88] sm:$0xff]
  %s90 = scalar_lea.vmem %s1, 72
  %91 = vst [vmem:[%s90] sm:$0xff] %v89
  %s92 = scalar_lea.vmem %s0, 152
  %v93 = vld [vmem:[%s92] sm:$0xff]
  %s94 = scalar_lea.vmem %s1, 184
  %95 = vst [vmem:[%s94] sm:$0xff] %v93
  %s96 = scalar_lea.vmem %s0, 24
  %v97 = vld [vmem:[%s96] sm:$0xff]
  %s98 = scalar_lea.vmem %s1, 88
  %99 = vst [vmem:[%s98] sm:$0xff] %v97
  %s100 = scalar_lea.vmem %s0, 136
  %v101 = vld [vmem:[%s100] sm:$0xff]
  %s102 = scalar_lea.vmem %s1, 200
  %103 = vst [vmem:[%s102] sm:$0xff] %v101
  %s104 = scalar_lea.vmem %s0, 8
  %v105 = vld [vmem:[%s104] sm:$0xff]
  %s106 = scalar_lea.vmem %s1, 104
  %107 = vst [vmem:[%s106] sm:$0xff] %v105
  %s108 = scalar_lea.vmem %s0, 120
  %v109 = vld [vmem:[%s108] sm:$0xff]
  %s110 = scalar_lea.vmem %s1, 216
  %111 = vst [vmem:[%s110] sm:$0xff] %v109

// kernel: fsda_forward.1
$region0: #{fsda_forward.1}
  #allocation0 [shape = 'u32[]', space=smem, size = 0x4, offset = 0x4, fixed_abs, tag = 'smem constant byte address 0x4 - core index']
  #allocation1 [shape = 'u32[72,128]{1,0:T(1,128)}', space=vmem, size = 0x9000, scoped, tag = 'internal scratch']
  #allocation2 [shape = 'f32[64,256]{1,0:T(8,128)}', space=vmem, size = 0x10000, scoped, tag = 'scratch operand']
  #allocation3 [shape = 'f32[64,256]{1,0:T(8,128)}', space=vmem, size = 0x10000, scoped, tag = 'scratch operand']
  #allocation4 [shape = 'f32[64,1]{1,0:T(8,128)}', space=vmem, size = 0x8000, scoped, tag = 'scratch operand']
  #allocation5 [shape = 'f32[64,64]{1,0:T(8,128)}', space=vmem, size = 0x8000, scoped, tag = 'scratch operand']
  %s0 = inlined_call_operand.vmem [shape: f32[2,32,256], index: 0, kind: input, shape index: {}]
  %s1 = inlined_call_operand.vmem [shape: f32[2,32,256], index: 1, kind: input, shape index: {}]
  %s2 = inlined_call_operand.vmem [shape: f32[64,64], index: 2, kind: input, shape index: {}]
  %s3 = inlined_call_operand.vmem [shape: f32[64,1], index: 3, kind: input, shape index: {}]
  %s4 = inlined_call_operand.vmem [shape: f32[4,64], index: 4, kind: input, shape index: {}]
  %s5 = inlined_call_operand.vmem [shape: f32[64,4], index: 5, kind: input, shape index: {}]
  %s6 = inlined_call_operand.vmem [shape: f32[64,64], index: 6, kind: input, shape index: {}]
  %s7 = inlined_call_operand.vmem [shape: f32[64,1], index: 7, kind: input, shape index: {}]
  %s8 = inlined_call_operand.vmem [shape: f32[2,32,256], index: 8, kind: output, shape index: {0}]
  %s9 = inlined_call_operand.vmem [shape: f32[2,32,256], index: 9, kind: output, shape index: {1}]
  %10 = xla_tuple %s8, %s9
  %s11 = sld [smem:[#allocation0]]
  $region97: #{fsda_forward.1} parent=0
    _
  %s13 = ssub.s32 1, %s11
  %s14 = scalar_select 0, %s13, %s11
  loop: start=0, step=1, limit=6
  $region2: #{fsda_forward.1} parent=0 // loop_pre_header
    _
  $region3: #{fsda_forward.1} parent=0 // loop_header
    %s16 = sphi 0, %s20
    %p17 = scmp.ge.s32.totalorder %s16, 6
    %s23 = sphi 0, %s42
    %s24 = sphi 0, %s38
    %s25 = sphi 0, %s34
    %s26 = sphi 0, %s23
    %s27 = sphi 0, %s24
    %s28 = sphi 0, %s25
    %s29 = sphi 0, %s26
    %s30 = sphi 0, %s27
    %s31 = sphi 0, %s28
    %s51 = sphi 0, %s53
    %s54 = sphi 0, %s51
    %s55 = sphi 0, %s54
    %s71 = sphi 0, %s55
    %s83 = sphi 0, %s85
    %s86 = sphi 0, %s83
    %s87 = sphi 0, %s86
    %s103 = sphi 0, %s87
    %s107 = sphi 0, %s107
    %s109 = sphi 0, %s107
    %s110 = sphi 0, %s109
    %s124 = sphi 0, %s110
    %s128 = sphi 0, %s128
    %s130 = sphi 0, %s128
    %s131 = sphi 0, %s130
    %s145 = sphi 0, %s131
    %s149 = sphi 0, %s149
    %s151 = sphi 0, %s149
    %s152 = sphi 0, %s151
    %s166 = sphi 0, %s152
    %s170 = sphi 0, %s170
    %s172 = sphi 0, %s170
    %s173 = sphi 0, %s172
    %s187 = sphi 0, %s173
    %s191 = sphi 0, %s191
    %s193 = sphi 0, %s191
    %s194 = sphi 0, %s193
    %s208 = sphi 0, %s194
    %s212 = sphi 0, %s212
    %s214 = sphi 0, %s212
    %s215 = sphi 0, %s214
    %s229 = sphi 0, %s215
    %s239 = sphi 0, %s241
    %s242 = sphi 0, %s239
    %s243 = sphi 0, %s242
    %s259 = sphi 0, %s243
    %s269 = sphi 0, %s271
    %s272 = sphi 0, %s269
    %s273 = sphi 0, %s272
    %s289 = sphi 0, %s273
  $region4: #{fsda_forward.1} parent=0 // loop_header_branch
    %19 = sbr.rel (%p17) target = $region8
  $region5: #{fsda_forward.1} parent=0 // loop_body
    %s21 = ssub.s32 %s16, 1
    %s22 = ssub.s32 %s16, 2
    %s32 = sadd.s32 1, %s25
    %p33 = scmp.ge.s32.totalorder %s32, 1
    %s34 = scalar_select %p33, 0, %s32
    %s35 = sadd.s32 1, %s24
    %s36 = scalar_select %p33, %s35, %s24
    %p37 = scmp.ge.s32.totalorder %s36, 2
    %s38 = scalar_select %p37, 0, %s36
    %s39 = sadd.s32 1, %s23
    %s40 = scalar_select %p37, %s39, %s23
    %p41 = scmp.ge.s32.totalorder %s40, 2
    %s42 = scalar_select %p41, 0, %s40
    %s43 = ssub.s32 1, %s24
    %s44 = smul.u32 %s43, %s25
    %s45 = ssub.s32 1, %s38
    %s46 = smul.u32 %s45, %s34
    %s47 = ssub.s32 %s23, %s42
    %s48 = ssub.s32 %s44, %s46
    %s49 = sor.u32 %s47, %s48
    %p50 = scmp.eq.s32.totalorder %s49, 0
    %s52 = sadd.s32 %s51, 1
    %s53 = scalar_select %p50, %s51, %s52
    %p56 = pneg %p50
    %p57 = scmp.eq.s32.totalorder %s16, 3
    %p58 = por %p56, %p57
    %p59 = scmp.ne.s32.totalorder %s51, %s54
    %p60 = scmp.eq.s32.totalorder %s16, 0
    %p61 = por %p59, %p60
    %p62 = scmp.ne.s32.totalorder %s51, %s54
    %p63 = scmp.eq.s32.totalorder %s21, 3
    %p64 = por %p62, %p63
    %p65 = scmp.ne.s32.totalorder %s54, %s55
    %p66 = scmp.eq.s32.totalorder %s21, 0
    %p67 = por %p65, %p66
    %p68 = scmp.ne.s32.totalorder %s54, %s55
    %p69 = scmp.eq.s32.totalorder %s22, 3
    %p70 = por %p68, %p69
    %p72 = scmp.ne.s32.totalorder %s55, %s71
    %p73 = scmp.eq.s32.totalorder %s22, 0
    %p74 = por %p72, %p73
    %s75 = ssub.s32 1, %s24
    %s76 = smul.u32 %s75, %s25
    %s77 = ssub.s32 1, %s38
    %s78 = smul.u32 %s77, %s34
    %s79 = ssub.s32 %s23, %s42
    %s80 = ssub.s32 %s76, %s78
    %s81 = sor.u32 %s79, %s80
    %p82 = scmp.eq.s32.totalorder %s81, 0
    %s84 = sadd.s32 %s83, 1
    %s85 = scalar_select %p82, %s83, %s84
    %p88 = pneg %p82
    %p89 = scmp.eq.s32.totalorder %s16, 3
    %p90 = por %p88, %p89
    %p91 = scmp.ne.s32.totalorder %s83, %s86
    %p92 = scmp.eq.s32.totalorder %s16, 0
    %p93 = por %p91, %p92
    %p94 = scmp.ne.s32.totalorder %s83, %s86
    %p95 = scmp.eq.s32.totalorder %s21, 3
    %p96 = por %p94, %p95
    %p97 = scmp.ne.s32.totalorder %s86, %s87
    %p98 = scmp.eq.s32.totalorder %s21, 0
    %p99 = por %p97, %p98
    %p100 = scmp.ne.s32.totalorder %s86, %s87
    %p101 = scmp.eq.s32.totalorder %s22, 3
    %p102 = por %p100, %p101
    %p104 = scmp.ne.s32.totalorder %s87, %s103
    %p105 = scmp.eq.s32.totalorder %s22, 0
    %p106 = por %p104, %p105
    %s108 = sadd.s32 %s107, 1
    %p111 = scmp.eq.s32.totalorder %s16, 3
    %p112 = scmp.ne.s32.totalorder %s107, %s109
    %p113 = scmp.eq.s32.totalorder %s16, 0
    %p114 = por %p112, %p113
    %p115 = scmp.ne.s32.totalorder %s107, %s109
    %p116 = scmp.eq.s32.totalorder %s21, 3
    %p117 = por %p115, %p116
    %p118 = scmp.ne.s32.totalorder %s109, %s110
    %p119 = scmp.eq.s32.totalorder %s21, 0
    %p120 = por %p118, %p119
    %p121 = scmp.ne.s32.totalorder %s109, %s110
    %p122 = scmp.eq.s32.totalorder %s22, 3
    %p123 = por %p121, %p122
    %p125 = scmp.ne.s32.totalorder %s110, %s124
    %p126 = scmp.eq.s32.totalorder %s22, 0
    %p127 = por %p125, %p126
    %s129 = sadd.s32 %s128, 1
    %p132 = scmp.eq.s32.totalorder %s16, 3
    %p133 = scmp.ne.s32.totalorder %s128, %s130
    %p134 = scmp.eq.s32.totalorder %s16, 0
    %p135 = por %p133, %p134
    %p136 = scmp.ne.s32.totalorder %s128, %s130
    %p137 = scmp.eq.s32.totalorder %s21, 3
    %p138 = por %p136, %p137
    %p139 = scmp.ne.s32.totalorder %s130, %s131
    %p140 = scmp.eq.s32.totalorder %s21, 0
    %p141 = por %p139, %p140
    %p142 = scmp.ne.s32.totalorder %s130, %s131
    %p143 = scmp.eq.s32.totalorder %s22, 3
    %p144 = por %p142, %p143
    %p146 = scmp.ne.s32.totalorder %s131, %s145
    %p147 = scmp.eq.s32.totalorder %s22, 0
    %p148 = por %p146, %p147
    %s150 = sadd.s32 %s149, 1
    %p153 = scmp.eq.s32.totalorder %s16, 3
    %p154 = scmp.ne.s32.totalorder %s149, %s151
    %p155 = scmp.eq.s32.totalorder %s16, 0
    %p156 = por %p154, %p155
    %p157 = scmp.ne.s32.totalorder %s149, %s151
    %p158 = scmp.eq.s32.totalorder %s21, 3
    %p159 = por %p157, %p158
    %p160 = scmp.ne.s32.totalorder %s151, %s152
    %p161 = scmp.eq.s32.totalorder %s21, 0
    %p162 = por %p160, %p161
    %p163 = scmp.ne.s32.totalorder %s151, %s152
    %p164 = scmp.eq.s32.totalorder %s22, 3
    %p165 = por %p163, %p164
    %p167 = scmp.ne.s32.totalorder %s152, %s166
    %p168 = scmp.eq.s32.totalorder %s22, 0
    %p169 = por %p167, %p168
    %s171 = sadd.s32 %s170, 1
    %p174 = scmp.eq.s32.totalorder %s16, 3
    %p175 = scmp.ne.s32.totalorder %s170, %s172
    %p176 = scmp.eq.s32.totalorder %s16, 0
    %p177 = por %p175, %p176
    %p178 = scmp.ne.s32.totalorder %s170, %s172
    %p179 = scmp.eq.s32.totalorder %s21, 3
    %p180 = por %p178, %p179
    %p181 = scmp.ne.s32.totalorder %s172, %s173
    %p182 = scmp.eq.s32.totalorder %s21, 0
    %p183 = por %p181, %p182
    %p184 = scmp.ne.s32.totalorder %s172, %s173
    %p185 = scmp.eq.s32.totalorder %s22, 3
    %p186 = por %p184, %p185
    %p188 = scmp.ne.s32.totalorder %s173, %s187
    %p189 = scmp.eq.s32.totalorder %s22, 0
    %p190 = por %p188, %p189
    %s192 = sadd.s32 %s191, 1
    %p195 = scmp.eq.s32.totalorder %s16, 3
    %p196 = scmp.ne.s32.totalorder %s191, %s193
    %p197 = scmp.eq.s32.totalorder %s16, 0
    %p198 = por %p196, %p197
    %p199 = scmp.ne.s32.totalorder %s191, %s193
    %p200 = scmp.eq.s32.totalorder %s21, 3
    %p201 = por %p199, %p200
    %p202 = scmp.ne.s32.totalorder %s193, %s194
    %p203 = scmp.eq.s32.totalorder %s21, 0
    %p204 = por %p202, %p203
    %p205 = scmp.ne.s32.totalorder %s193, %s194
    %p206 = scmp.eq.s32.totalorder %s22, 3
    %p207 = por %p205, %p206
    %p209 = scmp.ne.s32.totalorder %s194, %s208
    %p210 = scmp.eq.s32.totalorder %s22, 0
    %p211 = por %p209, %p210
    %s213 = sadd.s32 %s212, 1
    %p216 = scmp.eq.s32.totalorder %s16, 3
    %p217 = scmp.ne.s32.totalorder %s212, %s214
    %p218 = scmp.eq.s32.totalorder %s16, 0
    %p219 = por %p217, %p218
    %p220 = scmp.ne.s32.totalorder %s212, %s214
    %p221 = scmp.eq.s32.totalorder %s21, 3
    %p222 = por %p220, %p221
    %p223 = scmp.ne.s32.totalorder %s214, %s215
    %p224 = scmp.eq.s32.totalorder %s21, 0
    %p225 = por %p223, %p224
    %p226 = scmp.ne.s32.totalorder %s214, %s215
    %p227 = scmp.eq.s32.totalorder %s22, 3
    %p228 = por %p226, %p227
    %p230 = scmp.ne.s32.totalorder %s215, %s229
    %p231 = scmp.eq.s32.totalorder %s22, 0
    %p232 = por %p230, %p231
    %s233 = smul.u32 %s24, %s25
    %s234 = smul.u32 %s38, %s34
    %s235 = ssub.s32 %s23, %s42
    %s236 = ssub.s32 %s233, %s234
    %s237 = sor.u32 %s235, %s236
    %p238 = scmp.eq.s32.totalorder %s237, 0
    %s240 = sadd.s32 %s239, 1
    %s241 = scalar_select %p238, %s239, %s240
    %p244 = pneg %p238
    %p245 = scmp.eq.s32.totalorder %s16, 3
    %p246 = por %p244, %p245
    %p247 = scmp.ne.s32.totalorder %s239, %s242
    %p248 = scmp.eq.s32.totalorder %s16, 0
    %p249 = por %p247, %p248
    %p250 = scmp.ne.s32.totalorder %s239, %s242
    %p251 = scmp.eq.s32.totalorder %s21, 3
    %p252 = por %p250, %p251
    %p253 = scmp.ne.s32.totalorder %s242, %s243
    %p254 = scmp.eq.s32.totalorder %s21, 0
    %p255 = por %p253, %p254
    %p256 = scmp.ne.s32.totalorder %s242, %s243
    %p257 = scmp.eq.s32.totalorder %s22, 3
    %p258 = por %p256, %p257
    %p260 = scmp.ne.s32.totalorder %s243, %s259
    %p261 = scmp.eq.s32.totalorder %s22, 0
    %p262 = por %p260, %p261
    %s263 = smul.u32 %s24, %s25
    %s264 = smul.u32 %s38, %s34
    %s265 = ssub.s32 %s23, %s42
    %s266 = ssub.s32 %s263, %s264
    %s267 = sor.u32 %s265, %s266
    %p268 = scmp.eq.s32.totalorder %s267, 0
    %s270 = sadd.s32 %s269, 1
    %s271 = scalar_select %p268, %s269, %s270
    %p274 = pneg %p268
    %p275 = scmp.eq.s32.totalorder %s16, 3
    %p276 = por %p274, %p275
    %p277 = scmp.ne.s32.totalorder %s269, %s272
    %p278 = scmp.eq.s32.totalorder %s16, 0
    %p279 = por %p277, %p278
    %p280 = scmp.ne.s32.totalorder %s269, %s272
    %p281 = scmp.eq.s32.totalorder %s21, 3
    %p282 = por %p280, %p281
    %p283 = scmp.ne.s32.totalorder %s272, %s273
    %p284 = scmp.eq.s32.totalorder %s21, 0
    %p285 = por %p283, %p284
    %p286 = scmp.ne.s32.totalorder %s272, %s273
    %p287 = scmp.eq.s32.totalorder %s22, 3
    %p288 = por %p286, %p287
    %p290 = scmp.ne.s32.totalorder %s273, %s289
    %p291 = scmp.eq.s32.totalorder %s22, 0
    %p292 = por %p290, %p291
    %p293 = scmp.le.s32.totalorder 1, %s16
    %p294 = scmp.lt.s32.totalorder %s16, 5
    %p295 = pnand %p293, %p294
    %p296 = pneg %p295
    // Predicated region
    $region9: #{fsda_forward.1} parent=5 // pred_check
      _
    $region10: #{fsda_forward.1} parent=5 // pred_check_branch
      %298 = sbr.rel (%p295) target = $region12
    $region11: #{fsda_forward.1} parent=5 // pred_region
      %s299 = ssub.s32 %s16, 1
      // Predicated region
      $region13: #{fsda_forward.1} parent=11 // pred_check
        %p300 = pneg %p120
      $region14: #{fsda_forward.1} parent=11 // pred_check_branch
        %302 = sbr.rel (%p300) target = $region16
      $region15: #{fsda_forward.1} parent=11 // pred_region
        _
      $region16: #{fsda_forward.1} parent=11 // pred_fallthru
        _
      // Predicated region
      $region17: #{fsda_forward.1} parent=11 // pred_check
        %p303 = pneg %p141
      $region18: #{fsda_forward.1} parent=11 // pred_check_branch
        %305 = sbr.rel (%p303) target = $region20
      $region19: #{fsda_forward.1} parent=11 // pred_region
        _
      $region20: #{fsda_forward.1} parent=11 // pred_fallthru
        _
      // Predicated region
      $region21: #{fsda_forward.1} parent=11 // pred_check
        %p306 = pneg %p162
      $region22: #{fsda_forward.1} parent=11 // pred_check_branch
        %308 = sbr.rel (%p306) target = $region24
      $region23: #{fsda_forward.1} parent=11 // pred_region
        _
      $region24: #{fsda_forward.1} parent=11 // pred_fallthru
        _
      // Predicated region
      $region25: #{fsda_forward.1} parent=11 // pred_check
        %p309 = pneg %p183
      $region26: #{fsda_forward.1} parent=11 // pred_check_branch
        %311 = sbr.rel (%p309) target = $region28
      $region27: #{fsda_forward.1} parent=11 // pred_region
        _
      $region28: #{fsda_forward.1} parent=11 // pred_fallthru
        _
      // Predicated region
      $region29: #{fsda_forward.1} parent=11 // pred_check
        %p312 = pneg %p204
      $region30: #{fsda_forward.1} parent=11 // pred_check_branch
        %314 = sbr.rel (%p312) target = $region32
      $region31: #{fsda_forward.1} parent=11 // pred_region
        _
      $region32: #{fsda_forward.1} parent=11 // pred_fallthru
        _
      // Predicated region
      $region33: #{fsda_forward.1} parent=11 // pred_check
        %p315 = pneg %p225
      $region34: #{fsda_forward.1} parent=11 // pred_check_branch
        %317 = sbr.rel (%p315) target = $region36
      $region35: #{fsda_forward.1} parent=11 // pred_region
        _
      $region36: #{fsda_forward.1} parent=11 // pred_fallthru
        _
    $region12: #{fsda_forward.1} parent=5 // pred_fallthru
      _
    %p318 = scmp.lt.s32.totalorder %s16, 4
    // Predicated region
    $region37: #{fsda_forward.1} parent=5 // pred_check
      %p319 = pneg %p318
    $region38: #{fsda_forward.1} parent=5 // pred_check_branch
      %321 = sbr.rel (%p319) target = $region40
    $region39: #{fsda_forward.1} parent=5 // pred_region
      // Predicated region
      $region41: #{fsda_forward.1} parent=39 // pred_check
        %p322 = pneg %p61
      $region42: #{fsda_forward.1} parent=39 // pred_check_branch
        %324 = sbr.rel (%p322) target = $region44
      $region43: #{fsda_forward.1} parent=39 // pred_region
        %s325 = ssub.s32 1, %s24
        %s326 = smul.u32 %s325, %s25
        %s327 = smul.u32 2, %s326
        %p328 = scmp.lt.s32.totalorder %s23, 1
        %s329 = scalar_select %p328, %s23, 1
        %p330 = scmp.lt.s32.totalorder %s327, 1
        %s331 = scalar_select %p330, %s327, 1
        %s332 = smul.addr %s329, 8
        %s333 = sadd.s32 %s331, %s332
        %s334 = smul.addr %s333, 8
        %s335 = scalar_lea.vmem %s0, %s334
        %s336 = ssub.s32 1, %s24
        %s337 = smul.u32 %s336, %s25
        %s338 = smul.u32 2, %s337
      $region44: #{fsda_forward.1} parent=39 // pred_fallthru
        _
      // Predicated region
      $region45: #{fsda_forward.1} parent=39 // pred_check
        %p339 = pneg %p93
      $region46: #{fsda_forward.1} parent=39 // pred_check_branch
        %341 = sbr.rel (%p339) target = $region48
      $region47: #{fsda_forward.1} parent=39 // pred_region
        %s342 = ssub.s32 1, %s24
        %s343 = smul.u32 %s342, %s25
        %s344 = smul.u32 2, %s343
        %p345 = scmp.lt.s32.totalorder %s23, 1
        %s346 = scalar_select %p345, %s23, 1
        %p347 = scmp.lt.s32.totalorder %s344, 1
        %s348 = scalar_select %p347, %s344, 1
        %s349 = smul.addr %s346, 8
        %s350 = sadd.s32 %s348, %s349
        %s351 = smul.addr %s350, 8
        %s352 = scalar_lea.vmem %s1, %s351
        %s353 = ssub.s32 1, %s24
        %s354 = smul.u32 %s353, %s25
        %s355 = smul.u32 2, %s354
      $region48: #{fsda_forward.1} parent=39 // pred_fallthru
        _
    $region40: #{fsda_forward.1} parent=5 // pred_fallthru
      _
    %p356 = scmp.le.s32.totalorder 1, %s16
    %p357 = scmp.lt.s32.totalorder %s16, 5
    %p358 = pnand %p356, %p357
    %p359 = pneg %p358
    // Predicated region
    $region49: #{fsda_forward.1} parent=5 // pred_check
      _
    $region50: #{fsda_forward.1} parent=5 // pred_check_branch
      %361 = sbr.rel (%p358) target = $region52
    $region51: #{fsda_forward.1} parent=5 // pred_region
      %s362 = ssub.s32 %s16, 1
      %s363 = ssub.s32 1, %s27
      %s364 = smul.u32 %s363, %s28
      %s365 = smul.u32 2, %s364
      %p366 = scmp.lt.s32.totalorder %s26, 1
      %s367 = scalar_select %p366, %s26, 1
      %p368 = scmp.lt.s32.totalorder %s365, 1
      %s369 = scalar_select %p368, %s365, 1
      %s370 = smul.addr %s367, 8
      %s371 = sadd.s32 %s369, %s370
      %s372 = smul.addr %s371, 8
      %s373 = scalar_lea.vmem %s0, %s372
      %p374 = pneg %p67
      %p375 = pneg %p64
      %s376 = ssub.s32 1, %s27
      %s377 = smul.u32 %s376, %s28
      %s378 = smul.u32 2, %s377
      %p379 = scmp.lt.s32.totalorder %s26, 1
      %s380 = scalar_select %p379, %s26, 1
      %p381 = scmp.lt.s32.totalorder %s378, 1
      %s382 = scalar_select %p381, %s378, 1
      %s383 = smul.addr %s380, 8
      %s384 = sadd.s32 %s382, %s383
      %s385 = smul.addr %s384, 8
      %s386 = scalar_lea.vmem %s1, %s385
      %p387 = pneg %p99
      %p388 = pneg %p96
      %p389 = pneg %p120
      %p390 = pneg %p117
      %p391 = pneg %p141
      %p392 = pneg %p138
      %p393 = pneg %p162
      %p394 = pneg %p159
      %p395 = pneg %p183
      %p396 = pneg %p180
      %p397 = pneg %p204
      %p398 = pneg %p201
      %p399 = pneg %p225
      %p400 = pneg %p222
      %p401 = pneg %p255
      %p402 = pneg %p252
      %s403 = smul.u32 %s27, %s28
      %s404 = smul.u32 2, %s403
      %p405 = scmp.lt.s32.totalorder %s26, 1
      %s406 = scalar_select %p405, %s26, 1
      %p407 = scmp.lt.s32.totalorder %s404, 1
      %s408 = scalar_select %p407, %s404, 1
      %s409 = smul.addr %s406, 8
      %s410 = sadd.s32 %s408, %s409
      %s411 = smul.addr %s410, 8
      %s412 = scalar_lea.vmem %s8, %s411
      %p413 = pneg %p285
      %p414 = pneg %p282
      %s415 = smul.u32 %s27, %s28
      %s416 = smul.u32 2, %s415
      %p417 = scmp.lt.s32.totalorder %s26, 1
      %s418 = scalar_select %p417, %s26, 1
      %p419 = scmp.lt.s32.totalorder %s416, 1
      %s420 = scalar_select %p419, %s416, 1
      %s421 = smul.addr %s418, 8
      %s422 = sadd.s32 %s420, %s421
      %s423 = smul.addr %s422, 8
      %s424 = scalar_lea.vmem %s9, %s423
      %s425 = ssub.s32 1, %s27
      %s426 = smul.u32 %s425, %s28
      %s427 = smul.u32 2, %s426
      %p428 = scmp.lt.s32.totalorder %s26, 1
      %s429 = scalar_select %p428, %s26, 1
      %p430 = scmp.lt.s32.totalorder %s427, 1
      %s431 = scalar_select %p430, %s427, 1
      %s432 = smul.addr %s429, 8
      %s433 = sadd.s32 %s431, %s432
      %s434 = smul.addr %s433, 8
      %s435 = scalar_lea.vmem %s0, %s434
      %s436 = ssub.s32 1, %s27
      %s437 = smul.u32 %s436, %s28
      %s438 = smul.u32 2, %s437
      %s439 = ssub.s32 1, %s27
      %s440 = smul.u32 %s439, %s28
      %s441 = smul.u32 2, %s440
      %p442 = scmp.lt.s32.totalorder %s26, 1
      %s443 = scalar_select %p442, %s26, 1
      %p444 = scmp.lt.s32.totalorder %s441, 1
      %s445 = scalar_select %p444, %s441, 1
      %s446 = smul.addr %s443, 8
      %s447 = sadd.s32 %s445, %s446
      %s448 = smul.addr %s447, 8
      %s449 = scalar_lea.vmem %s1, %s448
      %s450 = ssub.s32 1, %s27
      %s451 = smul.u32 %s450, %s28
      %s452 = smul.u32 2, %s451
      %s453 = smul.u32 %s27, %s28
      %s454 = smul.u32 2, %s453
      %p455 = scmp.lt.s32.totalorder %s26, 1
      %s456 = scalar_select %p455, %s26, 1
      %p457 = scmp.lt.s32.totalorder %s454, 1
      %s458 = scalar_select %p457, %s454, 1
      %s459 = smul.addr %s456, 8
      %s460 = sadd.s32 %s458, %s459
      %s461 = smul.addr %s460, 8
      %s462 = scalar_lea.vmem %s8, %s461
      %s463 = smul.u32 %s27, %s28
      %s464 = smul.u32 2, %s463
      %s465 = smul.u32 %s27, %s28
      %s466 = smul.u32 2, %s465
      %p467 = scmp.lt.s32.totalorder %s26, 1
      %s468 = scalar_select %p467, %s26, 1
      %p469 = scmp.lt.s32.totalorder %s466, 1
      %s470 = scalar_select %p469, %s466, 1
      %s471 = smul.addr %s468, 8
      %s472 = sadd.s32 %s470, %s471
      %s473 = smul.addr %s472, 8
      %s474 = scalar_lea.vmem %s9, %s473
      %s475 = smul.u32 %s27, %s28
      %s476 = smul.u32 2, %s475
      %p477 = scmp.eq.s32.totalorder %s27, 0
      // Predicated region
      $region53: #{fsda_forward.1} parent=51 // pred_check
        %p478 = pneg %p477
      $region54: #{fsda_forward.1} parent=51 // pred_check_branch
        %480 = sbr.rel (%p478) target = $region56
      $region55: #{fsda_forward.1} parent=51 // pred_region
        %v481 = vld [vmem:[%s435] sm:$0xff]
        %v482 = vld [vmem:[%s435 + $0x8] sm:$0xff]
        %v483 = vld [vmem:[%s435 + $0x10] sm:$0xff]
        %v484 = vld [vmem:[%s435 + $0x18] sm:$0xff]
        %v485 = vld [vmem:[%s435 + $0x20] sm:$0xff]
        %v486 = vld [vmem:[%s435 + $0x28] sm:$0xff]
        %v487 = vld [vmem:[%s435 + $0x30] sm:$0xff]
        %v488 = vld [vmem:[%s435 + $0x38] sm:$0xff]
        %v489 = vld [vmem:[%s449] sm:$0xff]
        %v490 = vld [vmem:[%s449 + $0x8] sm:$0xff]
        %v491 = vld [vmem:[%s449 + $0x10] sm:$0xff]
        %v492 = vld [vmem:[%s449 + $0x18] sm:$0xff]
        %v493 = vld [vmem:[%s449 + $0x20] sm:$0xff]
        %v494 = vld [vmem:[%s449 + $0x28] sm:$0xff]
        %v495 = vld [vmem:[%s449 + $0x30] sm:$0xff]
        %v496 = vld [vmem:[%s449 + $0x38] sm:$0xff]
        %v497 = vmul.f32 %v481, %v481
        %v498 = vmul.f32 %v482, %v482
        %v499 = vmul.f32 %v483, %v483
        %v500 = vmul.f32 %v484, %v484
        %v501 = vmul.f32 %v485, %v485
        %v502 = vmul.f32 %v486, %v486
        %v503 = vmul.f32 %v487, %v487
        %v504 = vmul.f32 %v488, %v488
        %v505 = vmul.f32 %v489, %v489
        %v506 = vmul.f32 %v490, %v490
        %v507 = vmul.f32 %v491, %v491
        %v508 = vmul.f32 %v492, %v492
        %v509 = vmul.f32 %v493, %v493
        %v510 = vmul.f32 %v494, %v494
        %v511 = vmul.f32 %v495, %v495
        %v512 = vmul.f32 %v496, %v496
        %v513 = vadd.f32 %v497, %v505
        %v514 = vadd.f32 %v498, %v506
        %v515 = vadd.f32 %v499, %v507
        %v516 = vadd.f32 %v500, %v508
        %v517 = vadd.f32 %v501, %v509
        %v518 = vadd.f32 %v502, %v510
        %v519 = vadd.f32 %v503, %v511
        %v520 = vadd.f32 %v504, %v512
        %v521 = vrsqrt.pop %v513
        %v522 = vmul.f32 %v521, %v513
        %v523 = vmul.f32 %v522, %v521
        %v524 = vmul.f32 0.5, %v523
        %v525 = vsub.f32 1.5, %v524
        %v526 = vmul.f32 %v521, %v525
        %v527 = vmul.f32 %v513, %v526
        %vm528 = vcmp.eq.f32.partialorder %v513, inf
        %v529 = vsel %vm528, %v513, %v527
        %vm530 = vcmp.eq.f32.partialorder %v513, 0.0
        %v531 = vand.u32 %v513, 2147483648
        %v532 = vsel %vm530, %v531, %v529
        %v533 = vrsqrt.pop %v514
        %v534 = vmul.f32 %v533, %v514
        %v535 = vmul.f32 %v534, %v533
        %v536 = vmul.f32 0.5, %v535
        %v537 = vsub.f32 1.5, %v536
        %v538 = vmul.f32 %v533, %v537
        %v539 = vmul.f32 %v514, %v538
        %vm540 = vcmp.eq.f32.partialorder %v514, inf
        %v541 = vsel %vm540, %v514, %v539
        %vm542 = vcmp.eq.f32.partialorder %v514, 0.0
        %v543 = vand.u32 %v514, 2147483648
        %v544 = vsel %vm542, %v543, %v541
        %v545 = vrsqrt.pop %v515
        %v546 = vmul.f32 %v545, %v515
        %v547 = vmul.f32 %v546, %v545
        %v548 = vmul.f32 0.5, %v547
        %v549 = vsub.f32 1.5, %v548
        %v550 = vmul.f32 %v545, %v549
        %v551 = vmul.f32 %v515, %v550
        %vm552 = vcmp.eq.f32.partialorder %v515, inf
        %v553 = vsel %vm552, %v515, %v551
        %vm554 = vcmp.eq.f32.partialorder %v515, 0.0
        %v555 = vand.u32 %v515, 2147483648
        %v556 = vsel %vm554, %v555, %v553
        %v557 = vrsqrt.pop %v516
        %v558 = vmul.f32 %v557, %v516
        %v559 = vmul.f32 %v558, %v557
        %v560 = vmul.f32 0.5, %v559
        %v561 = vsub.f32 1.5, %v560
        %v562 = vmul.f32 %v557, %v561
        %v563 = vmul.f32 %v516, %v562
        %vm564 = vcmp.eq.f32.partialorder %v516, inf
        %v565 = vsel %vm564, %v516, %v563
        %vm566 = vcmp.eq.f32.partialorder %v516, 0.0
        %v567 = vand.u32 %v516, 2147483648
        %v568 = vsel %vm566, %v567, %v565
        %v569 = vrsqrt.pop %v517
        %v570 = vmul.f32 %v569, %v517
        %v571 = vmul.f32 %v570, %v569
        %v572 = vmul.f32 0.5, %v571
        %v573 = vsub.f32 1.5, %v572
        %v574 = vmul.f32 %v569, %v573
        %v575 = vmul.f32 %v517, %v574
        %vm576 = vcmp.eq.f32.partialorder %v517, inf
        %v577 = vsel %vm576, %v517, %v575
        %vm578 = vcmp.eq.f32.partialorder %v517, 0.0
        %v579 = vand.u32 %v517, 2147483648
        %v580 = vsel %vm578, %v579, %v577
        %v581 = vrsqrt.pop %v518
        %v582 = vmul.f32 %v581, %v518
        %v583 = vmul.f32 %v582, %v581
        %v584 = vmul.f32 0.5, %v583
        %v585 = vsub.f32 1.5, %v584
        %v586 = vmul.f32 %v581, %v585
        %v587 = vmul.f32 %v518, %v586
        %vm588 = vcmp.eq.f32.partialorder %v518, inf
        %v589 = vsel %vm588, %v518, %v587
        %vm590 = vcmp.eq.f32.partialorder %v518, 0.0
        %v591 = vand.u32 %v518, 2147483648
        %v592 = vsel %vm590, %v591, %v589
        %v593 = vrsqrt.pop %v519
        %v594 = vmul.f32 %v593, %v519
        %v595 = vmul.f32 %v594, %v593
        %v596 = vmul.f32 0.5, %v595
        %v597 = vsub.f32 1.5, %v596
        %v598 = vmul.f32 %v593, %v597
        %v599 = vmul.f32 %v519, %v598
        %vm600 = vcmp.eq.f32.partialorder %v519, inf
        %v601 = vsel %vm600, %v519, %v599
        %vm602 = vcmp.eq.f32.partialorder %v519, 0.0
        %v603 = vand.u32 %v519, 2147483648
        %v604 = vsel %vm602, %v603, %v601
        %v605 = vrsqrt.pop %v520
        %v606 = vmul.f32 %v605, %v520
        %v607 = vmul.f32 %v606, %v605
        %v608 = vmul.f32 0.5, %v607
        %v609 = vsub.f32 1.5, %v608
        %v610 = vmul.f32 %v605, %v609
        %v611 = vmul.f32 %v520, %v610
        %vm612 = vcmp.eq.f32.partialorder %v520, inf
        %v613 = vsel %vm612, %v520, %v611
        %vm614 = vcmp.eq.f32.partialorder %v520, 0.0
        %v615 = vand.u32 %v520, 2147483648
        %v616 = vsel %vm614, %v615, %v613
        %v617 = vand.u32 2147483647, %v481
        %v618 = vand.u32 2147483647, %v489
        %v619 = vmin.f32 %v617, %v618
        %v620 = vmax.f32 %v617, %v618
        %v621 = vrcp.pop %v620
        %v622 = vmul.f32 %v620, %v621
        %v623 = vsub.f32 1.0, %v622
        %v624 = vmul.f32 %v621, %v623
        %v625 = vadd.f32 %v621, %v624
        %vm626 = vweird.f32 %v620
        %vm627 = vweird.f32 %v621
        %vm628 = vmor %vm626, %vm627
        %v629 = vsel %vm628, %v621, %v625
        %v630 = vand.u32 2147483647, %v620
        %vm631 = vcmp.eq.f32.partialorder %v630, 8.507059e+37
        %v632 = vand.u32 %v620, 2147483648
        %v633 = vor.u32 1.1754944e-38, %v632
        %v634 = vsel %vm631, %v633, %v629
        %v635 = vmul.f32 %v619, %v634
        %v636 = vmul.f32 %v635, %v635
        %v637 = vmul.f32 0.002785687, %v636
        %v638 = vadd.f32 %v637, -0.015866
        %v639 = vmul.f32 %v638, %v636
        %v640 = vadd.f32 %v639, 0.04247222
        %v641 = vmul.f32 %v640, %v636
        %v642 = vadd.f32 %v641, -0.074975304
        %v643 = vmul.f32 %v642, %v636
        %v644 = vadd.f32 %v643, 0.1064488
        %v645 = vmul.f32 %v644, %v636
        %v646 = vadd.f32 %v645, -0.14207031
        %v647 = vmul.f32 %v646, %v636
        %v648 = vadd.f32 %v647, 0.19993454
        %v649 = vmul.f32 %v648, %v636
        %v650 = vadd.f32 %v649, -0.33333147
        %v651 = vmul.f32 %v650, %v636
        %v652 = vmul.f32 %v651, %v635
        %v653 = vadd.f32 %v652, %v635
        %vm654 = vcmp.gt.f32.partialorder %v618, %v617
        %v655 = vsub.f32 1.5707964, %v653
        %v656 = vsel %vm654, %v655, %v653
        %vm657 = vcmp.lt.f32.partialorder %v481, 0.0
        %v658 = vsub.f32 3.1415927, %v656
        %v659 = vsel %vm657, %v658, %v656
        %vm660 = vcmp.lt.s32.totalorder %v481, 0
        %v661 = vsel %vm660, 3.1415927, 0.0
        %vm662 = vcmp.eq.f32.partialorder %v489, 0.0
        %v663 = vsel %vm662, %v661, %v659
        %vm664 = vcmp.ne.f32.partialorder %v481, %v481
        %vm665 = vcmp.ne.f32.partialorder %v489, %v489
        %vm666 = vmor %vm664, %vm665
        %v667 = vsel %vm666, nan, %v663
        %vm668 = vcmp.lt.f32.partialorder %v481, 0.0
        %v669 = vsel %vm668, 2.3561945, 0.7853982
        %vm670 = vcmp.eq.s32.totalorder %v617, inf
        %vm671 = vcmp.eq.s32.totalorder %v618, inf
        %vm672 = vmand %vm670, %vm671
        %v673 = vsel %vm672, %v669, %v667
        %v674 = vand.u32 2147483647, %v673
        %v675 = vand.u32 %v489, 2147483648
        %v676 = vor.u32 %v674, %v675
        %v677 = vand.u32 2147483647, %v482
        %v678 = vand.u32 2147483647, %v490
        %v679 = vmin.f32 %v677, %v678
        %v680 = vmax.f32 %v677, %v678
        %v681 = vrcp.pop %v680
        %v682 = vmul.f32 %v680, %v681
        %v683 = vsub.f32 1.0, %v682
        %v684 = vmul.f32 %v681, %v683
        %v685 = vadd.f32 %v681, %v684
        %vm686 = vweird.f32 %v680
        %vm687 = vweird.f32 %v681
        %vm688 = vmor %vm686, %vm687
        %v689 = vsel %vm688, %v681, %v685
        %v690 = vand.u32 2147483647, %v680
        %vm691 = vcmp.eq.f32.partialorder %v690, 8.507059e+37
        %v692 = vand.u32 %v680, 2147483648
        %v693 = vor.u32 1.1754944e-38, %v692
        %v694 = vsel %vm691, %v693, %v689
        %v695 = vmul.f32 %v679, %v694
        %v696 = vmul.f32 %v695, %v695
        %v697 = vmul.f32 0.002785687, %v696
        %v698 = vadd.f32 %v697, -0.015866
        %v699 = vmul.f32 %v698, %v696
        %v700 = vadd.f32 %v699, 0.04247222
        %v701 = vmul.f32 %v700, %v696
        %v702 = vadd.f32 %v701, -0.074975304
        %v703 = vmul.f32 %v702, %v696
        %v704 = vadd.f32 %v703, 0.1064488
        %v705 = vmul.f32 %v704, %v696
        %v706 = vadd.f32 %v705, -0.14207031
        %v707 = vmul.f32 %v706, %v696
        %v708 = vadd.f32 %v707, 0.19993454
        %v709 = vmul.f32 %v708, %v696
        %v710 = vadd.f32 %v709, -0.33333147
        %v711 = vmul.f32 %v710, %v696
        %v712 = vmul.f32 %v711, %v695
        %v713 = vadd.f32 %v712, %v695
        %vm714 = vcmp.gt.f32.partialorder %v678, %v677
        %v715 = vsub.f32 1.5707964, %v713
        %v716 = vsel %vm714, %v715, %v713
        %vm717 = vcmp.lt.f32.partialorder %v482, 0.0
        %v718 = vsub.f32 3.1415927, %v716
        %v719 = vsel %vm717, %v718, %v716
        %vm720 = vcmp.lt.s32.totalorder %v482, 0
        %v721 = vsel %vm720, 3.1415927, 0.0
        %vm722 = vcmp.eq.f32.partialorder %v490, 0.0
        %v723 = vsel %vm722, %v721, %v719
        %vm724 = vcmp.ne.f32.partialorder %v482, %v482
        %vm725 = vcmp.ne.f32.partialorder %v490, %v490
        %vm726 = vmor %vm724, %vm725
        %v727 = vsel %vm726, nan, %v723
        %vm728 = vcmp.lt.f32.partialorder %v482, 0.0
        %v729 = vsel %vm728, 2.3561945, 0.7853982
        %vm730 = vcmp.eq.s32.totalorder %v677, inf
        %vm731 = vcmp.eq.s32.totalorder %v678, inf
        %vm732 = vmand %vm730, %vm731
        %v733 = vsel %vm732, %v729, %v727
        %v734 = vand.u32 2147483647, %v733
        %v735 = vand.u32 %v490, 2147483648
        %v736 = vor.u32 %v734, %v735
        %v737 = vand.u32 2147483647, %v483
        %v738 = vand.u32 2147483647, %v491
        %v739 = vmin.f32 %v737, %v738
        %v740 = vmax.f32 %v737, %v738
        %v741 = vrcp.pop %v740
        %v742 = vmul.f32 %v740, %v741
        %v743 = vsub.f32 1.0, %v742
        %v744 = vmul.f32 %v741, %v743
        %v745 = vadd.f32 %v741, %v744
        %vm746 = vweird.f32 %v740
        %vm747 = vweird.f32 %v741
        %vm748 = vmor %vm746, %vm747
        %v749 = vsel %vm748, %v741, %v745
        %v750 = vand.u32 2147483647, %v740
        %vm751 = vcmp.eq.f32.partialorder %v750, 8.507059e+37
        %v752 = vand.u32 %v740, 2147483648
        %v753 = vor.u32 1.1754944e-38, %v752
        %v754 = vsel %vm751, %v753, %v749
        %v755 = vmul.f32 %v739, %v754
        %v756 = vmul.f32 %v755, %v755
        %v757 = vmul.f32 0.002785687, %v756
        %v758 = vadd.f32 %v757, -0.015866
        %v759 = vmul.f32 %v758, %v756
        %v760 = vadd.f32 %v759, 0.04247222
        %v761 = vmul.f32 %v760, %v756
        %v762 = vadd.f32 %v761, -0.074975304
        %v763 = vmul.f32 %v762, %v756
        %v764 = vadd.f32 %v763, 0.1064488
        %v765 = vmul.f32 %v764, %v756
        %v766 = vadd.f32 %v765, -0.14207031
        %v767 = vmul.f32 %v766, %v756
        %v768 = vadd.f32 %v767, 0.19993454
        %v769 = vmul.f32 %v768, %v756
        %v770 = vadd.f32 %v769, -0.33333147
        %v771 = vmul.f32 %v770, %v756
        %v772 = vmul.f32 %v771, %v755
        %v773 = vadd.f32 %v772, %v755
        %vm774 = vcmp.gt.f32.partialorder %v738, %v737
        %v775 = vsub.f32 1.5707964, %v773
        %v776 = vsel %vm774, %v775, %v773
        %vm777 = vcmp.lt.f32.partialorder %v483, 0.0
        %v778 = vsub.f32 3.1415927, %v776
        %v779 = vsel %vm777, %v778, %v776
        %vm780 = vcmp.lt.s32.totalorder %v483, 0
        %v781 = vsel %vm780, 3.1415927, 0.0
        %vm782 = vcmp.eq.f32.partialorder %v491, 0.0
        %v783 = vsel %vm782, %v781, %v779
        %vm784 = vcmp.ne.f32.partialorder %v483, %v483
        %vm785 = vcmp.ne.f32.partialorder %v491, %v491
        %vm786 = vmor %vm784, %vm785
        %v787 = vsel %vm786, nan, %v783
        %vm788 = vcmp.lt.f32.partialorder %v483, 0.0
        %v789 = vsel %vm788, 2.3561945, 0.7853982
        %vm790 = vcmp.eq.s32.totalorder %v737, inf
        %vm791 = vcmp.eq.s32.totalorder %v738, inf
        %vm792 = vmand %vm790, %vm791
        %v793 = vsel %vm792, %v789, %v787
        %v794 = vand.u32 2147483647, %v793
        %v795 = vand.u32 %v491, 2147483648
        %v796 = vor.u32 %v794, %v795
        %v797 = vand.u32 2147483647, %v484
        %v798 = vand.u32 2147483647, %v492
        %v799 = vmin.f32 %v797, %v798
        %v800 = vmax.f32 %v797, %v798
        %v801 = vrcp.pop %v800
        %v802 = vmul.f32 %v800, %v801
        %v803 = vsub.f32 1.0, %v802
        %v804 = vmul.f32 %v801, %v803
        %v805 = vadd.f32 %v801, %v804
        %vm806 = vweird.f32 %v800
        %vm807 = vweird.f32 %v801
        %vm808 = vmor %vm806, %vm807
        %v809 = vsel %vm808, %v801, %v805
        %v810 = vand.u32 2147483647, %v800
        %vm811 = vcmp.eq.f32.partialorder %v810, 8.507059e+37
        %v812 = vand.u32 %v800, 2147483648
        %v813 = vor.u32 1.1754944e-38, %v812
        %v814 = vsel %vm811, %v813, %v809
        %v815 = vmul.f32 %v799, %v814
        %v816 = vmul.f32 %v815, %v815
        %v817 = vmul.f32 0.002785687, %v816
        %v818 = vadd.f32 %v817, -0.015866
        %v819 = vmul.f32 %v818, %v816
        %v820 = vadd.f32 %v819, 0.04247222
        %v821 = vmul.f32 %v820, %v816
        %v822 = vadd.f32 %v821, -0.074975304
        %v823 = vmul.f32 %v822, %v816
        %v824 = vadd.f32 %v823, 0.1064488
        %v825 = vmul.f32 %v824, %v816
        %v826 = vadd.f32 %v825, -0.14207031
        %v827 = vmul.f32 %v826, %v816
        %v828 = vadd.f32 %v827, 0.19993454
        %v829 = vmul.f32 %v828, %v816
        %v830 = vadd.f32 %v829, -0.33333147
        %v831 = vmul.f32 %v830, %v816
        %v832 = vmul.f32 %v831, %v815
        %v833 = vadd.f32 %v832, %v815
        %vm834 = vcmp.gt.f32.partialorder %v798, %v797
        %v835 = vsub.f32 1.5707964, %v833
        %v836 = vsel %vm834, %v835, %v833
        %vm837 = vcmp.lt.f32.partialorder %v484, 0.0
        %v838 = vsub.f32 3.1415927, %v836
        %v839 = vsel %vm837, %v838, %v836
        %vm840 = vcmp.lt.s32.totalorder %v484, 0
        %v841 = vsel %vm840, 3.1415927, 0.0
        %vm842 = vcmp.eq.f32.partialorder %v492, 0.0
        %v843 = vsel %vm842, %v841, %v839
        %vm844 = vcmp.ne.f32.partialorder %v484, %v484
        %vm845 = vcmp.ne.f32.partialorder %v492, %v492
        %vm846 = vmor %vm844, %vm845
        %v847 = vsel %vm846, nan, %v843
        %vm848 = vcmp.lt.f32.partialorder %v484, 0.0
        %v849 = vsel %vm848, 2.3561945, 0.7853982
        %vm850 = vcmp.eq.s32.totalorder %v797, inf
        %vm851 = vcmp.eq.s32.totalorder %v798, inf
        %vm852 = vmand %vm850, %vm851
        %v853 = vsel %vm852, %v849, %v847
        %v854 = vand.u32 2147483647, %v853
        %v855 = vand.u32 %v492, 2147483648
        %v856 = vor.u32 %v854, %v855
        %v857 = vand.u32 2147483647, %v485
        %v858 = vand.u32 2147483647, %v493
        %v859 = vmin.f32 %v857, %v858
        %v860 = vmax.f32 %v857, %v858
        %v861 = vrcp.pop %v860
        %v862 = vmul.f32 %v860, %v861
        %v863 = vsub.f32 1.0, %v862
        %v864 = vmul.f32 %v861, %v863
        %v865 = vadd.f32 %v861, %v864
        %vm866 = vweird.f32 %v860
        %vm867 = vweird.f32 %v861
        %vm868 = vmor %vm866, %vm867
        %v869 = vsel %vm868, %v861, %v865
        %v870 = vand.u32 2147483647, %v860
        %vm871 = vcmp.eq.f32.partialorder %v870, 8.507059e+37
        %v872 = vand.u32 %v860, 2147483648
        %v873 = vor.u32 1.1754944e-38, %v872
        %v874 = vsel %vm871, %v873, %v869
        %v875 = vmul.f32 %v859, %v874
        %v876 = vmul.f32 %v875, %v875
        %v877 = vmul.f32 0.002785687, %v876
        %v878 = vadd.f32 %v877, -0.015866
        %v879 = vmul.f32 %v878, %v876
        %v880 = vadd.f32 %v879, 0.04247222
        %v881 = vmul.f32 %v880, %v876
        %v882 = vadd.f32 %v881, -0.074975304
        %v883 = vmul.f32 %v882, %v876
        %v884 = vadd.f32 %v883, 0.1064488
        %v885 = vmul.f32 %v884, %v876
        %v886 = vadd.f32 %v885, -0.14207031
        %v887 = vmul.f32 %v886, %v876
        %v888 = vadd.f32 %v887, 0.19993454
        %v889 = vmul.f32 %v888, %v876
        %v890 = vadd.f32 %v889, -0.33333147
        %v891 = vmul.f32 %v890, %v876
        %v892 = vmul.f32 %v891, %v875
        %v893 = vadd.f32 %v892, %v875
        %vm894 = vcmp.gt.f32.partialorder %v858, %v857
        %v895 = vsub.f32 1.5707964, %v893
        %v896 = vsel %vm894, %v895, %v893
        %vm897 = vcmp.lt.f32.partialorder %v485, 0.0
        %v898 = vsub.f32 3.1415927, %v896
        %v899 = vsel %vm897, %v898, %v896
        %vm900 = vcmp.lt.s32.totalorder %v485, 0
        %v901 = vsel %vm900, 3.1415927, 0.0
        %vm902 = vcmp.eq.f32.partialorder %v493, 0.0
        %v903 = vsel %vm902, %v901, %v899
        %vm904 = vcmp.ne.f32.partialorder %v485, %v485
        %vm905 = vcmp.ne.f32.partialorder %v493, %v493
        %vm906 = vmor %vm904, %vm905
        %v907 = vsel %vm906, nan, %v903
        %vm908 = vcmp.lt.f32.partialorder %v485, 0.0
        %v909 = vsel %vm908, 2.3561945, 0.7853982
        %vm910 = vcmp.eq.s32.totalorder %v857, inf
        %vm911 = vcmp.eq.s32.totalorder %v858, inf
        %vm912 = vmand %vm910, %vm911
        %v913 = vsel %vm912, %v909, %v907
        %v914 = vand.u32 2147483647, %v913
        %v915 = vand.u32 %v493, 2147483648
        %v916 = vor.u32 %v914, %v915
        %v917 = vand.u32 2147483647, %v486
        %v918 = vand.u32 2147483647, %v494
        %v919 = vmin.f32 %v917, %v918
        %v920 = vmax.f32 %v917, %v918
        %v921 = vrcp.pop %v920
        %v922 = vmul.f32 %v920, %v921
        %v923 = vsub.f32 1.0, %v922
        %v924 = vmul.f32 %v921, %v923
        %v925 = vadd.f32 %v921, %v924
        %vm926 = vweird.f32 %v920
        %vm927 = vweird.f32 %v921
        %vm928 = vmor %vm926, %vm927
        %v929 = vsel %vm928, %v921, %v925
        %v930 = vand.u32 2147483647, %v920
        %vm931 = vcmp.eq.f32.partialorder %v930, 8.507059e+37
        %v932 = vand.u32 %v920, 2147483648
        %v933 = vor.u32 1.1754944e-38, %v932
        %v934 = vsel %vm931, %v933, %v929
        %v935 = vmul.f32 %v919, %v934
        %v936 = vmul.f32 %v935, %v935
        %v937 = vmul.f32 0.002785687, %v936
        %v938 = vadd.f32 %v937, -0.015866
        %v939 = vmul.f32 %v938, %v936
        %v940 = vadd.f32 %v939, 0.04247222
        %v941 = vmul.f32 %v940, %v936
        %v942 = vadd.f32 %v941, -0.074975304
        %v943 = vmul.f32 %v942, %v936
        %v944 = vadd.f32 %v943, 0.1064488
        %v945 = vmul.f32 %v944, %v936
        %v946 = vadd.f32 %v945, -0.14207031
        %v947 = vmul.f32 %v946, %v936
        %v948 = vadd.f32 %v947, 0.19993454
        %v949 = vmul.f32 %v948, %v936
        %v950 = vadd.f32 %v949, -0.33333147
        %v951 = vmul.f32 %v950, %v936
        %v952 = vmul.f32 %v951, %v935
        %v953 = vadd.f32 %v952, %v935
        %vm954 = vcmp.gt.f32.partialorder %v918, %v917
        %v955 = vsub.f32 1.5707964, %v953
        %v956 = vsel %vm954, %v955, %v953
        %vm957 = vcmp.lt.f32.partialorder %v486, 0.0
        %v958 = vsub.f32 3.1415927, %v956
        %v959 = vsel %vm957, %v958, %v956
        %vm960 = vcmp.lt.s32.totalorder %v486, 0
        %v961 = vsel %vm960, 3.1415927, 0.0
        %vm962 = vcmp.eq.f32.partialorder %v494, 0.0
        %v963 = vsel %vm962, %v961, %v959
        %vm964 = vcmp.ne.f32.partialorder %v486, %v486
        %vm965 = vcmp.ne.f32.partialorder %v494, %v494
        %vm966 = vmor %vm964, %vm965
        %v967 = vsel %vm966, nan, %v963
        %vm968 = vcmp.lt.f32.partialorder %v486, 0.0
        %v969 = vsel %vm968, 2.3561945, 0.7853982
        %vm970 = vcmp.eq.s32.totalorder %v917, inf
        %vm971 = vcmp.eq.s32.totalorder %v918, inf
        %vm972 = vmand %vm970, %vm971
        %v973 = vsel %vm972, %v969, %v967
        %v974 = vand.u32 2147483647, %v973
        %v975 = vand.u32 %v494, 2147483648
        %v976 = vor.u32 %v974, %v975
        %v977 = vand.u32 2147483647, %v487
        %v978 = vand.u32 2147483647, %v495
        %v979 = vmin.f32 %v977, %v978
        %v980 = vmax.f32 %v977, %v978
        %v981 = vrcp.pop %v980
        %v982 = vmul.f32 %v980, %v981
        %v983 = vsub.f32 1.0, %v982
        %v984 = vmul.f32 %v981, %v983
        %v985 = vadd.f32 %v981, %v984
        %vm986 = vweird.f32 %v980
        %vm987 = vweird.f32 %v981
        %vm988 = vmor %vm986, %vm987
        %v989 = vsel %vm988, %v981, %v985
        %v990 = vand.u32 2147483647, %v980
        %vm991 = vcmp.eq.f32.partialorder %v990, 8.507059e+37
        %v992 = vand.u32 %v980, 2147483648
        %v993 = vor.u32 1.1754944e-38, %v992
        %v994 = vsel %vm991, %v993, %v989
        %v995 = vmul.f32 %v979, %v994
        %v996 = vmul.f32 %v995, %v995
        %v997 = vmul.f32 0.002785687, %v996
        %v998 = vadd.f32 %v997, -0.015866
        %v999 = vmul.f32 %v998, %v996
        %v1000 = vadd.f32 %v999, 0.04247222
        %v1001 = vmul.f32 %v1000, %v996
        %v1002 = vadd.f32 %v1001, -0.074975304
        %v1003 = vmul.f32 %v1002, %v996
        %v1004 = vadd.f32 %v1003, 0.1064488
        %v1005 = vmul.f32 %v1004, %v996
        %v1006 = vadd.f32 %v1005, -0.14207031
        %v1007 = vmul.f32 %v1006, %v996
        %v1008 = vadd.f32 %v1007, 0.19993454
        %v1009 = vmul.f32 %v1008, %v996
        %v1010 = vadd.f32 %v1009, -0.33333147
        %v1011 = vmul.f32 %v1010, %v996
        %v1012 = vmul.f32 %v1011, %v995
        %v1013 = vadd.f32 %v1012, %v995
        %vm1014 = vcmp.gt.f32.partialorder %v978, %v977
        %v1015 = vsub.f32 1.5707964, %v1013
        %v1016 = vsel %vm1014, %v1015, %v1013
        %vm1017 = vcmp.lt.f32.partialorder %v487, 0.0
        %v1018 = vsub.f32 3.1415927, %v1016
        %v1019 = vsel %vm1017, %v1018, %v1016
        %vm1020 = vcmp.lt.s32.totalorder %v487, 0
        %v1021 = vsel %vm1020, 3.1415927, 0.0
        %vm1022 = vcmp.eq.f32.partialorder %v495, 0.0
        %v1023 = vsel %vm1022, %v1021, %v1019
        %vm1024 = vcmp.ne.f32.partialorder %v487, %v487
        %vm1025 = vcmp.ne.f32.partialorder %v495, %v495
        %vm1026 = vmor %vm1024, %vm1025
        %v1027 = vsel %vm1026, nan, %v1023
        %vm1028 = vcmp.lt.f32.partialorder %v487, 0.0
        %v1029 = vsel %vm1028, 2.3561945, 0.7853982
        %vm1030 = vcmp.eq.s32.totalorder %v977, inf
        %vm1031 = vcmp.eq.s32.totalorder %v978, inf
        %vm1032 = vmand %vm1030, %vm1031
        %v1033 = vsel %vm1032, %v1029, %v1027
        %v1034 = vand.u32 2147483647, %v1033
        %v1035 = vand.u32 %v495, 2147483648
        %v1036 = vor.u32 %v1034, %v1035
        %v1037 = vand.u32 2147483647, %v488
        %v1038 = vand.u32 2147483647, %v496
        %v1039 = vmin.f32 %v1037, %v1038
        %v1040 = vmax.f32 %v1037, %v1038
        %v1041 = vrcp.pop %v1040
        %v1042 = vmul.f32 %v1040, %v1041
        %v1043 = vsub.f32 1.0, %v1042
        %v1044 = vmul.f32 %v1041, %v1043
        %v1045 = vadd.f32 %v1041, %v1044
        %vm1046 = vweird.f32 %v1040
        %vm1047 = vweird.f32 %v1041
        %vm1048 = vmor %vm1046, %vm1047
        %v1049 = vsel %vm1048, %v1041, %v1045
        %v1050 = vand.u32 2147483647, %v1040
        %vm1051 = vcmp.eq.f32.partialorder %v1050, 8.507059e+37
        %v1052 = vand.u32 %v1040, 2147483648
        %v1053 = vor.u32 1.1754944e-38, %v1052
        %v1054 = vsel %vm1051, %v1053, %v1049
        %v1055 = vmul.f32 %v1039, %v1054
        %v1056 = vmul.f32 %v1055, %v1055
        %v1057 = vmul.f32 0.002785687, %v1056
        %v1058 = vadd.f32 %v1057, -0.015866
        %v1059 = vmul.f32 %v1058, %v1056
        %v1060 = vadd.f32 %v1059, 0.04247222
        %v1061 = vmul.f32 %v1060, %v1056
        %v1062 = vadd.f32 %v1061, -0.074975304
        %v1063 = vmul.f32 %v1062, %v1056
        %v1064 = vadd.f32 %v1063, 0.1064488
        %v1065 = vmul.f32 %v1064, %v1056
        %v1066 = vadd.f32 %v1065, -0.14207031
        %v1067 = vmul.f32 %v1066, %v1056
        %v1068 = vadd.f32 %v1067, 0.19993454
        %v1069 = vmul.f32 %v1068, %v1056
        %v1070 = vadd.f32 %v1069, -0.33333147
        %v1071 = vmul.f32 %v1070, %v1056
        %v1072 = vmul.f32 %v1071, %v1055
        %v1073 = vadd.f32 %v1072, %v1055
        %vm1074 = vcmp.gt.f32.partialorder %v1038, %v1037
        %v1075 = vsub.f32 1.5707964, %v1073
        %v1076 = vsel %vm1074, %v1075, %v1073
        %vm1077 = vcmp.lt.f32.partialorder %v488, 0.0
        %v1078 = vsub.f32 3.1415927, %v1076
        %v1079 = vsel %vm1077, %v1078, %v1076
        %vm1080 = vcmp.lt.s32.totalorder %v488, 0
        %v1081 = vsel %vm1080, 3.1415927, 0.0
        %vm1082 = vcmp.eq.f32.partialorder %v496, 0.0
        %v1083 = vsel %vm1082, %v1081, %v1079
        %vm1084 = vcmp.ne.f32.partialorder %v488, %v488
        %vm1085 = vcmp.ne.f32.partialorder %v496, %v496
        %vm1086 = vmor %vm1084, %vm1085
        %v1087 = vsel %vm1086, nan, %v1083
        %vm1088 = vcmp.lt.f32.partialorder %v488, 0.0
        %v1089 = vsel %vm1088, 2.3561945, 0.7853982
        %vm1090 = vcmp.eq.s32.totalorder %v1037, inf
        %vm1091 = vcmp.eq.s32.totalorder %v1038, inf
        %vm1092 = vmand %vm1090, %vm1091
        %v1093 = vsel %vm1092, %v1089, %v1087
        %v1094 = vand.u32 2147483647, %v1093
        %v1095 = vand.u32 %v496, 2147483648
        %v1096 = vor.u32 %v1094, %v1095
        %v1097 = vld [vmem:[%s2] sm:$0xff]
        %v1098 = vld [vmem:[%s2 + $0x8] sm:$0xff]
        %v1099 = vld [vmem:[%s2 + $0x10] sm:$0xff]
        %v1100 = vld [vmem:[%s2 + $0x18] sm:$0xff]
        %v1101 = vld [vmem:[%s2 + $0x20] sm:$0xff]
        %v1102 = vld [vmem:[%s2 + $0x28] sm:$0xff]
        %v1103 = vld [vmem:[%s2 + $0x30] sm:$0xff]
        %v1104 = vld [vmem:[%s2 + $0x38] sm:$0xff]
        %v1105 = vld [vmem:[%s3] sm:$0xff]
        %v1106 = vld [vmem:[%s3 + $0x8] sm:$0xff]
        %v1107 = vld [vmem:[%s3 + $0x10] sm:$0xff]
        %v1108 = vld [vmem:[%s3 + $0x18] sm:$0xff]
        %v1109 = vld [vmem:[%s3 + $0x20] sm:$0xff]
        %v1110 = vld [vmem:[%s3 + $0x28] sm:$0xff]
        %v1111 = vld [vmem:[%s3 + $0x30] sm:$0xff]
        %v1112 = vld [vmem:[%s3 + $0x38] sm:$0xff]
        %1114 = vset.pattern.permute.xlu0 0
        %1115 = vperm.xlu0 %1114, %v1105
        %v1116 = vpop.permute.xlu0 %1115
        %1119 = vset.pattern.permute.xlu0 0
        %1120 = vperm.xlu0 %1119, %v1106
        %v1121 = vpop.permute.xlu0 %1120
        %1124 = vset.pattern.permute.xlu0 0
        %1125 = vperm.xlu0 %1124, %v1107
        %v1126 = vpop.permute.xlu0 %1125
        %1129 = vset.pattern.permute.xlu0 0
        %1130 = vperm.xlu0 %1129, %v1108
        %v1131 = vpop.permute.xlu0 %1130
        %1134 = vset.pattern.permute.xlu0 0
        %1135 = vperm.xlu0 %1134, %v1109
        %v1136 = vpop.permute.xlu0 %1135
        %1139 = vset.pattern.permute.xlu0 0
        %1140 = vperm.xlu0 %1139, %v1110
        %v1141 = vpop.permute.xlu0 %1140
        %1144 = vset.pattern.permute.xlu0 0
        %1145 = vperm.xlu0 %1144, %v1111
        %v1146 = vpop.permute.xlu0 %1145
        %1149 = vset.pattern.permute.xlu0 0
        %1150 = vperm.xlu0 %1149, %v1112
        %v1151 = vpop.permute.xlu0 %1150
        %vm1153 = vcmask 523264
        %v1155 = vsel %vm1153, %v1097, 0
        %v1158 = vsel %vm1153, %v1098, 0
        %v1161 = vsel %vm1153, %v1099, 0
        %v1164 = vsel %vm1153, %v1100, 0
        %v1167 = vsel %vm1153, %v1101, 0
        %v1170 = vsel %vm1153, %v1102, 0
        %v1173 = vsel %vm1153, %v1103, 0
        %v1176 = vsel %vm1153, %v1104, 0
        %1178 = vmatpush.msra.mxu0 0.0
        %1179 = vmatpush.msra.mxu0 0.0
        %1180 = vmatpush.msra.mxu0 0.0
        %1181 = vmatpush.msra.mxu0 0.0
        %1182 = vmatpush.msra.mxu0 0.0
        %1183 = vmatpush.msra.mxu0 0.0
        %1184 = vmatpush.msra.mxu0 0.0
        %1185 = vmatpush.msra.mxu0 0.0
        %1186 = vmatpush.msra.mxu0 %v1036
        %1187 = vmatpush.msra.mxu0 %v916
        %1188 = vmatpush.msra.mxu0 %v796
        %1189 = vmatpush.msra.mxu0 %v676
        %1190 = vmatpush.msra.mxu0 %v604
        %1191 = vmatpush.msra.mxu0 %v580
        %1192 = vmatpush.msra.mxu0 %v556
        %1193 = vmatpush.msra.mxu0 %v532
        %1194 = vmatmul.f32.gmra.mxu0 %v1155
        %v1195 = vpop.f32.mrf.mxu0
        %v1196 = vadd.f32 %v1116, %v1195
        %1197 = vmatmul.f32.gmra.mxu0 %v1158
        %v1198 = vpop.f32.mrf.mxu0
        %v1199 = vadd.f32 %v1121, %v1198
        %1200 = vmatmul.f32.gmra.mxu0 %v1161
        %v1201 = vpop.f32.mrf.mxu0
        %v1202 = vadd.f32 %v1126, %v1201
        %1203 = vmatmul.f32.gmra.mxu0 %v1164
        %v1204 = vpop.f32.mrf.mxu0
        %v1205 = vadd.f32 %v1131, %v1204
        %1206 = vmatmul.f32.gmra.mxu0 %v1167
        %v1207 = vpop.f32.mrf.mxu0
        %v1208 = vadd.f32 %v1136, %v1207
        %1209 = vmatmul.f32.gmra.mxu0 %v1170
        %v1210 = vpop.f32.mrf.mxu0
        %v1211 = vadd.f32 %v1141, %v1210
        %1212 = vmatmul.f32.gmra.mxu0 %v1173
        %v1213 = vpop.f32.mrf.mxu0
        %v1214 = vadd.f32 %v1146, %v1213
        %1215 = vmatmul.f32.gmra.mxu0 %v1176
        %v1216 = vpop.f32.mrf.mxu0
        %v1217 = vadd.f32 %v1151, %v1216
        %1218 = vdwg.mxu0
        %1219 = vmatpush.msra.mxu0 0.0
        %1220 = vmatpush.msra.mxu0 0.0
        %1221 = vmatpush.msra.mxu0 0.0
        %1222 = vmatpush.msra.mxu0 0.0
        %1223 = vmatpush.msra.mxu0 0.0
        %1224 = vmatpush.msra.mxu0 0.0
        %1225 = vmatpush.msra.mxu0 0.0
        %1226 = vmatpush.msra.mxu0 0.0
        %1227 = vmatpush.msra.mxu0 %v1096
        %1228 = vmatpush.msra.mxu0 %v976
        %1229 = vmatpush.msra.mxu0 %v856
        %1230 = vmatpush.msra.mxu0 %v736
        %1231 = vmatpush.msra.mxu0 %v616
        %1232 = vmatpush.msra.mxu0 %v592
        %1233 = vmatpush.msra.mxu0 %v568
        %1234 = vmatpush.msra.mxu0 %v544
        %1235 = vmatmul.f32.gmra.mxu0 %v1155
        %v1236 = vpop.f32.mrf.mxu0
        %v1237 = vadd.f32 %v1116, %v1236
        %1238 = vmatmul.f32.gmra.mxu0 %v1158
        %v1239 = vpop.f32.mrf.mxu0
        %v1240 = vadd.f32 %v1121, %v1239
        %1241 = vmatmul.f32.gmra.mxu0 %v1161
        %v1242 = vpop.f32.mrf.mxu0
        %v1243 = vadd.f32 %v1126, %v1242
        %1244 = vmatmul.f32.gmra.mxu0 %v1164
        %v1245 = vpop.f32.mrf.mxu0
        %v1246 = vadd.f32 %v1131, %v1245
        %1247 = vmatmul.f32.gmra.mxu0 %v1167
        %v1248 = vpop.f32.mrf.mxu0
        %v1249 = vadd.f32 %v1136, %v1248
        %1250 = vmatmul.f32.gmra.mxu0 %v1170
        %v1251 = vpop.f32.mrf.mxu0
        %v1252 = vadd.f32 %v1141, %v1251
        %1253 = vmatmul.f32.gmra.mxu0 %v1173
        %v1254 = vpop.f32.mrf.mxu0
        %v1255 = vadd.f32 %v1146, %v1254
        %1256 = vmatmul.f32.gmra.mxu0 %v1176
        %v1257 = vpop.f32.mrf.mxu0
        %v1258 = vadd.f32 %v1151, %v1257
        %1259 = vdwg.mxu0
        %v1260 = vmul.f32 %v1196, 0.1
        %v1261 = vmul.f32 %v1237, 0.1
        %v1262 = vmul.f32 %v1199, 0.1
        %v1263 = vmul.f32 %v1240, 0.1
        %v1264 = vmul.f32 %v1202, 0.1
        %v1265 = vmul.f32 %v1243, 0.1
        %v1266 = vmul.f32 %v1205, 0.1
        %v1267 = vmul.f32 %v1246, 0.1
        %v1268 = vmul.f32 %v1208, 0.1
        %v1269 = vmul.f32 %v1249, 0.1
        %v1270 = vmul.f32 %v1211, 0.1
        %v1271 = vmul.f32 %v1252, 0.1
        %v1272 = vmul.f32 %v1214, 0.1
        %v1273 = vmul.f32 %v1255, 0.1
        %v1274 = vmul.f32 %v1217, 0.1
        %v1275 = vmul.f32 %v1258, 0.1
        %v1276 = vmax.f32 %v1196, %v1260
        %v1277 = vmax.f32 %v1237, %v1261
        %v1278 = vmax.f32 %v1199, %v1262
        %v1279 = vmax.f32 %v1240, %v1263
        %v1280 = vmax.f32 %v1202, %v1264
        %v1281 = vmax.f32 %v1243, %v1265
        %v1282 = vmax.f32 %v1205, %v1266
        %v1283 = vmax.f32 %v1246, %v1267
        %v1284 = vmax.f32 %v1208, %v1268
        %v1285 = vmax.f32 %v1249, %v1269
        %v1286 = vmax.f32 %v1211, %v1270
        %v1287 = vmax.f32 %v1252, %v1271
        %v1288 = vmax.f32 %v1214, %v1272
        %v1289 = vmax.f32 %v1255, %v1273
        %v1290 = vmax.f32 %v1217, %v1274
        %v1291 = vmax.f32 %v1258, %v1275
        %p1292 = scmp.eq.s32.totalorder %s28, 0
        // Predicated region
        $region57: #{fsda_forward.1} parent=55 // pred_check
          %p1293 = pneg %p1292
        $region58: #{fsda_forward.1} parent=55 // pred_check_branch
          %1295 = sbr.rel (%p1293) target = $region60
        $region59: #{fsda_forward.1} parent=55 // pred_region
          %vm1296 = vcmask 7168
          %1297 = vst.msk [vmem:[#allocation4] sm:$0xff] %vm1296, 0.0
          %1298 = vst.msk [vmem:[#allocation4 + $0x8] sm:$0xff] %vm1296, 0.0
          %1299 = vst.msk [vmem:[#allocation4 + $0x10] sm:$0xff] %vm1296, 0.0
          %1300 = vst.msk [vmem:[#allocation4 + $0x18] sm:$0xff] %vm1296, 0.0
          %1301 = vst.msk [vmem:[#allocation4 + $0x20] sm:$0xff] %vm1296, 0.0
          %1302 = vst.msk [vmem:[#allocation4 + $0x28] sm:$0xff] %vm1296, 0.0
          %1303 = vst.msk [vmem:[#allocation4 + $0x30] sm:$0xff] %vm1296, 0.0
          %1304 = vst.msk [vmem:[#allocation4 + $0x38] sm:$0xff] %vm1296, 0.0
        $region60: #{fsda_forward.1} parent=55 // pred_fallthru
          _
        %p1305 = scmp.ne.s32.totalorder %s28, 0
        // Predicated region
        $region61: #{fsda_forward.1} parent=55 // pred_check
          %p1306 = pneg %p1305
        $region62: #{fsda_forward.1} parent=55 // pred_check_branch
          %1308 = sbr.rel (%p1306) target = $region64
        $region63: #{fsda_forward.1} parent=55 // pred_region
          %v1309 = vld [vmem:[#allocation4] sm:$0xff]
          %v1310 = vld [vmem:[#allocation4 + $0x8] sm:$0xff]
          %v1311 = vld [vmem:[#allocation4 + $0x10] sm:$0xff]
          %v1312 = vld [vmem:[#allocation4 + $0x18] sm:$0xff]
          %v1313 = vld [vmem:[#allocation4 + $0x20] sm:$0xff]
          %v1314 = vld [vmem:[#allocation4 + $0x28] sm:$0xff]
          %v1315 = vld [vmem:[#allocation4 + $0x30] sm:$0xff]
          %v1316 = vld [vmem:[#allocation4 + $0x38] sm:$0xff]
          %v1317 = vadd.f32 %v1276, %v1277
          %1318 = vadd.xlane.f32.xlu0 %v1317
          %v1319 = vpop.xlane.xlu0 %1318
          %v1320 = vadd.f32 %v1278, %v1279
          %1321 = vadd.xlane.f32.xlu0 %v1320
          %v1322 = vpop.xlane.xlu0 %1321
          %v1323 = vadd.f32 %v1280, %v1281
          %1324 = vadd.xlane.f32.xlu0 %v1323
          %v1325 = vpop.xlane.xlu0 %1324
          %v1326 = vadd.f32 %v1282, %v1283
          %1327 = vadd.xlane.f32.xlu0 %v1326
          %v1328 = vpop.xlane.xlu0 %1327
          %v1329 = vadd.f32 %v1284, %v1285
          %1330 = vadd.xlane.f32.xlu0 %v1329
          %v1331 = vpop.xlane.xlu0 %1330
          %v1332 = vadd.f32 %v1286, %v1287
          %1333 = vadd.xlane.f32.xlu0 %v1332
          %v1334 = vpop.xlane.xlu0 %1333
          %v1335 = vadd.f32 %v1288, %v1289
          %1336 = vadd.xlane.f32.xlu0 %v1335
          %v1337 = vpop.xlane.xlu0 %1336
          %v1338 = vadd.f32 %v1290, %v1291
          %1339 = vadd.xlane.f32.xlu0 %v1338
          %v1340 = vpop.xlane.xlu0 %1339
          %v1341 = vadd.f32 %v1309, %v1319
          %v1342 = vadd.f32 %v1310, %v1322
          %v1343 = vadd.f32 %v1311, %v1325
          %v1344 = vadd.f32 %v1312, %v1328
          %v1345 = vadd.f32 %v1313, %v1331
          %v1346 = vadd.f32 %v1314, %v1334
          %v1347 = vadd.f32 %v1315, %v1337
          %v1348 = vadd.f32 %v1316, %v1340
          %vm1349 = vcmask 7168
          %1350 = vst.msk [vmem:[#allocation4] sm:$0xff] %vm1349, %v1341
          %1351 = vst.msk [vmem:[#allocation4 + $0x8] sm:$0xff] %vm1349, %v1342
          %1352 = vst.msk [vmem:[#allocation4 + $0x10] sm:$0xff] %vm1349, %v1343
          %1353 = vst.msk [vmem:[#allocation4 + $0x18] sm:$0xff] %vm1349, %v1344
          %1354 = vst.msk [vmem:[#allocation4 + $0x20] sm:$0xff] %vm1349, %v1345
          %1355 = vst.msk [vmem:[#allocation4 + $0x28] sm:$0xff] %vm1349, %v1346
          %1356 = vst.msk [vmem:[#allocation4 + $0x30] sm:$0xff] %vm1349, %v1347
          %1357 = vst.msk [vmem:[#allocation4 + $0x38] sm:$0xff] %vm1349, %v1348
        $region64: #{fsda_forward.1} parent=55 // pred_fallthru
          _
        // Predicated region
        $region65: #{fsda_forward.1} parent=55 // pred_check
          %p1358 = pneg %p1292
        $region66: #{fsda_forward.1} parent=55 // pred_check_branch
          %1360 = sbr.rel (%p1358) target = $region68
        $region67: #{fsda_forward.1} parent=55 // pred_region
          %v1361 = vlaneseq
          %v1362 = vand.u32 %v1361, 127
          %v1363 = vadd.s32 %v1362, 128
          %v1364 = vld [vmem:[#allocation4] sm:$0xff]
          %v1365 = vld [vmem:[#allocation4 + $0x8] sm:$0xff]
          %v1366 = vld [vmem:[#allocation4 + $0x10] sm:$0xff]
          %v1367 = vld [vmem:[#allocation4 + $0x18] sm:$0xff]
          %v1368 = vld [vmem:[#allocation4 + $0x20] sm:$0xff]
          %v1369 = vld [vmem:[#allocation4 + $0x28] sm:$0xff]
          %v1370 = vld [vmem:[#allocation4 + $0x30] sm:$0xff]
          %v1371 = vld [vmem:[#allocation4 + $0x38] sm:$0xff]
          %vm1372 = vcmp.lt.s32.totalorder %v1362, 144
          %vm1373 = vcmp.lt.s32.totalorder %v1363, 144
          %v1374 = vsel %vm1372, %v1276, 0.0
          %v1375 = vsel %vm1373, %v1277, 0.0
          %v1376 = vsel %vm1372, %v1278, 0.0
          %v1377 = vsel %vm1373, %v1279, 0.0
          %v1378 = vsel %vm1372, %v1280, 0.0
          %v1379 = vsel %vm1373, %v1281, 0.0
          %v1380 = vsel %vm1372, %v1282, 0.0
          %v1381 = vsel %vm1373, %v1283, 0.0
          %v1382 = vsel %vm1372, %v1284, 0.0
          %v1383 = vsel %vm1373, %v1285, 0.0
          %v1384 = vsel %vm1372, %v1286, 0.0
          %v1385 = vsel %vm1373, %v1287, 0.0
          %v1386 = vsel %vm1372, %v1288, 0.0
          %v1387 = vsel %vm1373, %v1289, 0.0
          %v1388 = vsel %vm1372, %v1290, 0.0
          %v1389 = vsel %vm1373, %v1291, 0.0
          %v1390 = vadd.f32 %v1374, %v1375
          %1391 = vadd.xlane.f32.xlu0 %v1390
          %v1392 = vpop.xlane.xlu0 %1391
          %v1393 = vadd.f32 %v1376, %v1377
          %1394 = vadd.xlane.f32.xlu0 %v1393
          %v1395 = vpop.xlane.xlu0 %1394
          %v1396 = vadd.f32 %v1378, %v1379
          %1397 = vadd.xlane.f32.xlu0 %v1396
          %v1398 = vpop.xlane.xlu0 %1397
          %v1399 = vadd.f32 %v1380, %v1381
          %1400 = vadd.xlane.f32.xlu0 %v1399
          %v1401 = vpop.xlane.xlu0 %1400
          %v1402 = vadd.f32 %v1382, %v1383
          %1403 = vadd.xlane.f32.xlu0 %v1402
          %v1404 = vpop.xlane.xlu0 %1403
          %v1405 = vadd.f32 %v1384, %v1385
          %1406 = vadd.xlane.f32.xlu0 %v1405
          %v1407 = vpop.xlane.xlu0 %1406
          %v1408 = vadd.f32 %v1386, %v1387
          %1409 = vadd.xlane.f32.xlu0 %v1408
          %v1410 = vpop.xlane.xlu0 %1409
          %v1411 = vadd.f32 %v1388, %v1389
          %1412 = vadd.xlane.f32.xlu0 %v1411
          %v1413 = vpop.xlane.xlu0 %1412
          %v1414 = vadd.f32 %v1364, %v1392
          %v1415 = vadd.f32 %v1365, %v1395
          %v1416 = vadd.f32 %v1366, %v1398
          %v1417 = vadd.f32 %v1367, %v1401
          %v1418 = vadd.f32 %v1368, %v1404
          %v1419 = vadd.f32 %v1369, %v1407
          %v1420 = vadd.f32 %v1370, %v1410
          %v1421 = vadd.f32 %v1371, %v1413
          %vm1422 = vcmask 7168
          %1423 = vst.msk [vmem:[#allocation4] sm:$0xff] %vm1422, %v1414
          %1424 = vst.msk [vmem:[#allocation4 + $0x8] sm:$0xff] %vm1422, %v1415
          %1425 = vst.msk [vmem:[#allocation4 + $0x10] sm:$0xff] %vm1422, %v1416
          %1426 = vst.msk [vmem:[#allocation4 + $0x18] sm:$0xff] %vm1422, %v1417
          %1427 = vst.msk [vmem:[#allocation4 + $0x20] sm:$0xff] %vm1422, %v1418
          %1428 = vst.msk [vmem:[#allocation4 + $0x28] sm:$0xff] %vm1422, %v1419
          %1429 = vst.msk [vmem:[#allocation4 + $0x30] sm:$0xff] %vm1422, %v1420
          %1430 = vst.msk [vmem:[#allocation4 + $0x38] sm:$0xff] %vm1422, %v1421
        $region68: #{fsda_forward.1} parent=55 // pred_fallthru
          _
        %s1431 = smul.u32 %s28, 256
        %s1432 = sshra.s32 %s1431, 7
        %s1433 = sand.u32 %s1431, 127
        %s1434 = smul.addr %s1432, 8
        %s1435 = scalar_lea.vmem [#allocation2], %s1434
        %1436 = vst [vmem:[%s1435] sm:$0xff] %v532
        %1437 = vst [vmem:[%s1435 + $0x8] sm:$0xff] %v544
        %1438 = vst [vmem:[%s1435 + $0x10] sm:$0xff] %v556
        %1439 = vst [vmem:[%s1435 + $0x18] sm:$0xff] %v568
        %1440 = vst [vmem:[%s1435 + $0x20] sm:$0xff] %v580
        %1441 = vst [vmem:[%s1435 + $0x28] sm:$0xff] %v592
        %1442 = vst [vmem:[%s1435 + $0x30] sm:$0xff] %v604
        %1443 = vst [vmem:[%s1435 + $0x38] sm:$0xff] %v616
        %1444 = vst [vmem:[%s1435 + $0x40] sm:$0xff] %v676
        %1445 = vst [vmem:[%s1435 + $0x48] sm:$0xff] %v736
        %1446 = vst [vmem:[%s1435 + $0x50] sm:$0xff] %v796
        %1447 = vst [vmem:[%s1435 + $0x58] sm:$0xff] %v856
        %1448 = vst [vmem:[%s1435 + $0x60] sm:$0xff] %v916
        %1449 = vst [vmem:[%s1435 + $0x68] sm:$0xff] %v976
        %1450 = vst [vmem:[%s1435 + $0x70] sm:$0xff] %v1036
        %1451 = vst [vmem:[%s1435 + $0x78] sm:$0xff] %v1096
        %s1452 = smul.addr %s1432, 8
        %s1453 = scalar_lea.vmem [#allocation3], %s1452
        %1454 = vst [vmem:[%s1453] sm:$0xff] %v1276
        %1455 = vst [vmem:[%s1453 + $0x8] sm:$0xff] %v1277
        %1456 = vst [vmem:[%s1453 + $0x10] sm:$0xff] %v1278
        %1457 = vst [vmem:[%s1453 + $0x18] sm:$0xff] %v1279
        %1458 = vst [vmem:[%s1453 + $0x20] sm:$0xff] %v1280
        %1459 = vst [vmem:[%s1453 + $0x28] sm:$0xff] %v1281
        %1460 = vst [vmem:[%s1453 + $0x30] sm:$0xff] %v1282
        %1461 = vst [vmem:[%s1453 + $0x38] sm:$0xff] %v1283
        %1462 = vst [vmem:[%s1453 + $0x40] sm:$0xff] %v1284
        %1463 = vst [vmem:[%s1453 + $0x48] sm:$0xff] %v1285
        %1464 = vst [vmem:[%s1453 + $0x50] sm:$0xff] %v1286
        %1465 = vst [vmem:[%s1453 + $0x58] sm:$0xff] %v1287
        %1466 = vst [vmem:[%s1453 + $0x60] sm:$0xff] %v1288
        %1467 = vst [vmem:[%s1453 + $0x68] sm:$0xff] %v1289
        %1468 = vst [vmem:[%s1453 + $0x70] sm:$0xff] %v1290
        %1469 = vst [vmem:[%s1453 + $0x78] sm:$0xff] %v1291
      $region56: #{fsda_forward.1} parent=51 // pred_fallthru
        _
      %p1470 = scmp.eq.s32.totalorder %s27, 1
      // Predicated region
      $region69: #{fsda_forward.1} parent=51 // pred_check
        %p1471 = pneg %p1470
      $region70: #{fsda_forward.1} parent=51 // pred_check_branch
        %1473 = sbr.rel (%p1471) target = $region72
      $region71: #{fsda_forward.1} parent=51 // pred_region
        %p1474 = scmp.eq.s32.totalorder %s28, 0
        // Predicated region
        $region73: #{fsda_forward.1} parent=71 // pred_check
          %p1475 = pneg %p1474
        $region74: #{fsda_forward.1} parent=71 // pred_check_branch
          %1477 = sbr.rel (%p1475) target = $region76
        $region75: #{fsda_forward.1} parent=71 // pred_region
          %v1478 = vld [vmem:[#allocation4] sm:$0xff]
          %v1479 = vld [vmem:[#allocation4 + $0x8] sm:$0xff]
          %v1480 = vld [vmem:[#allocation4 + $0x10] sm:$0xff]
          %v1481 = vld [vmem:[#allocation4 + $0x18] sm:$0xff]
          %v1482 = vld [vmem:[#allocation4 + $0x20] sm:$0xff]
          %v1483 = vld [vmem:[#allocation4 + $0x28] sm:$0xff]
          %v1484 = vld [vmem:[#allocation4 + $0x30] sm:$0xff]
          %v1485 = vld [vmem:[#allocation4 + $0x38] sm:$0xff]
          %v1486 = vmul.f32 %v1478, 0.0069444445
          %v1487 = vmul.f32 %v1479, 0.0069444445
          %v1488 = vmul.f32 %v1480, 0.0069444445
          %v1489 = vmul.f32 %v1481, 0.0069444445
          %v1490 = vmul.f32 %v1482, 0.0069444445
          %v1491 = vmul.f32 %v1483, 0.0069444445
          %v1492 = vmul.f32 %v1484, 0.0069444445
          %v1493 = vmul.f32 %v1485, 0.0069444445
          %v1494 = vld [vmem:[%s4] sm:$0xf]
          %vm1495 = vcmask 523264
          %v1497 = vsel %vm1495, %v1494, 0
          %1499 = vmatpush.msra.mxu0 0.0
          %1500 = vmatpush.msra.mxu0 0.0
          %1501 = vmatpush.msra.mxu0 0.0
          %1502 = vmatpush.msra.mxu0 0.0
          %1503 = vmatpush.msra.mxu0 0.0
          %1504 = vmatpush.msra.mxu0 0.0
          %1505 = vmatpush.msra.mxu0 0.0
          %1506 = vmatpush.msra.mxu0 0.0
          %1507 = vmatpush.msra.mxu0 %v1493
          %1508 = vmatpush.msra.mxu0 %v1492
          %1509 = vmatpush.msra.mxu0 %v1491
          %1510 = vmatpush.msra.mxu0 %v1490
          %1511 = vmatpush.msra.mxu0 %v1489
          %1512 = vmatpush.msra.mxu0 %v1488
          %1513 = vmatpush.msra.mxu0 %v1487
          %1514 = vmatpush.msra.mxu0 %v1486
          %1515 = vmatmul.f32.gmra.mxu0 %v1497
          %v1516 = vpop.f32.mrf.mxu0
          %v1517 = vadd.f32 0.0, %v1516
          %1518 = vdwg.mxu0
          %v1519 = vmax.f32 %v1517, 0.0
          %v1520 = vld [vmem:[%s5] sm:$0xff]
          %v1521 = vld [vmem:[%s5 + $0x8] sm:$0xff]
          %v1522 = vld [vmem:[%s5 + $0x10] sm:$0xff]
          %v1523 = vld [vmem:[%s5 + $0x18] sm:$0xff]
          %v1524 = vld [vmem:[%s5 + $0x20] sm:$0xff]
          %v1525 = vld [vmem:[%s5 + $0x28] sm:$0xff]
          %v1526 = vld [vmem:[%s5 + $0x30] sm:$0xff]
          %v1527 = vld [vmem:[%s5 + $0x38] sm:$0xff]
          %vm1528 = vcmask 31744
          %v1530 = vsel %vm1528, %v1520, 0
          %v1533 = vsel %vm1528, %v1521, 0
          %v1536 = vsel %vm1528, %v1522, 0
          %v1539 = vsel %vm1528, %v1523, 0
          %v1542 = vsel %vm1528, %v1524, 0
          %v1545 = vsel %vm1528, %v1525, 0
          %v1548 = vsel %vm1528, %v1526, 0
          %v1551 = vsel %vm1528, %v1527, 0
          %vm1553 = vcmask 1043456
          %v1555 = vsel %vm1553, %v1519, 0
          %1557 = vmatpush.msra.mxu0 0.0
          %1558 = vmatpush.msra.mxu0 0.0
          %1559 = vmatpush.msra.mxu0 0.0
          %1560 = vmatpush.msra.mxu0 0.0
          %1561 = vmatpush.msra.mxu0 0.0
          %1562 = vmatpush.msra.mxu0 0.0
          %1563 = vmatpush.msra.mxu0 0.0
          %1564 = vmatpush.msra.mxu0 0.0
          %1565 = vmatpush.msra.mxu0 0.0
          %1566 = vmatpush.msra.mxu0 0.0
          %1567 = vmatpush.msra.mxu0 0.0
          %1568 = vmatpush.msra.mxu0 0.0
          %1569 = vmatpush.msra.mxu0 0.0
          %1570 = vmatpush.msra.mxu0 0.0
          %1571 = vmatpush.msra.mxu0 0.0
          %1572 = vmatpush.msra.mxu0 %v1555
          %1573 = vmatmul.f32.gmra.mxu0 %v1530
          %v1574 = vpop.f32.mrf.mxu0
          %v1575 = vadd.f32 0.0, %v1574
          %1576 = vmatmul.f32.gmra.mxu0 %v1533
          %v1577 = vpop.f32.mrf.mxu0
          %v1578 = vadd.f32 0.0, %v1577
          %1579 = vmatmul.f32.gmra.mxu0 %v1536
          %v1580 = vpop.f32.mrf.mxu0
          %v1581 = vadd.f32 0.0, %v1580
          %1582 = vmatmul.f32.gmra.mxu0 %v1539
          %v1583 = vpop.f32.mrf.mxu0
          %v1584 = vadd.f32 0.0, %v1583
          %1585 = vmatmul.f32.gmra.mxu0 %v1542
          %v1586 = vpop.f32.mrf.mxu0
          %v1587 = vadd.f32 0.0, %v1586
          %1588 = vmatmul.f32.gmra.mxu0 %v1545
          %v1589 = vpop.f32.mrf.mxu0
          %v1590 = vadd.f32 0.0, %v1589
          %1591 = vmatmul.f32.gmra.mxu0 %v1548
          %v1592 = vpop.f32.mrf.mxu0
          %v1593 = vadd.f32 0.0, %v1592
          %1594 = vmatmul.f32.gmra.mxu0 %v1551
          %v1595 = vpop.f32.mrf.mxu0
          %v1596 = vadd.f32 0.0, %v1595
          %1597 = vdwg.mxu0
          %v1598 = vxor.u32 %v1575, 2147483648
          %v1599 = vxor.u32 %v1578, 2147483648
          %v1600 = vxor.u32 %v1581, 2147483648
          %v1601 = vxor.u32 %v1584, 2147483648
          %v1602 = vxor.u32 %v1587, 2147483648
          %v1603 = vxor.u32 %v1590, 2147483648
          %v1604 = vxor.u32 %v1593, 2147483648
          %v1605 = vxor.u32 %v1596, 2147483648
          %v1606 = vmul.f32 %v1598, 1.442695
          %v1607 = vpow.pop %v1606
          %v1608 = vmul.f32 %v1599, 1.442695
          %v1609 = vpow.pop %v1608
          %v1610 = vmul.f32 %v1600, 1.442695
          %v1611 = vpow.pop %v1610
          %v1612 = vmul.f32 %v1601, 1.442695
          %v1613 = vpow.pop %v1612
          %v1614 = vmul.f32 %v1602, 1.442695
          %v1615 = vpow.pop %v1614
          %v1616 = vmul.f32 %v1603, 1.442695
          %v1617 = vpow.pop %v1616
          %v1618 = vmul.f32 %v1604, 1.442695
          %v1619 = vpow.pop %v1618
          %v1620 = vmul.f32 %v1605, 1.442695
          %v1621 = vpow.pop %v1620
          %v1622 = vadd.f32 %v1607, 1.0
          %v1623 = vadd.f32 %v1609, 1.0
          %v1624 = vadd.f32 %v1611, 1.0
          %v1625 = vadd.f32 %v1613, 1.0
          %v1626 = vadd.f32 %v1615, 1.0
          %v1627 = vadd.f32 %v1617, 1.0
          %v1628 = vadd.f32 %v1619, 1.0
          %v1629 = vadd.f32 %v1621, 1.0
          %v1630 = vrcp.pop %v1622
          %v1631 = vmul.f32 %v1622, %v1630
          %v1632 = vsub.f32 1.0, %v1631
          %v1633 = vmul.f32 %v1630, %v1632
          %v1634 = vadd.f32 %v1630, %v1633
          %vm1635 = vweird.f32 %v1622
          %vm1636 = vweird.f32 %v1630
          %vm1637 = vmor %vm1635, %vm1636
          %v1638 = vsel %vm1637, %v1630, %v1634
          %v1639 = vand.u32 2147483647, %v1622
          %vm1640 = vcmp.eq.f32.partialorder %v1639, 8.507059e+37
          %v1641 = vand.u32 %v1622, 2147483648
          %v1642 = vor.u32 1.1754944e-38, %v1641
          %v1643 = vsel %vm1640, %v1642, %v1638
          %v1644 = vmul.f32 1.0, %v1643
          %v1645 = vrcp.pop %v1623
          %v1646 = vmul.f32 %v1623, %v1645
          %v1647 = vsub.f32 1.0, %v1646
          %v1648 = vmul.f32 %v1645, %v1647
          %v1649 = vadd.f32 %v1645, %v1648
          %vm1650 = vweird.f32 %v1623
          %vm1651 = vweird.f32 %v1645
          %vm1652 = vmor %vm1650, %vm1651
          %v1653 = vsel %vm1652, %v1645, %v1649
          %v1654 = vand.u32 2147483647, %v1623
          %vm1655 = vcmp.eq.f32.partialorder %v1654, 8.507059e+37
          %v1656 = vand.u32 %v1623, 2147483648
          %v1657 = vor.u32 1.1754944e-38, %v1656
          %v1658 = vsel %vm1655, %v1657, %v1653
          %v1659 = vmul.f32 1.0, %v1658
          %v1660 = vrcp.pop %v1624
          %v1661 = vmul.f32 %v1624, %v1660
          %v1662 = vsub.f32 1.0, %v1661
          %v1663 = vmul.f32 %v1660, %v1662
          %v1664 = vadd.f32 %v1660, %v1663
          %vm1665 = vweird.f32 %v1624
          %vm1666 = vweird.f32 %v1660
          %vm1667 = vmor %vm1665, %vm1666
          %v1668 = vsel %vm1667, %v1660, %v1664
          %v1669 = vand.u32 2147483647, %v1624
          %vm1670 = vcmp.eq.f32.partialorder %v1669, 8.507059e+37
          %v1671 = vand.u32 %v1624, 2147483648
          %v1672 = vor.u32 1.1754944e-38, %v1671
          %v1673 = vsel %vm1670, %v1672, %v1668
          %v1674 = vmul.f32 1.0, %v1673
          %v1675 = vrcp.pop %v1625
          %v1676 = vmul.f32 %v1625, %v1675
          %v1677 = vsub.f32 1.0, %v1676
          %v1678 = vmul.f32 %v1675, %v1677
          %v1679 = vadd.f32 %v1675, %v1678
          %vm1680 = vweird.f32 %v1625
          %vm1681 = vweird.f32 %v1675
          %vm1682 = vmor %vm1680, %vm1681
          %v1683 = vsel %vm1682, %v1675, %v1679
          %v1684 = vand.u32 2147483647, %v1625
          %vm1685 = vcmp.eq.f32.partialorder %v1684, 8.507059e+37
          %v1686 = vand.u32 %v1625, 2147483648
          %v1687 = vor.u32 1.1754944e-38, %v1686
          %v1688 = vsel %vm1685, %v1687, %v1683
          %v1689 = vmul.f32 1.0, %v1688
          %v1690 = vrcp.pop %v1626
          %v1691 = vmul.f32 %v1626, %v1690
          %v1692 = vsub.f32 1.0, %v1691
          %v1693 = vmul.f32 %v1690, %v1692
          %v1694 = vadd.f32 %v1690, %v1693
          %vm1695 = vweird.f32 %v1626
          %vm1696 = vweird.f32 %v1690
          %vm1697 = vmor %vm1695, %vm1696
          %v1698 = vsel %vm1697, %v1690, %v1694
          %v1699 = vand.u32 2147483647, %v1626
          %vm1700 = vcmp.eq.f32.partialorder %v1699, 8.507059e+37
          %v1701 = vand.u32 %v1626, 2147483648
          %v1702 = vor.u32 1.1754944e-38, %v1701
          %v1703 = vsel %vm1700, %v1702, %v1698
          %v1704 = vmul.f32 1.0, %v1703
          %v1705 = vrcp.pop %v1627
          %v1706 = vmul.f32 %v1627, %v1705
          %v1707 = vsub.f32 1.0, %v1706
          %v1708 = vmul.f32 %v1705, %v1707
          %v1709 = vadd.f32 %v1705, %v1708
          %vm1710 = vweird.f32 %v1627
          %vm1711 = vweird.f32 %v1705
          %vm1712 = vmor %vm1710, %vm1711
          %v1713 = vsel %vm1712, %v1705, %v1709
          %v1714 = vand.u32 2147483647, %v1627
          %vm1715 = vcmp.eq.f32.partialorder %v1714, 8.507059e+37
          %v1716 = vand.u32 %v1627, 2147483648
          %v1717 = vor.u32 1.1754944e-38, %v1716
          %v1718 = vsel %vm1715, %v1717, %v1713
          %v1719 = vmul.f32 1.0, %v1718
          %v1720 = vrcp.pop %v1628
          %v1721 = vmul.f32 %v1628, %v1720
          %v1722 = vsub.f32 1.0, %v1721
          %v1723 = vmul.f32 %v1720, %v1722
          %v1724 = vadd.f32 %v1720, %v1723
          %vm1725 = vweird.f32 %v1628
          %vm1726 = vweird.f32 %v1720
          %vm1727 = vmor %vm1725, %vm1726
          %v1728 = vsel %vm1727, %v1720, %v1724
          %v1729 = vand.u32 2147483647, %v1628
          %vm1730 = vcmp.eq.f32.partialorder %v1729, 8.507059e+37
          %v1731 = vand.u32 %v1628, 2147483648
          %v1732 = vor.u32 1.1754944e-38, %v1731
          %v1733 = vsel %vm1730, %v1732, %v1728
          %v1734 = vmul.f32 1.0, %v1733
          %v1735 = vrcp.pop %v1629
          %v1736 = vmul.f32 %v1629, %v1735
          %v1737 = vsub.f32 1.0, %v1736
          %v1738 = vmul.f32 %v1735, %v1737
          %v1739 = vadd.f32 %v1735, %v1738
          %vm1740 = vweird.f32 %v1629
          %vm1741 = vweird.f32 %v1735
          %vm1742 = vmor %vm1740, %vm1741
          %v1743 = vsel %vm1742, %v1735, %v1739
          %v1744 = vand.u32 2147483647, %v1629
          %vm1745 = vcmp.eq.f32.partialorder %v1744, 8.507059e+37
          %v1746 = vand.u32 %v1629, 2147483648
          %v1747 = vor.u32 1.1754944e-38, %v1746
          %v1748 = vsel %vm1745, %v1747, %v1743
          %v1749 = vmul.f32 1.0, %v1748
          %v1750 = vlaneseq
          %v1751 = vshrl.u32 %v1750, 7
          %v1752 = vadd.s32 %v1751, 8
          %v1753 = vadd.s32 %v1751, 16
          %v1754 = vadd.s32 %v1751, 24
          %v1755 = vadd.s32 %v1751, 32
          %v1756 = vadd.s32 %v1751, 40
          %v1757 = vadd.s32 %v1751, 48
          %v1758 = vadd.s32 %v1751, 56
          %v1759 = vlaneseq
          %v1760 = vand.u32 %v1759, 127
          %vm1761 = vcmp.eq.s32.totalorder %v1751, %v1760
          %vm1762 = vcmp.eq.s32.totalorder %v1752, %v1760
          %vm1763 = vcmp.eq.s32.totalorder %v1753, %v1760
          %vm1764 = vcmp.eq.s32.totalorder %v1754, %v1760
          %vm1765 = vcmp.eq.s32.totalorder %v1755, %v1760
          %vm1766 = vcmp.eq.s32.totalorder %v1756, %v1760
          %vm1767 = vcmp.eq.s32.totalorder %v1757, %v1760
          %vm1768 = vcmp.eq.s32.totalorder %v1758, %v1760
          %1770 = vset.pattern.permute.xlu0 0
          %1771 = vperm.xlu0 %1770, %v1644
          %v1772 = vpop.permute.xlu0 %1771
          %1775 = vset.pattern.permute.xlu0 0
          %1776 = vperm.xlu0 %1775, %v1659
          %v1777 = vpop.permute.xlu0 %1776
          %1780 = vset.pattern.permute.xlu0 0
          %1781 = vperm.xlu0 %1780, %v1674
          %v1782 = vpop.permute.xlu0 %1781
          %1785 = vset.pattern.permute.xlu0 0
          %1786 = vperm.xlu0 %1785, %v1689
          %v1787 = vpop.permute.xlu0 %1786
          %1790 = vset.pattern.permute.xlu0 0
          %1791 = vperm.xlu0 %1790, %v1704
          %v1792 = vpop.permute.xlu0 %1791
          %1795 = vset.pattern.permute.xlu0 0
          %1796 = vperm.xlu0 %1795, %v1719
          %v1797 = vpop.permute.xlu0 %1796
          %1800 = vset.pattern.permute.xlu0 0
          %1801 = vperm.xlu0 %1800, %v1734
          %v1802 = vpop.permute.xlu0 %1801
          %1805 = vset.pattern.permute.xlu0 0
          %1806 = vperm.xlu0 %1805, %v1749
          %v1807 = vpop.permute.xlu0 %1806
          %v1809 = vsel %vm1761, %v1772, 0.0
          %v1810 = vsel %vm1762, %v1777, 0.0
          %v1811 = vsel %vm1763, %v1782, 0.0
          %v1812 = vsel %vm1764, %v1787, 0.0
          %v1813 = vsel %vm1765, %v1792, 0.0
          %v1814 = vsel %vm1766, %v1797, 0.0
          %v1815 = vsel %vm1767, %v1802, 0.0
          %v1816 = vsel %vm1768, %v1807, 0.0
          %v1817 = vld [vmem:[%s6] sm:$0xff]
          %v1818 = vld [vmem:[%s6 + $0x8] sm:$0xff]
          %v1819 = vld [vmem:[%s6 + $0x10] sm:$0xff]
          %v1820 = vld [vmem:[%s6 + $0x18] sm:$0xff]
          %v1821 = vld [vmem:[%s6 + $0x20] sm:$0xff]
          %v1822 = vld [vmem:[%s6 + $0x28] sm:$0xff]
          %v1823 = vld [vmem:[%s6 + $0x30] sm:$0xff]
          %v1824 = vld [vmem:[%s6 + $0x38] sm:$0xff]
          %v1826 = vsel %vm1495, %v1817, 0
          %v1829 = vsel %vm1495, %v1818, 0
          %v1832 = vsel %vm1495, %v1819, 0
          %v1835 = vsel %vm1495, %v1820, 0
          %v1838 = vsel %vm1495, %v1821, 0
          %v1841 = vsel %vm1495, %v1822, 0
          %v1844 = vsel %vm1495, %v1823, 0
          %v1847 = vsel %vm1495, %v1824, 0
          %1849 = vmatpush.msra.mxu0 0.0
          %1850 = vmatpush.msra.mxu0 0.0
          %1851 = vmatpush.msra.mxu0 0.0
          %1852 = vmatpush.msra.mxu0 0.0
          %1853 = vmatpush.msra.mxu0 0.0
          %1854 = vmatpush.msra.mxu0 0.0
          %1855 = vmatpush.msra.mxu0 0.0
          %1856 = vmatpush.msra.mxu0 0.0
          %1857 = vmatpush.msra.mxu0 %v1816
          %1858 = vmatpush.msra.mxu0 %v1815
          %1859 = vmatpush.msra.mxu0 %v1814
          %1860 = vmatpush.msra.mxu0 %v1813
          %1861 = vmatpush.msra.mxu0 %v1812
          %1862 = vmatpush.msra.mxu0 %v1811
          %1863 = vmatpush.msra.mxu0 %v1810
          %1864 = vmatpush.msra.mxu0 %v1809
          %1865 = vmatmul.f32.gmra.mxu0 %v1826
          %v1866 = vpop.f32.mrf.mxu0
          %v1867 = vadd.f32 0.0, %v1866
          %1868 = vmatmul.f32.gmra.mxu0 %v1829
          %v1869 = vpop.f32.mrf.mxu0
          %v1870 = vadd.f32 0.0, %v1869
          %1871 = vmatmul.f32.gmra.mxu0 %v1832
          %v1872 = vpop.f32.mrf.mxu0
          %v1873 = vadd.f32 0.0, %v1872
          %1874 = vmatmul.f32.gmra.mxu0 %v1835
          %v1875 = vpop.f32.mrf.mxu0
          %v1876 = vadd.f32 0.0, %v1875
          %1877 = vmatmul.f32.gmra.mxu0 %v1838
          %v1878 = vpop.f32.mrf.mxu0
          %v1879 = vadd.f32 0.0, %v1878
          %1880 = vmatmul.f32.gmra.mxu0 %v1841
          %v1881 = vpop.f32.mrf.mxu0
          %v1882 = vadd.f32 0.0, %v1881
          %1883 = vmatmul.f32.gmra.mxu0 %v1844
          %v1884 = vpop.f32.mrf.mxu0
          %v1885 = vadd.f32 0.0, %v1884
          %1886 = vmatmul.f32.gmra.mxu0 %v1847
          %v1887 = vpop.f32.mrf.mxu0
          %v1888 = vadd.f32 0.0, %v1887
          %1889 = vdwg.mxu0
          %1890 = vst.msk [vmem:[#allocation5] sm:$0xff] %vm1495, %v1867
          %1891 = vst.msk [vmem:[#allocation5 + $0x8] sm:$0xff] %vm1495, %v1870
          %1892 = vst.msk [vmem:[#allocation5 + $0x10] sm:$0xff] %vm1495, %v1873
          %1893 = vst.msk [vmem:[#allocation5 + $0x18] sm:$0xff] %vm1495, %v1876
          %1894 = vst.msk [vmem:[#allocation5 + $0x20] sm:$0xff] %vm1495, %v1879
          %1895 = vst.msk [vmem:[#allocation5 + $0x28] sm:$0xff] %vm1495, %v1882
          %1896 = vst.msk [vmem:[#allocation5 + $0x30] sm:$0xff] %vm1495, %v1885
          %1897 = vst.msk [vmem:[#allocation5 + $0x38] sm:$0xff] %vm1495, %v1888
        $region76: #{fsda_forward.1} parent=71 // pred_fallthru
          _
        %s1898 = smul.u32 %s28, 256
        %s1899 = sshra.s32 %s1898, 7
        %s1900 = sand.u32 %s1898, 127
        %s1901 = smul.addr %s1899, 8
        %s1902 = scalar_lea.vmem [#allocation2], %s1901
        %v1903 = vld [vmem:[%s1902] sm:$0xff]
        %v1904 = vld [vmem:[%s1902 + $0x8] sm:$0xff]
        %v1905 = vld [vmem:[%s1902 + $0x10] sm:$0xff]
        %v1906 = vld [vmem:[%s1902 + $0x18] sm:$0xff]
        %v1907 = vld [vmem:[%s1902 + $0x20] sm:$0xff]
        %v1908 = vld [vmem:[%s1902 + $0x28] sm:$0xff]
        %v1909 = vld [vmem:[%s1902 + $0x30] sm:$0xff]
        %v1910 = vld [vmem:[%s1902 + $0x38] sm:$0xff]
        %v1911 = vld [vmem:[%s1902 + $0x40] sm:$0xff]
        %v1912 = vld [vmem:[%s1902 + $0x48] sm:$0xff]
        %v1913 = vld [vmem:[%s1902 + $0x50] sm:$0xff]
        %v1914 = vld [vmem:[%s1902 + $0x58] sm:$0xff]
        %v1915 = vld [vmem:[%s1902 + $0x60] sm:$0xff]
        %v1916 = vld [vmem:[%s1902 + $0x68] sm:$0xff]
        %v1917 = vld [vmem:[%s1902 + $0x70] sm:$0xff]
        %v1918 = vld [vmem:[%s1902 + $0x78] sm:$0xff]
        %s1919 = smul.addr %s1899, 8
        %s1920 = scalar_lea.vmem [#allocation3], %s1919
        %v1921 = vld [vmem:[%s1920] sm:$0xff]
        %v1922 = vld [vmem:[%s1920 + $0x8] sm:$0xff]
        %v1923 = vld [vmem:[%s1920 + $0x10] sm:$0xff]
        %v1924 = vld [vmem:[%s1920 + $0x18] sm:$0xff]
        %v1925 = vld [vmem:[%s1920 + $0x20] sm:$0xff]
        %v1926 = vld [vmem:[%s1920 + $0x28] sm:$0xff]
        %v1927 = vld [vmem:[%s1920 + $0x30] sm:$0xff]
        %v1928 = vld [vmem:[%s1920 + $0x38] sm:$0xff]
        %v1929 = vld [vmem:[%s1920 + $0x40] sm:$0xff]
        %v1930 = vld [vmem:[%s1920 + $0x48] sm:$0xff]
        %v1931 = vld [vmem:[%s1920 + $0x50] sm:$0xff]
        %v1932 = vld [vmem:[%s1920 + $0x58] sm:$0xff]
        %v1933 = vld [vmem:[%s1920 + $0x60] sm:$0xff]
        %v1934 = vld [vmem:[%s1920 + $0x68] sm:$0xff]
        %v1935 = vld [vmem:[%s1920 + $0x70] sm:$0xff]
        %v1936 = vld [vmem:[%s1920 + $0x78] sm:$0xff]
        %v1937 = vld [vmem:[#allocation5] sm:$0xff]
        %v1938 = vld [vmem:[#allocation5 + $0x8] sm:$0xff]
        %v1939 = vld [vmem:[#allocation5 + $0x10] sm:$0xff]
        %v1940 = vld [vmem:[#allocation5 + $0x18] sm:$0xff]
        %v1941 = vld [vmem:[#allocation5 + $0x20] sm:$0xff]
        %v1942 = vld [vmem:[#allocation5 + $0x28] sm:$0xff]
        %v1943 = vld [vmem:[#allocation5 + $0x30] sm:$0xff]
        %v1944 = vld [vmem:[#allocation5 + $0x38] sm:$0xff]
        %vm1945 = vcmask 523264
        %v1947 = vsel %vm1945, %v1937, 0
        %v1950 = vsel %vm1945, %v1938, 0
        %v1953 = vsel %vm1945, %v1939, 0
        %v1956 = vsel %vm1945, %v1940, 0
        %v1959 = vsel %vm1945, %v1941, 0
        %v1962 = vsel %vm1945, %v1942, 0
        %v1965 = vsel %vm1945, %v1943, 0
        %v1968 = vsel %vm1945, %v1944, 0
        %1970 = vmatpush.msra.mxu0 0.0
        %1971 = vmatpush.msra.mxu0 0.0
        %1972 = vmatpush.msra.mxu0 0.0
        %1973 = vmatpush.msra.mxu0 0.0
        %1974 = vmatpush.msra.mxu0 0.0
        %1975 = vmatpush.msra.mxu0 0.0
        %1976 = vmatpush.msra.mxu0 0.0
        %1977 = vmatpush.msra.mxu0 0.0
        %1978 = vmatpush.msra.mxu0 %v1935
        %1979 = vmatpush.msra.mxu0 %v1933
        %1980 = vmatpush.msra.mxu0 %v1931
        %1981 = vmatpush.msra.mxu0 %v1929
        %1982 = vmatpush.msra.mxu0 %v1927
        %1983 = vmatpush.msra.mxu0 %v1925
        %1984 = vmatpush.msra.mxu0 %v1923
        %1985 = vmatpush.msra.mxu0 %v1921
        %1986 = vmatmul.f32.gmra.mxu0 %v1947
        %v1987 = vpop.f32.mrf.mxu0
        %v1988 = vadd.f32 0.0, %v1987
        %1989 = vmatmul.f32.gmra.mxu0 %v1950
        %v1990 = vpop.f32.mrf.mxu0
        %v1991 = vadd.f32 0.0, %v1990
        %1992 = vmatmul.f32.gmra.mxu0 %v1953
        %v1993 = vpop.f32.mrf.mxu0
        %v1994 = vadd.f32 0.0, %v1993
        %1995 = vmatmul.f32.gmra.mxu0 %v1956
        %v1996 = vpop.f32.mrf.mxu0
        %v1997 = vadd.f32 0.0, %v1996
        %1998 = vmatmul.f32.gmra.mxu0 %v1959
        %v1999 = vpop.f32.mrf.mxu0
        %v2000 = vadd.f32 0.0, %v1999
        %2001 = vmatmul.f32.gmra.mxu0 %v1962
        %v2002 = vpop.f32.mrf.mxu0
        %v2003 = vadd.f32 0.0, %v2002
        %2004 = vmatmul.f32.gmra.mxu0 %v1965
        %v2005 = vpop.f32.mrf.mxu0
        %v2006 = vadd.f32 0.0, %v2005
        %2007 = vmatmul.f32.gmra.mxu0 %v1968
        %v2008 = vpop.f32.mrf.mxu0
        %v2009 = vadd.f32 0.0, %v2008
        %2010 = vdwg.mxu0
        %2011 = vmatpush.msra.mxu0 0.0
        %2012 = vmatpush.msra.mxu0 0.0
        %2013 = vmatpush.msra.mxu0 0.0
        %2014 = vmatpush.msra.mxu0 0.0
        %2015 = vmatpush.msra.mxu0 0.0
        %2016 = vmatpush.msra.mxu0 0.0
        %2017 = vmatpush.msra.mxu0 0.0
        %2018 = vmatpush.msra.mxu0 0.0
        %2019 = vmatpush.msra.mxu0 %v1936
        %2020 = vmatpush.msra.mxu0 %v1934
        %2021 = vmatpush.msra.mxu0 %v1932
        %2022 = vmatpush.msra.mxu0 %v1930
        %2023 = vmatpush.msra.mxu0 %v1928
        %2024 = vmatpush.msra.mxu0 %v1926
        %2025 = vmatpush.msra.mxu0 %v1924
        %2026 = vmatpush.msra.mxu0 %v1922
        %2027 = vmatmul.f32.gmra.mxu0 %v1947
        %v2028 = vpop.f32.mrf.mxu0
        %v2029 = vadd.f32 0.0, %v2028
        %2030 = vmatmul.f32.gmra.mxu0 %v1950
        %v2031 = vpop.f32.mrf.mxu0
        %v2032 = vadd.f32 0.0, %v2031
        %2033 = vmatmul.f32.gmra.mxu0 %v1953
        %v2034 = vpop.f32.mrf.mxu0
        %v2035 = vadd.f32 0.0, %v2034
        %2036 = vmatmul.f32.gmra.mxu0 %v1956
        %v2037 = vpop.f32.mrf.mxu0
        %v2038 = vadd.f32 0.0, %v2037
        %2039 = vmatmul.f32.gmra.mxu0 %v1959
        %v2040 = vpop.f32.mrf.mxu0
        %v2041 = vadd.f32 0.0, %v2040
        %2042 = vmatmul.f32.gmra.mxu0 %v1962
        %v2043 = vpop.f32.mrf.mxu0
        %v2044 = vadd.f32 0.0, %v2043
        %2045 = vmatmul.f32.gmra.mxu0 %v1965
        %v2046 = vpop.f32.mrf.mxu0
        %v2047 = vadd.f32 0.0, %v2046
        %2048 = vmatmul.f32.gmra.mxu0 %v1968
        %v2049 = vpop.f32.mrf.mxu0
        %v2050 = vadd.f32 0.0, %v2049
        %2051 = vdwg.mxu0
        %v2052 = vadd.f32 %v1903, %v1988
        %v2053 = vadd.f32 %v1904, %v2029
        %v2054 = vadd.f32 %v1905, %v1991
        %v2055 = vadd.f32 %v1906, %v2032
        %v2056 = vadd.f32 %v1907, %v1994
        %v2057 = vadd.f32 %v1908, %v2035
        %v2058 = vadd.f32 %v1909, %v1997
        %v2059 = vadd.f32 %v1910, %v2038
        %v2060 = vadd.f32 %v1911, %v2000
        %v2061 = vadd.f32 %v1912, %v2041
        %v2062 = vadd.f32 %v1913, %v2003
        %v2063 = vadd.f32 %v1914, %v2044
        %v2064 = vadd.f32 %v1915, %v2006
        %v2065 = vadd.f32 %v1916, %v2047
        %v2066 = vadd.f32 %v1917, %v2009
        %v2067 = vadd.f32 %v1918, %v2050
        %v2068 = vld [vmem:[%s7] sm:$0xff]
        %v2069 = vld [vmem:[%s7 + $0x8] sm:$0xff]
        %v2070 = vld [vmem:[%s7 + $0x10] sm:$0xff]
        %v2071 = vld [vmem:[%s7 + $0x18] sm:$0xff]
        %v2072 = vld [vmem:[%s7 + $0x20] sm:$0xff]
        %v2073 = vld [vmem:[%s7 + $0x28] sm:$0xff]
        %v2074 = vld [vmem:[%s7 + $0x30] sm:$0xff]
        %v2075 = vld [vmem:[%s7 + $0x38] sm:$0xff]
        %2077 = vset.pattern.permute.xlu0 0
        %2078 = vperm.xlu0 %2077, %v2068
        %v2079 = vpop.permute.xlu0 %2078
        %2082 = vset.pattern.permute.xlu0 0
        %2083 = vperm.xlu0 %2082, %v2069
        %v2084 = vpop.permute.xlu0 %2083
        %2087 = vset.pattern.permute.xlu0 0
        %2088 = vperm.xlu0 %2087, %v2070
        %v2089 = vpop.permute.xlu0 %2088
        %2092 = vset.pattern.permute.xlu0 0
        %2093 = vperm.xlu0 %2092, %v2071
        %v2094 = vpop.permute.xlu0 %2093
        %2097 = vset.pattern.permute.xlu0 0
        %2098 = vperm.xlu0 %2097, %v2072
        %v2099 = vpop.permute.xlu0 %2098
        %2102 = vset.pattern.permute.xlu0 0
        %2103 = vperm.xlu0 %2102, %v2073
        %v2104 = vpop.permute.xlu0 %2103
        %2107 = vset.pattern.permute.xlu0 0
        %2108 = vperm.xlu0 %2107, %v2074
        %v2109 = vpop.permute.xlu0 %2108
        %2112 = vset.pattern.permute.xlu0 0
        %2113 = vperm.xlu0 %2112, %v2075
        %v2114 = vpop.permute.xlu0 %2113
        %v2116 = vadd.f32 %v2052, %v2079
        %v2117 = vadd.f32 %v2053, %v2079
        %v2118 = vadd.f32 %v2054, %v2084
        %v2119 = vadd.f32 %v2055, %v2084
        %v2120 = vadd.f32 %v2056, %v2089
        %v2121 = vadd.f32 %v2057, %v2089
        %v2122 = vadd.f32 %v2058, %v2094
        %v2123 = vadd.f32 %v2059, %v2094
        %v2124 = vadd.f32 %v2060, %v2099
        %v2125 = vadd.f32 %v2061, %v2099
        %v2126 = vadd.f32 %v2062, %v2104
        %v2127 = vadd.f32 %v2063, %v2104
        %v2128 = vadd.f32 %v2064, %v2109
        %v2129 = vadd.f32 %v2065, %v2109
        %v2130 = vadd.f32 %v2066, %v2114
        %v2131 = vadd.f32 %v2067, %v2114
        %v2132 = vand.u32 2147483647, %v2124
        %vm2133 = vcmp.le.f32.partialorder %v2132, 0.7853982
        %vm2134 = vcmp.lt.s32.totalorder %v2124, 0
        %v2135 = vand.u32 %v2124, 2139095040
        %v2136 = vshrl.u32 %v2135, 23
        %v2137 = vsub.s32 %v2136, 127
        %v2138 = vand.u32 2147483647, %v2124
        %v2139 = vand.u32 %v2138, 8388607
        %v2140 = vor.u32 %v2139, 8388608
        %v2141 = vsub.s32 0, %v2140
        %v2142 = vadd.s32 %v2137, 1
        %vm2143 = vcmp.gt.s32.totalorder %v2142, 0
        %v2144 = vsel %vm2143, %v2142, 0
        %v2145 = vshrl.u32 %v2144, 5
        %v2146 = vand.u32 %v2144, 31
        %v2147 = vsub.s32 32, %v2146
        %v2148 = vshrl.u32 683565275, %v2147
        %v2149 = vshll.u32 683565275, %v2146
        %v2150 = vshrl.u32 2475754826, %v2147
        %v2151 = vor.u32 %v2149, %v2150
        %v2152 = vshll.u32 2475754826, %v2146
        %v2153 = vshrl.u32 2131351028, %v2147
        %v2154 = vor.u32 %v2152, %v2153
        %v2155 = vshll.u32 2131351028, %v2146
        %v2156 = vshrl.u32 2102212464, %v2147
        %v2157 = vor.u32 %v2155, %v2156
        %v2158 = vshll.u32 2102212464, %v2146
        %v2159 = vshrl.u32 920167782, %v2147
        %v2160 = vor.u32 %v2158, %v2159
        %v2161 = vshll.u32 920167782, %v2146
        %v2162 = vshrl.u32 1326507024, %v2147
        %v2163 = vor.u32 %v2161, %v2162
        %vm2164 = vcmp.lt.s32.totalorder %v2145, 1
        %vm2165 = vcmp.lt.s32.totalorder %v2145, 2
        %vm2166 = vcmp.lt.s32.totalorder %v2145, 3
        %vm2167 = vcmp.lt.s32.totalorder %v2145, 4
        %v2168 = vsel %vm2164, %v2148, %v2151
        %v2169 = vsel %vm2167, %v2157, 2102212464
        %v2170 = vsel %vm2166, %v2154, %v2169
        %v2171 = vsel %vm2165, %v2168, %v2170
        %v2172 = vsel %vm2164, %v2151, %v2154
        %v2173 = vsel %vm2167, %v2160, 920167782
        %v2174 = vsel %vm2166, %v2157, %v2173
        %v2175 = vsel %vm2165, %v2172, %v2174
        %v2176 = vsel %vm2164, %v2154, %v2157
        %v2177 = vsel %vm2167, %v2163, 1326507024
        %v2178 = vsel %vm2166, %v2160, %v2177
        %v2179 = vsel %vm2165, %v2176, %v2178
        %v2180 = vshll.u32 %v2140, 8
        %v2181 = vand.u32 %v2180, 65535
        %v2182 = vshrl.u32 %v2180, 16
        %v2183 = vand.u32 %v2179, 65535
        %v2184 = vshrl.u32 %v2179, 16
        %v2185 = vmul.u32 %v2181, %v2183
        %v2186 = vmul.u32 %v2181, %v2184
        %v2187 = vmul.u32 %v2182, %v2183
        %v2188 = vmul.u32 %v2182, %v2184
        %v2189 = vshll.u32 %v2186, 16
        %v2190 = vshrl.u32 %v2186, 16
        %v2191 = vshll.u32 %v2187, 16
        %v2192 = vshrl.u32 %v2187, 16
        %vm2193 = vc.u32 %v2185, %v2189
        %v2194 = vsel %vm2193, 1, 0
        %v2195 = vadd.s32 %v2185, %v2189
        %v2196 = vadd.s32 %v2188, %v2194
        %vm2197 = vc.u32 %v2195, %v2191
        %v2198 = vsel %vm2197, 1, 0
        %v2199 = vadd.s32 %v2195, %v2191
        %v2200 = vadd.s32 %v2196, %v2198
        %v2201 = vadd.s32 %v2200, %v2190
        %v2202 = vadd.s32 %v2201, %v2192
        %v2203 = vand.u32 %v2180, 65535
        %v2204 = vshrl.u32 %v2180, 16
        %v2205 = vand.u32 %v2175, 65535
        %v2206 = vshrl.u32 %v2175, 16
        %v2207 = vmul.u32 %v2203, %v2205
        %v2208 = vmul.u32 %v2203, %v2206
        %v2209 = vmul.u32 %v2204, %v2205
        %v2210 = vmul.u32 %v2204, %v2206
        %v2211 = vshll.u32 %v2208, 16
        %v2212 = vshrl.u32 %v2208, 16
        %v2213 = vshll.u32 %v2209, 16
        %v2214 = vshrl.u32 %v2209, 16
        %vm2215 = vc.u32 %v2207, %v2211
        %v2216 = vsel %vm2215, 1, 0
        %v2217 = vadd.s32 %v2207, %v2211
        %v2218 = vadd.s32 %v2210, %v2216
        %vm2219 = vc.u32 %v2217, %v2213
        %v2220 = vsel %vm2219, 1, 0
        %v2221 = vadd.s32 %v2217, %v2213
        %v2222 = vadd.s32 %v2218, %v2220
        %v2223 = vadd.s32 %v2222, %v2212
        %v2224 = vadd.s32 %v2223, %v2214
        %v2225 = vmul.u32 %v2180, %v2171
        %v2226 = vadd.s32 %v2202, %v2221
        %vm2227 = vc.u32 %v2202, %v2221
        %v2228 = vadd.s32 %v2224, 1
        %v2229 = vsel %vm2227, %v2228, %v2224
        %v2230 = vadd.s32 %v2225, %v2229
        %v2231 = vadd.s32 %v2230, 536870912
        %v2232 = vshrl.u32 %v2231, 30
        %v2233 = vshll.u32 %v2232, 30
        %v2234 = vsub.s32 %v2230, %v2233
        %vm2235 = vcmp.lt.s32.totalorder %v2234, 0
        %v2236 = vsub.s32 0, %v2234
        %v2237 = vsel %vm2235, %v2236, %v2234
        %v2238 = vclz %v2237
        %v2239 = vsub.s32 %v2238, 2
        %vm2240 = vcmp.gt.s32.totalorder 0, %v2239
        %v2241 = vsel %vm2240, 0, %v2239
        %v2242 = vsub.s32 32, %v2241
        %v2243 = vshll.u32 %v2234, %v2241
        %v2244 = vshrl.u32 %v2226, %v2242
        %v2245 = vor.u32 %v2243, %v2244
        %v2246 = vsub.s32 4294967266, %v2241
        %v2247 = vadd.s32 %v2246, 127
        %v2248 = vshll.u32 %v2247, 23
        %v2249 = vor.u32 4788187, %v2248
        %v2250 = vand.u32 2147483647, %v2249
        %v2252 = vcvt.s32.f32 %v2245
        %v2253 = vmul.f32 %v2252, %v2250
        %v2254 = vxor.u32 %v2253, 2147483648
        %v2255 = vsel %vm2134, %v2254, %v2253
        %v2256 = vsub.s32 4, %v2232
        %v2257 = vsel %vm2134, %v2256, %v2232
        %v2258 = vsel %vm2133, %v2124, %v2255
        %v2259 = vsel %vm2133, 0, %v2257
        %v2260 = vmul.f32 %v2258, %v2258
        %v2261 = vmul.f32 %v2260, -0.001358992
        %v2262 = vadd.f32 %v2261, 0.041655596
        %v2263 = vmul.f32 %v2260, %v2262
        %v2264 = vadd.f32 %v2263, -0.4999988
        %v2265 = vmul.f32 %v2260, %v2264
        %v2266 = vadd.f32 1.0, %v2265
        %v2267 = vmul.f32 %v2258, %v2258
        %v2268 = vmul.f32 %v2267, -0.00019511016
        %v2269 = vadd.f32 %v2268, 0.008332121
        %v2270 = vmul.f32 %v2267, %v2269
        %v2271 = vadd.f32 %v2270, -0.16666654
        %v2272 = vmul.f32 %v2267, %v2271
        %v2273 = vadd.f32 %v2272, 1.0
        %v2274 = vmul.f32 %v2273, %v2258
        %vm2275 = vweird.f32 %v2124
        %v2276 = vand.u32 %v2259, 3
        %vm2277 = vcmp.lt.s32.totalorder %v2276, 2
        %vm2278 = vcmp.eq.s32.totalorder %v2276, 0
        %v2279 = vxor.u32 %v2274, 2147483648
        %v2280 = vsel %vm2278, %v2266, %v2279
        %vm2281 = vcmp.eq.s32.totalorder %v2276, 2
        %v2282 = vxor.u32 %v2266, 2147483648
        %v2283 = vsel %vm2281, %v2282, %v2274
        %v2284 = vsel %vm2277, %v2280, %v2283
        %v2285 = vsel %vm2275, nan, %v2284
        %v2286 = vand.u32 2147483647, %v2125
        %vm2287 = vcmp.le.f32.partialorder %v2286, 0.7853982
        %vm2288 = vcmp.lt.s32.totalorder %v2125, 0
        %v2289 = vand.u32 %v2125, 2139095040
        %v2290 = vshrl.u32 %v2289, 23
        %v2291 = vsub.s32 %v2290, 127
        %v2292 = vand.u32 2147483647, %v2125
        %v2293 = vand.u32 %v2292, 8388607
        %v2294 = vor.u32 %v2293, 8388608
        %v2295 = vsub.s32 0, %v2294
        %v2296 = vadd.s32 %v2291, 1
        %vm2297 = vcmp.gt.s32.totalorder %v2296, 0
        %v2298 = vsel %vm2297, %v2296, 0
        %v2299 = vshrl.u32 %v2298, 5
        %v2300 = vand.u32 %v2298, 31
        %v2301 = vsub.s32 32, %v2300
        %v2302 = vshrl.u32 683565275, %v2301
        %v2303 = vshll.u32 683565275, %v2300
        %v2304 = vshrl.u32 2475754826, %v2301
        %v2305 = vor.u32 %v2303, %v2304
        %v2306 = vshll.u32 2475754826, %v2300
        %v2307 = vshrl.u32 2131351028, %v2301
        %v2308 = vor.u32 %v2306, %v2307
        %v2309 = vshll.u32 2131351028, %v2300
        %v2310 = vshrl.u32 2102212464, %v2301
        %v2311 = vor.u32 %v2309, %v2310
        %v2312 = vshll.u32 2102212464, %v2300
        %v2313 = vshrl.u32 920167782, %v2301
        %v2314 = vor.u32 %v2312, %v2313
        %v2315 = vshll.u32 920167782, %v2300
        %v2316 = vshrl.u32 1326507024, %v2301
        %v2317 = vor.u32 %v2315, %v2316
        %vm2318 = vcmp.lt.s32.totalorder %v2299, 1
        %vm2319 = vcmp.lt.s32.totalorder %v2299, 2
        %vm2320 = vcmp.lt.s32.totalorder %v2299, 3
        %vm2321 = vcmp.lt.s32.totalorder %v2299, 4
        %v2322 = vsel %vm2318, %v2302, %v2305
        %v2323 = vsel %vm2321, %v2311, 2102212464
        %v2324 = vsel %vm2320, %v2308, %v2323
        %v2325 = vsel %vm2319, %v2322, %v2324
        %v2326 = vsel %vm2318, %v2305, %v2308
        %v2327 = vsel %vm2321, %v2314, 920167782
        %v2328 = vsel %vm2320, %v2311, %v2327
        %v2329 = vsel %vm2319, %v2326, %v2328
        %v2330 = vsel %vm2318, %v2308, %v2311
        %v2331 = vsel %vm2321, %v2317, 1326507024
        %v2332 = vsel %vm2320, %v2314, %v2331
        %v2333 = vsel %vm2319, %v2330, %v2332
        %v2334 = vshll.u32 %v2294, 8
        %v2335 = vand.u32 %v2334, 65535
        %v2336 = vshrl.u32 %v2334, 16
        %v2337 = vand.u32 %v2333, 65535
        %v2338 = vshrl.u32 %v2333, 16
        %v2339 = vmul.u32 %v2335, %v2337
        %v2340 = vmul.u32 %v2335, %v2338
        %v2341 = vmul.u32 %v2336, %v2337
        %v2342 = vmul.u32 %v2336, %v2338
        %v2343 = vshll.u32 %v2340, 16
        %v2344 = vshrl.u32 %v2340, 16
        %v2345 = vshll.u32 %v2341, 16
        %v2346 = vshrl.u32 %v2341, 16
        %vm2347 = vc.u32 %v2339, %v2343
        %v2348 = vsel %vm2347, 1, 0
        %v2349 = vadd.s32 %v2339, %v2343
        %v2350 = vadd.s32 %v2342, %v2348
        %vm2351 = vc.u32 %v2349, %v2345
        %v2352 = vsel %vm2351, 1, 0
        %v2353 = vadd.s32 %v2349, %v2345
        %v2354 = vadd.s32 %v2350, %v2352
        %v2355 = vadd.s32 %v2354, %v2344
        %v2356 = vadd.s32 %v2355, %v2346
        %v2357 = vand.u32 %v2334, 65535
        %v2358 = vshrl.u32 %v2334, 16
        %v2359 = vand.u32 %v2329, 65535
        %v2360 = vshrl.u32 %v2329, 16
        %v2361 = vmul.u32 %v2357, %v2359
        %v2362 = vmul.u32 %v2357, %v2360
        %v2363 = vmul.u32 %v2358, %v2359
        %v2364 = vmul.u32 %v2358, %v2360
        %v2365 = vshll.u32 %v2362, 16
        %v2366 = vshrl.u32 %v2362, 16
        %v2367 = vshll.u32 %v2363, 16
        %v2368 = vshrl.u32 %v2363, 16
        %vm2369 = vc.u32 %v2361, %v2365
        %v2370 = vsel %vm2369, 1, 0
        %v2371 = vadd.s32 %v2361, %v2365
        %v2372 = vadd.s32 %v2364, %v2370
        %vm2373 = vc.u32 %v2371, %v2367
        %v2374 = vsel %vm2373, 1, 0
        %v2375 = vadd.s32 %v2371, %v2367
        %v2376 = vadd.s32 %v2372, %v2374
        %v2377 = vadd.s32 %v2376, %v2366
        %v2378 = vadd.s32 %v2377, %v2368
        %v2379 = vmul.u32 %v2334, %v2325
        %v2380 = vadd.s32 %v2356, %v2375
        %vm2381 = vc.u32 %v2356, %v2375
        %v2382 = vadd.s32 %v2378, 1
        %v2383 = vsel %vm2381, %v2382, %v2378
        %v2384 = vadd.s32 %v2379, %v2383
        %v2385 = vadd.s32 %v2384, 536870912
        %v2386 = vshrl.u32 %v2385, 30
        %v2387 = vshll.u32 %v2386, 30
        %v2388 = vsub.s32 %v2384, %v2387
        %vm2389 = vcmp.lt.s32.totalorder %v2388, 0
        %v2390 = vsub.s32 0, %v2388
        %v2391 = vsel %vm2389, %v2390, %v2388
        %v2392 = vclz %v2391
        %v2393 = vsub.s32 %v2392, 2
        %vm2394 = vcmp.gt.s32.totalorder 0, %v2393
        %v2395 = vsel %vm2394, 0, %v2393
        %v2396 = vsub.s32 32, %v2395
        %v2397 = vshll.u32 %v2388, %v2395
        %v2398 = vshrl.u32 %v2380, %v2396
        %v2399 = vor.u32 %v2397, %v2398
        %v2400 = vsub.s32 4294967266, %v2395
        %v2401 = vadd.s32 %v2400, 127
        %v2402 = vshll.u32 %v2401, 23
        %v2403 = vor.u32 4788187, %v2402
        %v2404 = vand.u32 2147483647, %v2403
        %v2406 = vcvt.s32.f32 %v2399
        %v2407 = vmul.f32 %v2406, %v2404
        %v2408 = vxor.u32 %v2407, 2147483648
        %v2409 = vsel %vm2288, %v2408, %v2407
        %v2410 = vsub.s32 4, %v2386
        %v2411 = vsel %vm2288, %v2410, %v2386
        %v2412 = vsel %vm2287, %v2125, %v2409
        %v2413 = vsel %vm2287, 0, %v2411
        %v2414 = vmul.f32 %v2412, %v2412
        %v2415 = vmul.f32 %v2414, -0.001358992
        %v2416 = vadd.f32 %v2415, 0.041655596
        %v2417 = vmul.f32 %v2414, %v2416
        %v2418 = vadd.f32 %v2417, -0.4999988
        %v2419 = vmul.f32 %v2414, %v2418
        %v2420 = vadd.f32 1.0, %v2419
        %v2421 = vmul.f32 %v2412, %v2412
        %v2422 = vmul.f32 %v2421, -0.00019511016
        %v2423 = vadd.f32 %v2422, 0.008332121
        %v2424 = vmul.f32 %v2421, %v2423
        %v2425 = vadd.f32 %v2424, -0.16666654
        %v2426 = vmul.f32 %v2421, %v2425
        %v2427 = vadd.f32 %v2426, 1.0
        %v2428 = vmul.f32 %v2427, %v2412
        %vm2429 = vweird.f32 %v2125
        %v2430 = vand.u32 %v2413, 3
        %vm2431 = vcmp.lt.s32.totalorder %v2430, 2
        %vm2432 = vcmp.eq.s32.totalorder %v2430, 0
        %v2433 = vxor.u32 %v2428, 2147483648
        %v2434 = vsel %vm2432, %v2420, %v2433
        %vm2435 = vcmp.eq.s32.totalorder %v2430, 2
        %v2436 = vxor.u32 %v2420, 2147483648
        %v2437 = vsel %vm2435, %v2436, %v2428
        %v2438 = vsel %vm2431, %v2434, %v2437
        %v2439 = vsel %vm2429, nan, %v2438
        %v2440 = vand.u32 2147483647, %v2126
        %vm2441 = vcmp.le.f32.partialorder %v2440, 0.7853982
        %vm2442 = vcmp.lt.s32.totalorder %v2126, 0
        %v2443 = vand.u32 %v2126, 2139095040
        %v2444 = vshrl.u32 %v2443, 23
        %v2445 = vsub.s32 %v2444, 127
        %v2446 = vand.u32 2147483647, %v2126
        %v2447 = vand.u32 %v2446, 8388607
        %v2448 = vor.u32 %v2447, 8388608
        %v2449 = vsub.s32 0, %v2448
        %v2450 = vadd.s32 %v2445, 1
        %vm2451 = vcmp.gt.s32.totalorder %v2450, 0
        %v2452 = vsel %vm2451, %v2450, 0
        %v2453 = vshrl.u32 %v2452, 5
        %v2454 = vand.u32 %v2452, 31
        %v2455 = vsub.s32 32, %v2454
        %v2456 = vshrl.u32 683565275, %v2455
        %v2457 = vshll.u32 683565275, %v2454
        %v2458 = vshrl.u32 2475754826, %v2455
        %v2459 = vor.u32 %v2457, %v2458
        %v2460 = vshll.u32 2475754826, %v2454
        %v2461 = vshrl.u32 2131351028, %v2455
        %v2462 = vor.u32 %v2460, %v2461
        %v2463 = vshll.u32 2131351028, %v2454
        %v2464 = vshrl.u32 2102212464, %v2455
        %v2465 = vor.u32 %v2463, %v2464
        %v2466 = vshll.u32 2102212464, %v2454
        %v2467 = vshrl.u32 920167782, %v2455
        %v2468 = vor.u32 %v2466, %v2467
        %v2469 = vshll.u32 920167782, %v2454
        %v2470 = vshrl.u32 1326507024, %v2455
        %v2471 = vor.u32 %v2469, %v2470
        %vm2472 = vcmp.lt.s32.totalorder %v2453, 1
        %vm2473 = vcmp.lt.s32.totalorder %v2453, 2
        %vm2474 = vcmp.lt.s32.totalorder %v2453, 3
        %vm2475 = vcmp.lt.s32.totalorder %v2453, 4
        %v2476 = vsel %vm2472, %v2456, %v2459
        %v2477 = vsel %vm2475, %v2465, 2102212464
        %v2478 = vsel %vm2474, %v2462, %v2477
        %v2479 = vsel %vm2473, %v2476, %v2478
        %v2480 = vsel %vm2472, %v2459, %v2462
        %v2481 = vsel %vm2475, %v2468, 920167782
        %v2482 = vsel %vm2474, %v2465, %v2481
        %v2483 = vsel %vm2473, %v2480, %v2482
        %v2484 = vsel %vm2472, %v2462, %v2465
        %v2485 = vsel %vm2475, %v2471, 1326507024
        %v2486 = vsel %vm2474, %v2468, %v2485
        %v2487 = vsel %vm2473, %v2484, %v2486
        %v2488 = vshll.u32 %v2448, 8
        %v2489 = vand.u32 %v2488, 65535
        %v2490 = vshrl.u32 %v2488, 16
        %v2491 = vand.u32 %v2487, 65535
        %v2492 = vshrl.u32 %v2487, 16
        %v2493 = vmul.u32 %v2489, %v2491
        %v2494 = vmul.u32 %v2489, %v2492
        %v2495 = vmul.u32 %v2490, %v2491
        %v2496 = vmul.u32 %v2490, %v2492
        %v2497 = vshll.u32 %v2494, 16
        %v2498 = vshrl.u32 %v2494, 16
        %v2499 = vshll.u32 %v2495, 16
        %v2500 = vshrl.u32 %v2495, 16
        %vm2501 = vc.u32 %v2493, %v2497
        %v2502 = vsel %vm2501, 1, 0
        %v2503 = vadd.s32 %v2493, %v2497
        %v2504 = vadd.s32 %v2496, %v2502
        %vm2505 = vc.u32 %v2503, %v2499
        %v2506 = vsel %vm2505, 1, 0
        %v2507 = vadd.s32 %v2503, %v2499
        %v2508 = vadd.s32 %v2504, %v2506
        %v2509 = vadd.s32 %v2508, %v2498
        %v2510 = vadd.s32 %v2509, %v2500
        %v2511 = vand.u32 %v2488, 65535
        %v2512 = vshrl.u32 %v2488, 16
        %v2513 = vand.u32 %v2483, 65535
        %v2514 = vshrl.u32 %v2483, 16
        %v2515 = vmul.u32 %v2511, %v2513
        %v2516 = vmul.u32 %v2511, %v2514
        %v2517 = vmul.u32 %v2512, %v2513
        %v2518 = vmul.u32 %v2512, %v2514
        %v2519 = vshll.u32 %v2516, 16
        %v2520 = vshrl.u32 %v2516, 16
        %v2521 = vshll.u32 %v2517, 16
        %v2522 = vshrl.u32 %v2517, 16
        %vm2523 = vc.u32 %v2515, %v2519
        %v2524 = vsel %vm2523, 1, 0
        %v2525 = vadd.s32 %v2515, %v2519
        %v2526 = vadd.s32 %v2518, %v2524
        %vm2527 = vc.u32 %v2525, %v2521
        %v2528 = vsel %vm2527, 1, 0
        %v2529 = vadd.s32 %v2525, %v2521
        %v2530 = vadd.s32 %v2526, %v2528
        %v2531 = vadd.s32 %v2530, %v2520
        %v2532 = vadd.s32 %v2531, %v2522
        %v2533 = vmul.u32 %v2488, %v2479
        %v2534 = vadd.s32 %v2510, %v2529
        %vm2535 = vc.u32 %v2510, %v2529
        %v2536 = vadd.s32 %v2532, 1
        %v2537 = vsel %vm2535, %v2536, %v2532
        %v2538 = vadd.s32 %v2533, %v2537
        %v2539 = vadd.s32 %v2538, 536870912
        %v2540 = vshrl.u32 %v2539, 30
        %v2541 = vshll.u32 %v2540, 30
        %v2542 = vsub.s32 %v2538, %v2541
        %vm2543 = vcmp.lt.s32.totalorder %v2542, 0
        %v2544 = vsub.s32 0, %v2542
        %v2545 = vsel %vm2543, %v2544, %v2542
        %v2546 = vclz %v2545
        %v2547 = vsub.s32 %v2546, 2
        %vm2548 = vcmp.gt.s32.totalorder 0, %v2547
        %v2549 = vsel %vm2548, 0, %v2547
        %v2550 = vsub.s32 32, %v2549
        %v2551 = vshll.u32 %v2542, %v2549
        %v2552 = vshrl.u32 %v2534, %v2550
        %v2553 = vor.u32 %v2551, %v2552
        %v2554 = vsub.s32 4294967266, %v2549
        %v2555 = vadd.s32 %v2554, 127
        %v2556 = vshll.u32 %v2555, 23
        %v2557 = vor.u32 4788187, %v2556
        %v2558 = vand.u32 2147483647, %v2557
        %v2560 = vcvt.s32.f32 %v2553
        %v2561 = vmul.f32 %v2560, %v2558
        %v2562 = vxor.u32 %v2561, 2147483648
        %v2563 = vsel %vm2442, %v2562, %v2561
        %v2564 = vsub.s32 4, %v2540
        %v2565 = vsel %vm2442, %v2564, %v2540
        %v2566 = vsel %vm2441, %v2126, %v2563
        %v2567 = vsel %vm2441, 0, %v2565
        %v2568 = vmul.f32 %v2566, %v2566
        %v2569 = vmul.f32 %v2568, -0.001358992
        %v2570 = vadd.f32 %v2569, 0.041655596
        %v2571 = vmul.f32 %v2568, %v2570
        %v2572 = vadd.f32 %v2571, -0.4999988
        %v2573 = vmul.f32 %v2568, %v2572
        %v2574 = vadd.f32 1.0, %v2573
        %v2575 = vmul.f32 %v2566, %v2566
        %v2576 = vmul.f32 %v2575, -0.00019511016
        %v2577 = vadd.f32 %v2576, 0.008332121
        %v2578 = vmul.f32 %v2575, %v2577
        %v2579 = vadd.f32 %v2578, -0.16666654
        %v2580 = vmul.f32 %v2575, %v2579
        %v2581 = vadd.f32 %v2580, 1.0
        %v2582 = vmul.f32 %v2581, %v2566
        %vm2583 = vweird.f32 %v2126
        %v2584 = vand.u32 %v2567, 3
        %vm2585 = vcmp.lt.s32.totalorder %v2584, 2
        %vm2586 = vcmp.eq.s32.totalorder %v2584, 0
        %v2587 = vxor.u32 %v2582, 2147483648
        %v2588 = vsel %vm2586, %v2574, %v2587
        %vm2589 = vcmp.eq.s32.totalorder %v2584, 2
        %v2590 = vxor.u32 %v2574, 2147483648
        %v2591 = vsel %vm2589, %v2590, %v2582
        %v2592 = vsel %vm2585, %v2588, %v2591
        %v2593 = vsel %vm2583, nan, %v2592
        %v2594 = vand.u32 2147483647, %v2127
        %vm2595 = vcmp.le.f32.partialorder %v2594, 0.7853982
        %vm2596 = vcmp.lt.s32.totalorder %v2127, 0
        %v2597 = vand.u32 %v2127, 2139095040
        %v2598 = vshrl.u32 %v2597, 23
        %v2599 = vsub.s32 %v2598, 127
        %v2600 = vand.u32 2147483647, %v2127
        %v2601 = vand.u32 %v2600, 8388607
        %v2602 = vor.u32 %v2601, 8388608
        %v2603 = vsub.s32 0, %v2602
        %v2604 = vadd.s32 %v2599, 1
        %vm2605 = vcmp.gt.s32.totalorder %v2604, 0
        %v2606 = vsel %vm2605, %v2604, 0
        %v2607 = vshrl.u32 %v2606, 5
        %v2608 = vand.u32 %v2606, 31
        %v2609 = vsub.s32 32, %v2608
        %v2610 = vshrl.u32 683565275, %v2609
        %v2611 = vshll.u32 683565275, %v2608
        %v2612 = vshrl.u32 2475754826, %v2609
        %v2613 = vor.u32 %v2611, %v2612
        %v2614 = vshll.u32 2475754826, %v2608
        %v2615 = vshrl.u32 2131351028, %v2609
        %v2616 = vor.u32 %v2614, %v2615
        %v2617 = vshll.u32 2131351028, %v2608
        %v2618 = vshrl.u32 2102212464, %v2609
        %v2619 = vor.u32 %v2617, %v2618
        %v2620 = vshll.u32 2102212464, %v2608
        %v2621 = vshrl.u32 920167782, %v2609
        %v2622 = vor.u32 %v2620, %v2621
        %v2623 = vshll.u32 920167782, %v2608
        %v2624 = vshrl.u32 1326507024, %v2609
        %v2625 = vor.u32 %v2623, %v2624
        %vm2626 = vcmp.lt.s32.totalorder %v2607, 1
        %vm2627 = vcmp.lt.s32.totalorder %v2607, 2
        %vm2628 = vcmp.lt.s32.totalorder %v2607, 3
        %vm2629 = vcmp.lt.s32.totalorder %v2607, 4
        %v2630 = vsel %vm2626, %v2610, %v2613
        %v2631 = vsel %vm2629, %v2619, 2102212464
        %v2632 = vsel %vm2628, %v2616, %v2631
        %v2633 = vsel %vm2627, %v2630, %v2632
        %v2634 = vsel %vm2626, %v2613, %v2616
        %v2635 = vsel %vm2629, %v2622, 920167782
        %v2636 = vsel %vm2628, %v2619, %v2635
        %v2637 = vsel %vm2627, %v2634, %v2636
        %v2638 = vsel %vm2626, %v2616, %v2619
        %v2639 = vsel %vm2629, %v2625, 1326507024
        %v2640 = vsel %vm2628, %v2622, %v2639
        %v2641 = vsel %vm2627, %v2638, %v2640
        %v2642 = vshll.u32 %v2602, 8
        %v2643 = vand.u32 %v2642, 65535
        %v2644 = vshrl.u32 %v2642, 16
        %v2645 = vand.u32 %v2641, 65535
        %v2646 = vshrl.u32 %v2641, 16
        %v2647 = vmul.u32 %v2643, %v2645
        %v2648 = vmul.u32 %v2643, %v2646
        %v2649 = vmul.u32 %v2644, %v2645
        %v2650 = vmul.u32 %v2644, %v2646
        %v2651 = vshll.u32 %v2648, 16
        %v2652 = vshrl.u32 %v2648, 16
        %v2653 = vshll.u32 %v2649, 16
        %v2654 = vshrl.u32 %v2649, 16
        %vm2655 = vc.u32 %v2647, %v2651
        %v2656 = vsel %vm2655, 1, 0
        %v2657 = vadd.s32 %v2647, %v2651
        %v2658 = vadd.s32 %v2650, %v2656
        %vm2659 = vc.u32 %v2657, %v2653
        %v2660 = vsel %vm2659, 1, 0
        %v2661 = vadd.s32 %v2657, %v2653
        %v2662 = vadd.s32 %v2658, %v2660
        %v2663 = vadd.s32 %v2662, %v2652
        %v2664 = vadd.s32 %v2663, %v2654
        %v2665 = vand.u32 %v2642, 65535
        %v2666 = vshrl.u32 %v2642, 16
        %v2667 = vand.u32 %v2637, 65535
        %v2668 = vshrl.u32 %v2637, 16
        %v2669 = vmul.u32 %v2665, %v2667
        %v2670 = vmul.u32 %v2665, %v2668
        %v2671 = vmul.u32 %v2666, %v2667
        %v2672 = vmul.u32 %v2666, %v2668
        %v2673 = vshll.u32 %v2670, 16
        %v2674 = vshrl.u32 %v2670, 16
        %v2675 = vshll.u32 %v2671, 16
        %v2676 = vshrl.u32 %v2671, 16
        %vm2677 = vc.u32 %v2669, %v2673
        %v2678 = vsel %vm2677, 1, 0
        %v2679 = vadd.s32 %v2669, %v2673
        %v2680 = vadd.s32 %v2672, %v2678
        %vm2681 = vc.u32 %v2679, %v2675
        %v2682 = vsel %vm2681, 1, 0
        %v2683 = vadd.s32 %v2679, %v2675
        %v2684 = vadd.s32 %v2680, %v2682
        %v2685 = vadd.s32 %v2684, %v2674
        %v2686 = vadd.s32 %v2685, %v2676
        %v2687 = vmul.u32 %v2642, %v2633
        %v2688 = vadd.s32 %v2664, %v2683
        %vm2689 = vc.u32 %v2664, %v2683
        %v2690 = vadd.s32 %v2686, 1
        %v2691 = vsel %vm2689, %v2690, %v2686
        %v2692 = vadd.s32 %v2687, %v2691
        %v2693 = vadd.s32 %v2692, 536870912
        %v2694 = vshrl.u32 %v2693, 30
        %v2695 = vshll.u32 %v2694, 30
        %v2696 = vsub.s32 %v2692, %v2695
        %vm2697 = vcmp.lt.s32.totalorder %v2696, 0
        %v2698 = vsub.s32 0, %v2696
        %v2699 = vsel %vm2697, %v2698, %v2696
        %v2700 = vclz %v2699
        %v2701 = vsub.s32 %v2700, 2
        %vm2702 = vcmp.gt.s32.totalorder 0, %v2701
        %v2703 = vsel %vm2702, 0, %v2701
        %v2704 = vsub.s32 32, %v2703
        %v2705 = vshll.u32 %v2696, %v2703
        %v2706 = vshrl.u32 %v2688, %v2704
        %v2707 = vor.u32 %v2705, %v2706
        %v2708 = vsub.s32 4294967266, %v2703
        %v2709 = vadd.s32 %v2708, 127
        %v2710 = vshll.u32 %v2709, 23
        %v2711 = vor.u32 4788187, %v2710
        %v2712 = vand.u32 2147483647, %v2711
        %v2714 = vcvt.s32.f32 %v2707
        %v2715 = vmul.f32 %v2714, %v2712
        %v2716 = vxor.u32 %v2715, 2147483648
        %v2717 = vsel %vm2596, %v2716, %v2715
        %v2718 = vsub.s32 4, %v2694
        %v2719 = vsel %vm2596, %v2718, %v2694
        %v2720 = vsel %vm2595, %v2127, %v2717
        %v2721 = vsel %vm2595, 0, %v2719
        %v2722 = vmul.f32 %v2720, %v2720
        %v2723 = vmul.f32 %v2722, -0.001358992
        %v2724 = vadd.f32 %v2723, 0.041655596
        %v2725 = vmul.f32 %v2722, %v2724
        %v2726 = vadd.f32 %v2725, -0.4999988
        %v2727 = vmul.f32 %v2722, %v2726
        %v2728 = vadd.f32 1.0, %v2727
        %v2729 = vmul.f32 %v2720, %v2720
        %v2730 = vmul.f32 %v2729, -0.00019511016
        %v2731 = vadd.f32 %v2730, 0.008332121
        %v2732 = vmul.f32 %v2729, %v2731
        %v2733 = vadd.f32 %v2732, -0.16666654
        %v2734 = vmul.f32 %v2729, %v2733
        %v2735 = vadd.f32 %v2734, 1.0
        %v2736 = vmul.f32 %v2735, %v2720
        %vm2737 = vweird.f32 %v2127
        %v2738 = vand.u32 %v2721, 3
        %vm2739 = vcmp.lt.s32.totalorder %v2738, 2
        %vm2740 = vcmp.eq.s32.totalorder %v2738, 0
        %v2741 = vxor.u32 %v2736, 2147483648
        %v2742 = vsel %vm2740, %v2728, %v2741
        %vm2743 = vcmp.eq.s32.totalorder %v2738, 2
        %v2744 = vxor.u32 %v2728, 2147483648
        %v2745 = vsel %vm2743, %v2744, %v2736
        %v2746 = vsel %vm2739, %v2742, %v2745
        %v2747 = vsel %vm2737, nan, %v2746
        %v2748 = vand.u32 2147483647, %v2128
        %vm2749 = vcmp.le.f32.partialorder %v2748, 0.7853982
        %vm2750 = vcmp.lt.s32.totalorder %v2128, 0
        %v2751 = vand.u32 %v2128, 2139095040
        %v2752 = vshrl.u32 %v2751, 23
        %v2753 = vsub.s32 %v2752, 127
        %v2754 = vand.u32 2147483647, %v2128
        %v2755 = vand.u32 %v2754, 8388607
        %v2756 = vor.u32 %v2755, 8388608
        %v2757 = vsub.s32 0, %v2756
        %v2758 = vadd.s32 %v2753, 1
        %vm2759 = vcmp.gt.s32.totalorder %v2758, 0
        %v2760 = vsel %vm2759, %v2758, 0
        %v2761 = vshrl.u32 %v2760, 5
        %v2762 = vand.u32 %v2760, 31
        %v2763 = vsub.s32 32, %v2762
        %v2764 = vshrl.u32 683565275, %v2763
        %v2765 = vshll.u32 683565275, %v2762
        %v2766 = vshrl.u32 2475754826, %v2763
        %v2767 = vor.u32 %v2765, %v2766
        %v2768 = vshll.u32 2475754826, %v2762
        %v2769 = vshrl.u32 2131351028, %v2763
        %v2770 = vor.u32 %v2768, %v2769
        %v2771 = vshll.u32 2131351028, %v2762
        %v2772 = vshrl.u32 2102212464, %v2763
        %v2773 = vor.u32 %v2771, %v2772
        %v2774 = vshll.u32 2102212464, %v2762
        %v2775 = vshrl.u32 920167782, %v2763
        %v2776 = vor.u32 %v2774, %v2775
        %v2777 = vshll.u32 920167782, %v2762
        %v2778 = vshrl.u32 1326507024, %v2763
        %v2779 = vor.u32 %v2777, %v2778
        %vm2780 = vcmp.lt.s32.totalorder %v2761, 1
        %vm2781 = vcmp.lt.s32.totalorder %v2761, 2
        %vm2782 = vcmp.lt.s32.totalorder %v2761, 3
        %vm2783 = vcmp.lt.s32.totalorder %v2761, 4
        %v2784 = vsel %vm2780, %v2764, %v2767
        %v2785 = vsel %vm2783, %v2773, 2102212464
        %v2786 = vsel %vm2782, %v2770, %v2785
        %v2787 = vsel %vm2781, %v2784, %v2786
        %v2788 = vsel %vm2780, %v2767, %v2770
        %v2789 = vsel %vm2783, %v2776, 920167782
        %v2790 = vsel %vm2782, %v2773, %v2789
        %v2791 = vsel %vm2781, %v2788, %v2790
        %v2792 = vsel %vm2780, %v2770, %v2773
        %v2793 = vsel %vm2783, %v2779, 1326507024
        %v2794 = vsel %vm2782, %v2776, %v2793
        %v2795 = vsel %vm2781, %v2792, %v2794
        %v2796 = vshll.u32 %v2756, 8
        %v2797 = vand.u32 %v2796, 65535
        %v2798 = vshrl.u32 %v2796, 16
        %v2799 = vand.u32 %v2795, 65535
        %v2800 = vshrl.u32 %v2795, 16
        %v2801 = vmul.u32 %v2797, %v2799
        %v2802 = vmul.u32 %v2797, %v2800
        %v2803 = vmul.u32 %v2798, %v2799
        %v2804 = vmul.u32 %v2798, %v2800
        %v2805 = vshll.u32 %v2802, 16
        %v2806 = vshrl.u32 %v2802, 16
        %v2807 = vshll.u32 %v2803, 16
        %v2808 = vshrl.u32 %v2803, 16
        %vm2809 = vc.u32 %v2801, %v2805
        %v2810 = vsel %vm2809, 1, 0
        %v2811 = vadd.s32 %v2801, %v2805
        %v2812 = vadd.s32 %v2804, %v2810
        %vm2813 = vc.u32 %v2811, %v2807
        %v2814 = vsel %vm2813, 1, 0
        %v2815 = vadd.s32 %v2811, %v2807
        %v2816 = vadd.s32 %v2812, %v2814
        %v2817 = vadd.s32 %v2816, %v2806
        %v2818 = vadd.s32 %v2817, %v2808
        %v2819 = vand.u32 %v2796, 65535
        %v2820 = vshrl.u32 %v2796, 16
        %v2821 = vand.u32 %v2791, 65535
        %v2822 = vshrl.u32 %v2791, 16
        %v2823 = vmul.u32 %v2819, %v2821
        %v2824 = vmul.u32 %v2819, %v2822
        %v2825 = vmul.u32 %v2820, %v2821
        %v2826 = vmul.u32 %v2820, %v2822
        %v2827 = vshll.u32 %v2824, 16
        %v2828 = vshrl.u32 %v2824, 16
        %v2829 = vshll.u32 %v2825, 16
        %v2830 = vshrl.u32 %v2825, 16
        %vm2831 = vc.u32 %v2823, %v2827
        %v2832 = vsel %vm2831, 1, 0
        %v2833 = vadd.s32 %v2823, %v2827
        %v2834 = vadd.s32 %v2826, %v2832
        %vm2835 = vc.u32 %v2833, %v2829
        %v2836 = vsel %vm2835, 1, 0
        %v2837 = vadd.s32 %v2833, %v2829
        %v2838 = vadd.s32 %v2834, %v2836
        %v2839 = vadd.s32 %v2838, %v2828
        %v2840 = vadd.s32 %v2839, %v2830
        %v2841 = vmul.u32 %v2796, %v2787
        %v2842 = vadd.s32 %v2818, %v2837
        %vm2843 = vc.u32 %v2818, %v2837
        %v2844 = vadd.s32 %v2840, 1
        %v2845 = vsel %vm2843, %v2844, %v2840
        %v2846 = vadd.s32 %v2841, %v2845
        %v2847 = vadd.s32 %v2846, 536870912
        %v2848 = vshrl.u32 %v2847, 30
        %v2849 = vshll.u32 %v2848, 30
        %v2850 = vsub.s32 %v2846, %v2849
        %vm2851 = vcmp.lt.s32.totalorder %v2850, 0
        %v2852 = vsub.s32 0, %v2850
        %v2853 = vsel %vm2851, %v2852, %v2850
        %v2854 = vclz %v2853
        %v2855 = vsub.s32 %v2854, 2
        %vm2856 = vcmp.gt.s32.totalorder 0, %v2855
        %v2857 = vsel %vm2856, 0, %v2855
        %v2858 = vsub.s32 32, %v2857
        %v2859 = vshll.u32 %v2850, %v2857
        %v2860 = vshrl.u32 %v2842, %v2858
        %v2861 = vor.u32 %v2859, %v2860
        %v2862 = vsub.s32 4294967266, %v2857
        %v2863 = vadd.s32 %v2862, 127
        %v2864 = vshll.u32 %v2863, 23
        %v2865 = vor.u32 4788187, %v2864
        %v2866 = vand.u32 2147483647, %v2865
        %v2868 = vcvt.s32.f32 %v2861
        %v2869 = vmul.f32 %v2868, %v2866
        %v2870 = vxor.u32 %v2869, 2147483648
        %v2871 = vsel %vm2750, %v2870, %v2869
        %v2872 = vsub.s32 4, %v2848
        %v2873 = vsel %vm2750, %v2872, %v2848
        %v2874 = vsel %vm2749, %v2128, %v2871
        %v2875 = vsel %vm2749, 0, %v2873
        %v2876 = vmul.f32 %v2874, %v2874
        %v2877 = vmul.f32 %v2876, -0.001358992
        %v2878 = vadd.f32 %v2877, 0.041655596
        %v2879 = vmul.f32 %v2876, %v2878
        %v2880 = vadd.f32 %v2879, -0.4999988
        %v2881 = vmul.f32 %v2876, %v2880
        %v2882 = vadd.f32 1.0, %v2881
        %v2883 = vmul.f32 %v2874, %v2874
        %v2884 = vmul.f32 %v2883, -0.00019511016
        %v2885 = vadd.f32 %v2884, 0.008332121
        %v2886 = vmul.f32 %v2883, %v2885
        %v2887 = vadd.f32 %v2886, -0.16666654
        %v2888 = vmul.f32 %v2883, %v2887
        %v2889 = vadd.f32 %v2888, 1.0
        %v2890 = vmul.f32 %v2889, %v2874
        %vm2891 = vweird.f32 %v2128
        %v2892 = vand.u32 %v2875, 3
        %vm2893 = vcmp.lt.s32.totalorder %v2892, 2
        %vm2894 = vcmp.eq.s32.totalorder %v2892, 0
        %v2895 = vxor.u32 %v2890, 2147483648
        %v2896 = vsel %vm2894, %v2882, %v2895
        %vm2897 = vcmp.eq.s32.totalorder %v2892, 2
        %v2898 = vxor.u32 %v2882, 2147483648
        %v2899 = vsel %vm2897, %v2898, %v2890
        %v2900 = vsel %vm2893, %v2896, %v2899
        %v2901 = vsel %vm2891, nan, %v2900
        %v2902 = vand.u32 2147483647, %v2129
        %vm2903 = vcmp.le.f32.partialorder %v2902, 0.7853982
        %vm2904 = vcmp.lt.s32.totalorder %v2129, 0
        %v2905 = vand.u32 %v2129, 2139095040
        %v2906 = vshrl.u32 %v2905, 23
        %v2907 = vsub.s32 %v2906, 127
        %v2908 = vand.u32 2147483647, %v2129
        %v2909 = vand.u32 %v2908, 8388607
        %v2910 = vor.u32 %v2909, 8388608
        %v2911 = vsub.s32 0, %v2910
        %v2912 = vadd.s32 %v2907, 1
        %vm2913 = vcmp.gt.s32.totalorder %v2912, 0
        %v2914 = vsel %vm2913, %v2912, 0
        %v2915 = vshrl.u32 %v2914, 5
        %v2916 = vand.u32 %v2914, 31
        %v2917 = vsub.s32 32, %v2916
        %v2918 = vshrl.u32 683565275, %v2917
        %v2919 = vshll.u32 683565275, %v2916
        %v2920 = vshrl.u32 2475754826, %v2917
        %v2921 = vor.u32 %v2919, %v2920
        %v2922 = vshll.u32 2475754826, %v2916
        %v2923 = vshrl.u32 2131351028, %v2917
        %v2924 = vor.u32 %v2922, %v2923
        %v2925 = vshll.u32 2131351028, %v2916
        %v2926 = vshrl.u32 2102212464, %v2917
        %v2927 = vor.u32 %v2925, %v2926
        %v2928 = vshll.u32 2102212464, %v2916
        %v2929 = vshrl.u32 920167782, %v2917
        %v2930 = vor.u32 %v2928, %v2929
        %v2931 = vshll.u32 920167782, %v2916
        %v2932 = vshrl.u32 1326507024, %v2917
        %v2933 = vor.u32 %v2931, %v2932
        %vm2934 = vcmp.lt.s32.totalorder %v2915, 1
        %vm2935 = vcmp.lt.s32.totalorder %v2915, 2
        %vm2936 = vcmp.lt.s32.totalorder %v2915, 3
        %vm2937 = vcmp.lt.s32.totalorder %v2915, 4
        %v2938 = vsel %vm2934, %v2918, %v2921
        %v2939 = vsel %vm2937, %v2927, 2102212464
        %v2940 = vsel %vm2936, %v2924, %v2939
        %v2941 = vsel %vm2935, %v2938, %v2940
        %v2942 = vsel %vm2934, %v2921, %v2924
        %v2943 = vsel %vm2937, %v2930, 920167782
        %v2944 = vsel %vm2936, %v2927, %v2943
        %v2945 = vsel %vm2935, %v2942, %v2944
        %v2946 = vsel %vm2934, %v2924, %v2927
        %v2947 = vsel %vm2937, %v2933, 1326507024
        %v2948 = vsel %vm2936, %v2930, %v2947
        %v2949 = vsel %vm2935, %v2946, %v2948
        %v2950 = vshll.u32 %v2910, 8
        %v2951 = vand.u32 %v2950, 65535
        %v2952 = vshrl.u32 %v2950, 16
        %v2953 = vand.u32 %v2949, 65535
        %v2954 = vshrl.u32 %v2949, 16
        %v2955 = vmul.u32 %v2951, %v2953
        %v2956 = vmul.u32 %v2951, %v2954
        %v2957 = vmul.u32 %v2952, %v2953
        %v2958 = vmul.u32 %v2952, %v2954
        %v2959 = vshll.u32 %v2956, 16
        %v2960 = vshrl.u32 %v2956, 16
        %v2961 = vshll.u32 %v2957, 16
        %v2962 = vshrl.u32 %v2957, 16
        %vm2963 = vc.u32 %v2955, %v2959
        %v2964 = vsel %vm2963, 1, 0
        %v2965 = vadd.s32 %v2955, %v2959
        %v2966 = vadd.s32 %v2958, %v2964
        %vm2967 = vc.u32 %v2965, %v2961
        %v2968 = vsel %vm2967, 1, 0
        %v2969 = vadd.s32 %v2965, %v2961
        %v2970 = vadd.s32 %v2966, %v2968
        %v2971 = vadd.s32 %v2970, %v2960
        %v2972 = vadd.s32 %v2971, %v2962
        %v2973 = vand.u32 %v2950, 65535
        %v2974 = vshrl.u32 %v2950, 16
        %v2975 = vand.u32 %v2945, 65535
        %v2976 = vshrl.u32 %v2945, 16
        %v2977 = vmul.u32 %v2973, %v2975
        %v2978 = vmul.u32 %v2973, %v2976
        %v2979 = vmul.u32 %v2974, %v2975
        %v2980 = vmul.u32 %v2974, %v2976
        %v2981 = vshll.u32 %v2978, 16
        %v2982 = vshrl.u32 %v2978, 16
        %v2983 = vshll.u32 %v2979, 16
        %v2984 = vshrl.u32 %v2979, 16
        %vm2985 = vc.u32 %v2977, %v2981
        %v2986 = vsel %vm2985, 1, 0
        %v2987 = vadd.s32 %v2977, %v2981
        %v2988 = vadd.s32 %v2980, %v2986
        %vm2989 = vc.u32 %v2987, %v2983
        %v2990 = vsel %vm2989, 1, 0
        %v2991 = vadd.s32 %v2987, %v2983
        %v2992 = vadd.s32 %v2988, %v2990
        %v2993 = vadd.s32 %v2992, %v2982
        %v2994 = vadd.s32 %v2993, %v2984
        %v2995 = vmul.u32 %v2950, %v2941
        %v2996 = vadd.s32 %v2972, %v2991
        %vm2997 = vc.u32 %v2972, %v2991
        %v2998 = vadd.s32 %v2994, 1
        %v2999 = vsel %vm2997, %v2998, %v2994
        %v3000 = vadd.s32 %v2995, %v2999
        %v3001 = vadd.s32 %v3000, 536870912
        %v3002 = vshrl.u32 %v3001, 30
        %v3003 = vshll.u32 %v3002, 30
        %v3004 = vsub.s32 %v3000, %v3003
        %vm3005 = vcmp.lt.s32.totalorder %v3004, 0
        %v3006 = vsub.s32 0, %v3004
        %v3007 = vsel %vm3005, %v3006, %v3004
        %v3008 = vclz %v3007
        %v3009 = vsub.s32 %v3008, 2
        %vm3010 = vcmp.gt.s32.totalorder 0, %v3009
        %v3011 = vsel %vm3010, 0, %v3009
        %v3012 = vsub.s32 32, %v3011
        %v3013 = vshll.u32 %v3004, %v3011
        %v3014 = vshrl.u32 %v2996, %v3012
        %v3015 = vor.u32 %v3013, %v3014
        %v3016 = vsub.s32 4294967266, %v3011
        %v3017 = vadd.s32 %v3016, 127
        %v3018 = vshll.u32 %v3017, 23
        %v3019 = vor.u32 4788187, %v3018
        %v3020 = vand.u32 2147483647, %v3019
        %v3022 = vcvt.s32.f32 %v3015
        %v3023 = vmul.f32 %v3022, %v3020
        %v3024 = vxor.u32 %v3023, 2147483648
        %v3025 = vsel %vm2904, %v3024, %v3023
        %v3026 = vsub.s32 4, %v3002
        %v3027 = vsel %vm2904, %v3026, %v3002
        %v3028 = vsel %vm2903, %v2129, %v3025
        %v3029 = vsel %vm2903, 0, %v3027
        %v3030 = vmul.f32 %v3028, %v3028
        %v3031 = vmul.f32 %v3030, -0.001358992
        %v3032 = vadd.f32 %v3031, 0.041655596
        %v3033 = vmul.f32 %v3030, %v3032
        %v3034 = vadd.f32 %v3033, -0.4999988
        %v3035 = vmul.f32 %v3030, %v3034
        %v3036 = vadd.f32 1.0, %v3035
        %v3037 = vmul.f32 %v3028, %v3028
        %v3038 = vmul.f32 %v3037, -0.00019511016
        %v3039 = vadd.f32 %v3038, 0.008332121
        %v3040 = vmul.f32 %v3037, %v3039
        %v3041 = vadd.f32 %v3040, -0.16666654
        %v3042 = vmul.f32 %v3037, %v3041
        %v3043 = vadd.f32 %v3042, 1.0
        %v3044 = vmul.f32 %v3043, %v3028
        %vm3045 = vweird.f32 %v2129
        %v3046 = vand.u32 %v3029, 3
        %vm3047 = vcmp.lt.s32.totalorder %v3046, 2
        %vm3048 = vcmp.eq.s32.totalorder %v3046, 0
        %v3049 = vxor.u32 %v3044, 2147483648
        %v3050 = vsel %vm3048, %v3036, %v3049
        %vm3051 = vcmp.eq.s32.totalorder %v3046, 2
        %v3052 = vxor.u32 %v3036, 2147483648
        %v3053 = vsel %vm3051, %v3052, %v3044
        %v3054 = vsel %vm3047, %v3050, %v3053
        %v3055 = vsel %vm3045, nan, %v3054
        %v3056 = vand.u32 2147483647, %v2130
        %vm3057 = vcmp.le.f32.partialorder %v3056, 0.7853982
        %vm3058 = vcmp.lt.s32.totalorder %v2130, 0
        %v3059 = vand.u32 %v2130, 2139095040
        %v3060 = vshrl.u32 %v3059, 23
        %v3061 = vsub.s32 %v3060, 127
        %v3062 = vand.u32 2147483647, %v2130
        %v3063 = vand.u32 %v3062, 8388607
        %v3064 = vor.u32 %v3063, 8388608
        %v3065 = vsub.s32 0, %v3064
        %v3066 = vadd.s32 %v3061, 1
        %vm3067 = vcmp.gt.s32.totalorder %v3066, 0
        %v3068 = vsel %vm3067, %v3066, 0
        %v3069 = vshrl.u32 %v3068, 5
        %v3070 = vand.u32 %v3068, 31
        %v3071 = vsub.s32 32, %v3070
        %v3072 = vshrl.u32 683565275, %v3071
        %v3073 = vshll.u32 683565275, %v3070
        %v3074 = vshrl.u32 2475754826, %v3071
        %v3075 = vor.u32 %v3073, %v3074
        %v3076 = vshll.u32 2475754826, %v3070
        %v3077 = vshrl.u32 2131351028, %v3071
        %v3078 = vor.u32 %v3076, %v3077
        %v3079 = vshll.u32 2131351028, %v3070
        %v3080 = vshrl.u32 2102212464, %v3071
        %v3081 = vor.u32 %v3079, %v3080
        %v3082 = vshll.u32 2102212464, %v3070
        %v3083 = vshrl.u32 920167782, %v3071
        %v3084 = vor.u32 %v3082, %v3083
        %v3085 = vshll.u32 920167782, %v3070
        %v3086 = vshrl.u32 1326507024, %v3071
        %v3087 = vor.u32 %v3085, %v3086
        %vm3088 = vcmp.lt.s32.totalorder %v3069, 1
        %vm3089 = vcmp.lt.s32.totalorder %v3069, 2
        %vm3090 = vcmp.lt.s32.totalorder %v3069, 3
        %vm3091 = vcmp.lt.s32.totalorder %v3069, 4
        %v3092 = vsel %vm3088, %v3072, %v3075
        %v3093 = vsel %vm3091, %v3081, 2102212464
        %v3094 = vsel %vm3090, %v3078, %v3093
        %v3095 = vsel %vm3089, %v3092, %v3094
        %v3096 = vsel %vm3088, %v3075, %v3078
        %v3097 = vsel %vm3091, %v3084, 920167782
        %v3098 = vsel %vm3090, %v3081, %v3097
        %v3099 = vsel %vm3089, %v3096, %v3098
        %v3100 = vsel %vm3088, %v3078, %v3081
        %v3101 = vsel %vm3091, %v3087, 1326507024
        %v3102 = vsel %vm3090, %v3084, %v3101
        %v3103 = vsel %vm3089, %v3100, %v3102
        %v3104 = vshll.u32 %v3064, 8
        %v3105 = vand.u32 %v3104, 65535
        %v3106 = vshrl.u32 %v3104, 16
        %v3107 = vand.u32 %v3103, 65535
        %v3108 = vshrl.u32 %v3103, 16
        %v3109 = vmul.u32 %v3105, %v3107
        %v3110 = vmul.u32 %v3105, %v3108
        %v3111 = vmul.u32 %v3106, %v3107
        %v3112 = vmul.u32 %v3106, %v3108
        %v3113 = vshll.u32 %v3110, 16
        %v3114 = vshrl.u32 %v3110, 16
        %v3115 = vshll.u32 %v3111, 16
        %v3116 = vshrl.u32 %v3111, 16
        %vm3117 = vc.u32 %v3109, %v3113
        %v3118 = vsel %vm3117, 1, 0
        %v3119 = vadd.s32 %v3109, %v3113
        %v3120 = vadd.s32 %v3112, %v3118
        %vm3121 = vc.u32 %v3119, %v3115
        %v3122 = vsel %vm3121, 1, 0
        %v3123 = vadd.s32 %v3119, %v3115
        %v3124 = vadd.s32 %v3120, %v3122
        %v3125 = vadd.s32 %v3124, %v3114
        %v3126 = vadd.s32 %v3125, %v3116
        %v3127 = vand.u32 %v3104, 65535
        %v3128 = vshrl.u32 %v3104, 16
        %v3129 = vand.u32 %v3099, 65535
        %v3130 = vshrl.u32 %v3099, 16
        %v3131 = vmul.u32 %v3127, %v3129
        %v3132 = vmul.u32 %v3127, %v3130
        %v3133 = vmul.u32 %v3128, %v3129
        %v3134 = vmul.u32 %v3128, %v3130
        %v3135 = vshll.u32 %v3132, 16
        %v3136 = vshrl.u32 %v3132, 16
        %v3137 = vshll.u32 %v3133, 16
        %v3138 = vshrl.u32 %v3133, 16
        %vm3139 = vc.u32 %v3131, %v3135
        %v3140 = vsel %vm3139, 1, 0
        %v3141 = vadd.s32 %v3131, %v3135
        %v3142 = vadd.s32 %v3134, %v3140
        %vm3143 = vc.u32 %v3141, %v3137
        %v3144 = vsel %vm3143, 1, 0
        %v3145 = vadd.s32 %v3141, %v3137
        %v3146 = vadd.s32 %v3142, %v3144
        %v3147 = vadd.s32 %v3146, %v3136
        %v3148 = vadd.s32 %v3147, %v3138
        %v3149 = vmul.u32 %v3104, %v3095
        %v3150 = vadd.s32 %v3126, %v3145
        %vm3151 = vc.u32 %v3126, %v3145
        %v3152 = vadd.s32 %v3148, 1
        %v3153 = vsel %vm3151, %v3152, %v3148
        %v3154 = vadd.s32 %v3149, %v3153
        %v3155 = vadd.s32 %v3154, 536870912
        %v3156 = vshrl.u32 %v3155, 30
        %v3157 = vshll.u32 %v3156, 30
        %v3158 = vsub.s32 %v3154, %v3157
        %vm3159 = vcmp.lt.s32.totalorder %v3158, 0
        %v3160 = vsub.s32 0, %v3158
        %v3161 = vsel %vm3159, %v3160, %v3158
        %v3162 = vclz %v3161
        %v3163 = vsub.s32 %v3162, 2
        %vm3164 = vcmp.gt.s32.totalorder 0, %v3163
        %v3165 = vsel %vm3164, 0, %v3163
        %v3166 = vsub.s32 32, %v3165
        %v3167 = vshll.u32 %v3158, %v3165
        %v3168 = vshrl.u32 %v3150, %v3166
        %v3169 = vor.u32 %v3167, %v3168
        %v3170 = vsub.s32 4294967266, %v3165
        %v3171 = vadd.s32 %v3170, 127
        %v3172 = vshll.u32 %v3171, 23
        %v3173 = vor.u32 4788187, %v3172
        %v3174 = vand.u32 2147483647, %v3173
        %v3176 = vcvt.s32.f32 %v3169
        %v3177 = vmul.f32 %v3176, %v3174
        %v3178 = vxor.u32 %v3177, 2147483648
        %v3179 = vsel %vm3058, %v3178, %v3177
        %v3180 = vsub.s32 4, %v3156
        %v3181 = vsel %vm3058, %v3180, %v3156
        %v3182 = vsel %vm3057, %v2130, %v3179
        %v3183 = vsel %vm3057, 0, %v3181
        %v3184 = vmul.f32 %v3182, %v3182
        %v3185 = vmul.f32 %v3184, -0.001358992
        %v3186 = vadd.f32 %v3185, 0.041655596
        %v3187 = vmul.f32 %v3184, %v3186
        %v3188 = vadd.f32 %v3187, -0.4999988
        %v3189 = vmul.f32 %v3184, %v3188
        %v3190 = vadd.f32 1.0, %v3189
        %v3191 = vmul.f32 %v3182, %v3182
        %v3192 = vmul.f32 %v3191, -0.00019511016
        %v3193 = vadd.f32 %v3192, 0.008332121
        %v3194 = vmul.f32 %v3191, %v3193
        %v3195 = vadd.f32 %v3194, -0.16666654
        %v3196 = vmul.f32 %v3191, %v3195
        %v3197 = vadd.f32 %v3196, 1.0
        %v3198 = vmul.f32 %v3197, %v3182
        %vm3199 = vweird.f32 %v2130
        %v3200 = vand.u32 %v3183, 3
        %vm3201 = vcmp.lt.s32.totalorder %v3200, 2
        %vm3202 = vcmp.eq.s32.totalorder %v3200, 0
        %v3203 = vxor.u32 %v3198, 2147483648
        %v3204 = vsel %vm3202, %v3190, %v3203
        %vm3205 = vcmp.eq.s32.totalorder %v3200, 2
        %v3206 = vxor.u32 %v3190, 2147483648
        %v3207 = vsel %vm3205, %v3206, %v3198
        %v3208 = vsel %vm3201, %v3204, %v3207
        %v3209 = vsel %vm3199, nan, %v3208
        %v3210 = vand.u32 2147483647, %v2131
        %vm3211 = vcmp.le.f32.partialorder %v3210, 0.7853982
        %vm3212 = vcmp.lt.s32.totalorder %v2131, 0
        %v3213 = vand.u32 %v2131, 2139095040
        %v3214 = vshrl.u32 %v3213, 23
        %v3215 = vsub.s32 %v3214, 127
        %v3216 = vand.u32 2147483647, %v2131
        %v3217 = vand.u32 %v3216, 8388607
        %v3218 = vor.u32 %v3217, 8388608
        %v3219 = vsub.s32 0, %v3218
        %v3220 = vadd.s32 %v3215, 1
        %vm3221 = vcmp.gt.s32.totalorder %v3220, 0
        %v3222 = vsel %vm3221, %v3220, 0
        %v3223 = vshrl.u32 %v3222, 5
        %v3224 = vand.u32 %v3222, 31
        %v3225 = vsub.s32 32, %v3224
        %v3226 = vshrl.u32 683565275, %v3225
        %v3227 = vshll.u32 683565275, %v3224
        %v3228 = vshrl.u32 2475754826, %v3225
        %v3229 = vor.u32 %v3227, %v3228
        %v3230 = vshll.u32 2475754826, %v3224
        %v3231 = vshrl.u32 2131351028, %v3225
        %v3232 = vor.u32 %v3230, %v3231
        %v3233 = vshll.u32 2131351028, %v3224
        %v3234 = vshrl.u32 2102212464, %v3225
        %v3235 = vor.u32 %v3233, %v3234
        %v3236 = vshll.u32 2102212464, %v3224
        %v3237 = vshrl.u32 920167782, %v3225
        %v3238 = vor.u32 %v3236, %v3237
        %v3239 = vshll.u32 920167782, %v3224
        %v3240 = vshrl.u32 1326507024, %v3225
        %v3241 = vor.u32 %v3239, %v3240
        %vm3242 = vcmp.lt.s32.totalorder %v3223, 1
        %vm3243 = vcmp.lt.s32.totalorder %v3223, 2
        %vm3244 = vcmp.lt.s32.totalorder %v3223, 3
        %vm3245 = vcmp.lt.s32.totalorder %v3223, 4
        %v3246 = vsel %vm3242, %v3226, %v3229
        %v3247 = vsel %vm3245, %v3235, 2102212464
        %v3248 = vsel %vm3244, %v3232, %v3247
        %v3249 = vsel %vm3243, %v3246, %v3248
        %v3250 = vsel %vm3242, %v3229, %v3232
        %v3251 = vsel %vm3245, %v3238, 920167782
        %v3252 = vsel %vm3244, %v3235, %v3251
        %v3253 = vsel %vm3243, %v3250, %v3252
        %v3254 = vsel %vm3242, %v3232, %v3235
        %v3255 = vsel %vm3245, %v3241, 1326507024
        %v3256 = vsel %vm3244, %v3238, %v3255
        %v3257 = vsel %vm3243, %v3254, %v3256
        %v3258 = vshll.u32 %v3218, 8
        %v3259 = vand.u32 %v3258, 65535
        %v3260 = vshrl.u32 %v3258, 16
        %v3261 = vand.u32 %v3257, 65535
        %v3262 = vshrl.u32 %v3257, 16
        %v3263 = vmul.u32 %v3259, %v3261
        %v3264 = vmul.u32 %v3259, %v3262
        %v3265 = vmul.u32 %v3260, %v3261
        %v3266 = vmul.u32 %v3260, %v3262
        %v3267 = vshll.u32 %v3264, 16
        %v3268 = vshrl.u32 %v3264, 16
        %v3269 = vshll.u32 %v3265, 16
        %v3270 = vshrl.u32 %v3265, 16
        %vm3271 = vc.u32 %v3263, %v3267
        %v3272 = vsel %vm3271, 1, 0
        %v3273 = vadd.s32 %v3263, %v3267
        %v3274 = vadd.s32 %v3266, %v3272
        %vm3275 = vc.u32 %v3273, %v3269
        %v3276 = vsel %vm3275, 1, 0
        %v3277 = vadd.s32 %v3273, %v3269
        %v3278 = vadd.s32 %v3274, %v3276
        %v3279 = vadd.s32 %v3278, %v3268
        %v3280 = vadd.s32 %v3279, %v3270
        %v3281 = vand.u32 %v3258, 65535
        %v3282 = vshrl.u32 %v3258, 16
        %v3283 = vand.u32 %v3253, 65535
        %v3284 = vshrl.u32 %v3253, 16
        %v3285 = vmul.u32 %v3281, %v3283
        %v3286 = vmul.u32 %v3281, %v3284
        %v3287 = vmul.u32 %v3282, %v3283
        %v3288 = vmul.u32 %v3282, %v3284
        %v3289 = vshll.u32 %v3286, 16
        %v3290 = vshrl.u32 %v3286, 16
        %v3291 = vshll.u32 %v3287, 16
        %v3292 = vshrl.u32 %v3287, 16
        %vm3293 = vc.u32 %v3285, %v3289
        %v3294 = vsel %vm3293, 1, 0
        %v3295 = vadd.s32 %v3285, %v3289
        %v3296 = vadd.s32 %v3288, %v3294
        %vm3297 = vc.u32 %v3295, %v3291
        %v3298 = vsel %vm3297, 1, 0
        %v3299 = vadd.s32 %v3295, %v3291
        %v3300 = vadd.s32 %v3296, %v3298
        %v3301 = vadd.s32 %v3300, %v3290
        %v3302 = vadd.s32 %v3301, %v3292
        %v3303 = vmul.u32 %v3258, %v3249
        %v3304 = vadd.s32 %v3280, %v3299
        %vm3305 = vc.u32 %v3280, %v3299
        %v3306 = vadd.s32 %v3302, 1
        %v3307 = vsel %vm3305, %v3306, %v3302
        %v3308 = vadd.s32 %v3303, %v3307
        %v3309 = vadd.s32 %v3308, 536870912
        %v3310 = vshrl.u32 %v3309, 30
        %v3311 = vshll.u32 %v3310, 30
        %v3312 = vsub.s32 %v3308, %v3311
        %vm3313 = vcmp.lt.s32.totalorder %v3312, 0
        %v3314 = vsub.s32 0, %v3312
        %v3315 = vsel %vm3313, %v3314, %v3312
        %v3316 = vclz %v3315
        %v3317 = vsub.s32 %v3316, 2
        %vm3318 = vcmp.gt.s32.totalorder 0, %v3317
        %v3319 = vsel %vm3318, 0, %v3317
        %v3320 = vsub.s32 32, %v3319
        %v3321 = vshll.u32 %v3312, %v3319
        %v3322 = vshrl.u32 %v3304, %v3320
        %v3323 = vor.u32 %v3321, %v3322
        %v3324 = vsub.s32 4294967266, %v3319
        %v3325 = vadd.s32 %v3324, 127
        %v3326 = vshll.u32 %v3325, 23
        %v3327 = vor.u32 4788187, %v3326
        %v3328 = vand.u32 2147483647, %v3327
        %v3330 = vcvt.s32.f32 %v3323
        %v3331 = vmul.f32 %v3330, %v3328
        %v3332 = vxor.u32 %v3331, 2147483648
        %v3333 = vsel %vm3212, %v3332, %v3331
        %v3334 = vsub.s32 4, %v3310
        %v3335 = vsel %vm3212, %v3334, %v3310
        %v3336 = vsel %vm3211, %v2131, %v3333
        %v3337 = vsel %vm3211, 0, %v3335
        %v3338 = vmul.f32 %v3336, %v3336
        %v3339 = vmul.f32 %v3338, -0.001358992
        %v3340 = vadd.f32 %v3339, 0.041655596
        %v3341 = vmul.f32 %v3338, %v3340
        %v3342 = vadd.f32 %v3341, -0.4999988
        %v3343 = vmul.f32 %v3338, %v3342
        %v3344 = vadd.f32 1.0, %v3343
        %v3345 = vmul.f32 %v3336, %v3336
        %v3346 = vmul.f32 %v3345, -0.00019511016
        %v3347 = vadd.f32 %v3346, 0.008332121
        %v3348 = vmul.f32 %v3345, %v3347
        %v3349 = vadd.f32 %v3348, -0.16666654
        %v3350 = vmul.f32 %v3345, %v3349
        %v3351 = vadd.f32 %v3350, 1.0
        %v3352 = vmul.f32 %v3351, %v3336
        %vm3353 = vweird.f32 %v2131
        %v3354 = vand.u32 %v3337, 3
        %vm3355 = vcmp.lt.s32.totalorder %v3354, 2
        %vm3356 = vcmp.eq.s32.totalorder %v3354, 0
        %v3357 = vxor.u32 %v3352, 2147483648
        %v3358 = vsel %vm3356, %v3344, %v3357
        %vm3359 = vcmp.eq.s32.totalorder %v3354, 2
        %v3360 = vxor.u32 %v3344, 2147483648
        %v3361 = vsel %vm3359, %v3360, %v3352
        %v3362 = vsel %vm3355, %v3358, %v3361
        %v3363 = vsel %vm3353, nan, %v3362
        %v3364 = vmul.f32 %v2116, %v2285
        %v3365 = vmul.f32 %v2117, %v2439
        %v3366 = vmul.f32 %v2118, %v2593
        %v3367 = vmul.f32 %v2119, %v2747
        %v3368 = vmul.f32 %v2120, %v2901
        %v3369 = vmul.f32 %v2121, %v3055
        %v3370 = vmul.f32 %v2122, %v3209
        %v3371 = vmul.f32 %v2123, %v3363
        %3372 = vst [vmem:[%s462] sm:$0xff] %v3364
        %3373 = vst [vmem:[%s462 + $0x8] sm:$0xff] %v3365
        %3374 = vst [vmem:[%s462 + $0x10] sm:$0xff] %v3366
        %3375 = vst [vmem:[%s462 + $0x18] sm:$0xff] %v3367
        %3376 = vst [vmem:[%s462 + $0x20] sm:$0xff] %v3368
        %3377 = vst [vmem:[%s462 + $0x28] sm:$0xff] %v3369
        %3378 = vst [vmem:[%s462 + $0x30] sm:$0xff] %v3370
        %3379 = vst [vmem:[%s462 + $0x38] sm:$0xff] %v3371
        %v3380 = vand.u32 2147483647, %v2124
        %vm3381 = vcmp.le.f32.partialorder %v3380, 0.7853982
        %vm3382 = vcmp.lt.s32.totalorder %v2124, 0
        %v3383 = vand.u32 %v2124, 2139095040
        %v3384 = vshrl.u32 %v3383, 23
        %v3385 = vsub.s32 %v3384, 127
        %v3386 = vand.u32 2147483647, %v2124
        %v3387 = vand.u32 %v3386, 8388607
        %v3388 = vor.u32 %v3387, 8388608
        %v3389 = vsub.s32 0, %v3388
        %v3390 = vadd.s32 %v3385, 1
        %vm3391 = vcmp.gt.s32.totalorder %v3390, 0
        %v3392 = vsel %vm3391, %v3390, 0
        %v3393 = vshrl.u32 %v3392, 5
        %v3394 = vand.u32 %v3392, 31
        %v3395 = vsub.s32 32, %v3394
        %v3396 = vshrl.u32 683565275, %v3395
        %v3397 = vshll.u32 683565275, %v3394
        %v3398 = vshrl.u32 2475754826, %v3395
        %v3399 = vor.u32 %v3397, %v3398
        %v3400 = vshll.u32 2475754826, %v3394
        %v3401 = vshrl.u32 2131351028, %v3395
        %v3402 = vor.u32 %v3400, %v3401
        %v3403 = vshll.u32 2131351028, %v3394
        %v3404 = vshrl.u32 2102212464, %v3395
        %v3405 = vor.u32 %v3403, %v3404
        %v3406 = vshll.u32 2102212464, %v3394
        %v3407 = vshrl.u32 920167782, %v3395
        %v3408 = vor.u32 %v3406, %v3407
        %v3409 = vshll.u32 920167782, %v3394
        %v3410 = vshrl.u32 1326507024, %v3395
        %v3411 = vor.u32 %v3409, %v3410
        %vm3412 = vcmp.lt.s32.totalorder %v3393, 1
        %vm3413 = vcmp.lt.s32.totalorder %v3393, 2
        %vm3414 = vcmp.lt.s32.totalorder %v3393, 3
        %vm3415 = vcmp.lt.s32.totalorder %v3393, 4
        %v3416 = vsel %vm3412, %v3396, %v3399
        %v3417 = vsel %vm3415, %v3405, 2102212464
        %v3418 = vsel %vm3414, %v3402, %v3417
        %v3419 = vsel %vm3413, %v3416, %v3418
        %v3420 = vsel %vm3412, %v3399, %v3402
        %v3421 = vsel %vm3415, %v3408, 920167782
        %v3422 = vsel %vm3414, %v3405, %v3421
        %v3423 = vsel %vm3413, %v3420, %v3422
        %v3424 = vsel %vm3412, %v3402, %v3405
        %v3425 = vsel %vm3415, %v3411, 1326507024
        %v3426 = vsel %vm3414, %v3408, %v3425
        %v3427 = vsel %vm3413, %v3424, %v3426
        %v3428 = vshll.u32 %v3388, 8
        %v3429 = vand.u32 %v3428, 65535
        %v3430 = vshrl.u32 %v3428, 16
        %v3431 = vand.u32 %v3427, 65535
        %v3432 = vshrl.u32 %v3427, 16
        %v3433 = vmul.u32 %v3429, %v3431
        %v3434 = vmul.u32 %v3429, %v3432
        %v3435 = vmul.u32 %v3430, %v3431
        %v3436 = vmul.u32 %v3430, %v3432
        %v3437 = vshll.u32 %v3434, 16
        %v3438 = vshrl.u32 %v3434, 16
        %v3439 = vshll.u32 %v3435, 16
        %v3440 = vshrl.u32 %v3435, 16
        %vm3441 = vc.u32 %v3433, %v3437
        %v3442 = vsel %vm3441, 1, 0
        %v3443 = vadd.s32 %v3433, %v3437
        %v3444 = vadd.s32 %v3436, %v3442
        %vm3445 = vc.u32 %v3443, %v3439
        %v3446 = vsel %vm3445, 1, 0
        %v3447 = vadd.s32 %v3443, %v3439
        %v3448 = vadd.s32 %v3444, %v3446
        %v3449 = vadd.s32 %v3448, %v3438
        %v3450 = vadd.s32 %v3449, %v3440
        %v3451 = vand.u32 %v3428, 65535
        %v3452 = vshrl.u32 %v3428, 16
        %v3453 = vand.u32 %v3423, 65535
        %v3454 = vshrl.u32 %v3423, 16
        %v3455 = vmul.u32 %v3451, %v3453
        %v3456 = vmul.u32 %v3451, %v3454
        %v3457 = vmul.u32 %v3452, %v3453
        %v3458 = vmul.u32 %v3452, %v3454
        %v3459 = vshll.u32 %v3456, 16
        %v3460 = vshrl.u32 %v3456, 16
        %v3461 = vshll.u32 %v3457, 16
        %v3462 = vshrl.u32 %v3457, 16
        %vm3463 = vc.u32 %v3455, %v3459
        %v3464 = vsel %vm3463, 1, 0
        %v3465 = vadd.s32 %v3455, %v3459
        %v3466 = vadd.s32 %v3458, %v3464
        %vm3467 = vc.u32 %v3465, %v3461
        %v3468 = vsel %vm3467, 1, 0
        %v3469 = vadd.s32 %v3465, %v3461
        %v3470 = vadd.s32 %v3466, %v3468
        %v3471 = vadd.s32 %v3470, %v3460
        %v3472 = vadd.s32 %v3471, %v3462
        %v3473 = vmul.u32 %v3428, %v3419
        %v3474 = vadd.s32 %v3450, %v3469
        %vm3475 = vc.u32 %v3450, %v3469
        %v3476 = vadd.s32 %v3472, 1
        %v3477 = vsel %vm3475, %v3476, %v3472
        %v3478 = vadd.s32 %v3473, %v3477
        %v3479 = vadd.s32 %v3478, 536870912
        %v3480 = vshrl.u32 %v3479, 30
        %v3481 = vshll.u32 %v3480, 30
        %v3482 = vsub.s32 %v3478, %v3481
        %vm3483 = vcmp.lt.s32.totalorder %v3482, 0
        %v3484 = vsub.s32 0, %v3482
        %v3485 = vsel %vm3483, %v3484, %v3482
        %v3486 = vclz %v3485
        %v3487 = vsub.s32 %v3486, 2
        %vm3488 = vcmp.gt.s32.totalorder 0, %v3487
        %v3489 = vsel %vm3488, 0, %v3487
        %v3490 = vsub.s32 32, %v3489
        %v3491 = vshll.u32 %v3482, %v3489
        %v3492 = vshrl.u32 %v3474, %v3490
        %v3493 = vor.u32 %v3491, %v3492
        %v3494 = vsub.s32 4294967266, %v3489
        %v3495 = vadd.s32 %v3494, 127
        %v3496 = vshll.u32 %v3495, 23
        %v3497 = vor.u32 4788187, %v3496
        %v3498 = vand.u32 2147483647, %v3497
        %v3500 = vcvt.s32.f32 %v3493
        %v3501 = vmul.f32 %v3500, %v3498
        %v3502 = vxor.u32 %v3501, 2147483648
        %v3503 = vsel %vm3382, %v3502, %v3501
        %v3504 = vsub.s32 4, %v3480
        %v3505 = vsel %vm3382, %v3504, %v3480
        %v3506 = vsel %vm3381, %v2124, %v3503
        %v3507 = vsel %vm3381, 0, %v3505
        %v3508 = vmul.f32 %v3506, %v3506
        %v3509 = vmul.f32 %v3508, -0.001358992
        %v3510 = vadd.f32 %v3509, 0.041655596
        %v3511 = vmul.f32 %v3508, %v3510
        %v3512 = vadd.f32 %v3511, -0.4999988
        %v3513 = vmul.f32 %v3508, %v3512
        %v3514 = vadd.f32 1.0, %v3513
        %v3515 = vmul.f32 %v3506, %v3506
        %v3516 = vmul.f32 %v3515, -0.00019511016
        %v3517 = vadd.f32 %v3516, 0.008332121
        %v3518 = vmul.f32 %v3515, %v3517
        %v3519 = vadd.f32 %v3518, -0.16666654
        %v3520 = vmul.f32 %v3515, %v3519
        %v3521 = vadd.f32 %v3520, 1.0
        %v3522 = vmul.f32 %v3521, %v3506
        %vm3523 = vweird.f32 %v2124
        %v3524 = vadd.s32 %v3507, 3
        %v3525 = vand.u32 %v3524, 3
        %vm3526 = vcmp.lt.s32.totalorder %v3525, 2
        %vm3527 = vcmp.eq.s32.totalorder %v3525, 0
        %v3528 = vxor.u32 %v3522, 2147483648
        %v3529 = vsel %vm3527, %v3514, %v3528
        %vm3530 = vcmp.eq.s32.totalorder %v3525, 2
        %v3531 = vxor.u32 %v3514, 2147483648
        %v3532 = vsel %vm3530, %v3531, %v3522
        %v3533 = vsel %vm3526, %v3529, %v3532
        %v3534 = vsel %vm3523, nan, %v3533
        %v3535 = vand.u32 2147483647, %v2125
        %vm3536 = vcmp.le.f32.partialorder %v3535, 0.7853982
        %vm3537 = vcmp.lt.s32.totalorder %v2125, 0
        %v3538 = vand.u32 %v2125, 2139095040
        %v3539 = vshrl.u32 %v3538, 23
        %v3540 = vsub.s32 %v3539, 127
        %v3541 = vand.u32 2147483647, %v2125
        %v3542 = vand.u32 %v3541, 8388607
        %v3543 = vor.u32 %v3542, 8388608
        %v3544 = vsub.s32 0, %v3543
        %v3545 = vadd.s32 %v3540, 1
        %vm3546 = vcmp.gt.s32.totalorder %v3545, 0
        %v3547 = vsel %vm3546, %v3545, 0
        %v3548 = vshrl.u32 %v3547, 5
        %v3549 = vand.u32 %v3547, 31
        %v3550 = vsub.s32 32, %v3549
        %v3551 = vshrl.u32 683565275, %v3550
        %v3552 = vshll.u32 683565275, %v3549
        %v3553 = vshrl.u32 2475754826, %v3550
        %v3554 = vor.u32 %v3552, %v3553
        %v3555 = vshll.u32 2475754826, %v3549
        %v3556 = vshrl.u32 2131351028, %v3550
        %v3557 = vor.u32 %v3555, %v3556
        %v3558 = vshll.u32 2131351028, %v3549
        %v3559 = vshrl.u32 2102212464, %v3550
        %v3560 = vor.u32 %v3558, %v3559
        %v3561 = vshll.u32 2102212464, %v3549
        %v3562 = vshrl.u32 920167782, %v3550
        %v3563 = vor.u32 %v3561, %v3562
        %v3564 = vshll.u32 920167782, %v3549
        %v3565 = vshrl.u32 1326507024, %v3550
        %v3566 = vor.u32 %v3564, %v3565
        %vm3567 = vcmp.lt.s32.totalorder %v3548, 1
        %vm3568 = vcmp.lt.s32.totalorder %v3548, 2
        %vm3569 = vcmp.lt.s32.totalorder %v3548, 3
        %vm3570 = vcmp.lt.s32.totalorder %v3548, 4
        %v3571 = vsel %vm3567, %v3551, %v3554
        %v3572 = vsel %vm3570, %v3560, 2102212464
        %v3573 = vsel %vm3569, %v3557, %v3572
        %v3574 = vsel %vm3568, %v3571, %v3573
        %v3575 = vsel %vm3567, %v3554, %v3557
        %v3576 = vsel %vm3570, %v3563, 920167782
        %v3577 = vsel %vm3569, %v3560, %v3576
        %v3578 = vsel %vm3568, %v3575, %v3577
        %v3579 = vsel %vm3567, %v3557, %v3560
        %v3580 = vsel %vm3570, %v3566, 1326507024
        %v3581 = vsel %vm3569, %v3563, %v3580
        %v3582 = vsel %vm3568, %v3579, %v3581
        %v3583 = vshll.u32 %v3543, 8
        %v3584 = vand.u32 %v3583, 65535
        %v3585 = vshrl.u32 %v3583, 16
        %v3586 = vand.u32 %v3582, 65535
        %v3587 = vshrl.u32 %v3582, 16
        %v3588 = vmul.u32 %v3584, %v3586
        %v3589 = vmul.u32 %v3584, %v3587
        %v3590 = vmul.u32 %v3585, %v3586
        %v3591 = vmul.u32 %v3585, %v3587
        %v3592 = vshll.u32 %v3589, 16
        %v3593 = vshrl.u32 %v3589, 16
        %v3594 = vshll.u32 %v3590, 16
        %v3595 = vshrl.u32 %v3590, 16
        %vm3596 = vc.u32 %v3588, %v3592
        %v3597 = vsel %vm3596, 1, 0
        %v3598 = vadd.s32 %v3588, %v3592
        %v3599 = vadd.s32 %v3591, %v3597
        %vm3600 = vc.u32 %v3598, %v3594
        %v3601 = vsel %vm3600, 1, 0
        %v3602 = vadd.s32 %v3598, %v3594
        %v3603 = vadd.s32 %v3599, %v3601
        %v3604 = vadd.s32 %v3603, %v3593
        %v3605 = vadd.s32 %v3604, %v3595
        %v3606 = vand.u32 %v3583, 65535
        %v3607 = vshrl.u32 %v3583, 16
        %v3608 = vand.u32 %v3578, 65535
        %v3609 = vshrl.u32 %v3578, 16
        %v3610 = vmul.u32 %v3606, %v3608
        %v3611 = vmul.u32 %v3606, %v3609
        %v3612 = vmul.u32 %v3607, %v3608
        %v3613 = vmul.u32 %v3607, %v3609
        %v3614 = vshll.u32 %v3611, 16
        %v3615 = vshrl.u32 %v3611, 16
        %v3616 = vshll.u32 %v3612, 16
        %v3617 = vshrl.u32 %v3612, 16
        %vm3618 = vc.u32 %v3610, %v3614
        %v3619 = vsel %vm3618, 1, 0
        %v3620 = vadd.s32 %v3610, %v3614
        %v3621 = vadd.s32 %v3613, %v3619
        %vm3622 = vc.u32 %v3620, %v3616
        %v3623 = vsel %vm3622, 1, 0
        %v3624 = vadd.s32 %v3620, %v3616
        %v3625 = vadd.s32 %v3621, %v3623
        %v3626 = vadd.s32 %v3625, %v3615
        %v3627 = vadd.s32 %v3626, %v3617
        %v3628 = vmul.u32 %v3583, %v3574
        %v3629 = vadd.s32 %v3605, %v3624
        %vm3630 = vc.u32 %v3605, %v3624
        %v3631 = vadd.s32 %v3627, 1
        %v3632 = vsel %vm3630, %v3631, %v3627
        %v3633 = vadd.s32 %v3628, %v3632
        %v3634 = vadd.s32 %v3633, 536870912
        %v3635 = vshrl.u32 %v3634, 30
        %v3636 = vshll.u32 %v3635, 30
        %v3637 = vsub.s32 %v3633, %v3636
        %vm3638 = vcmp.lt.s32.totalorder %v3637, 0
        %v3639 = vsub.s32 0, %v3637
        %v3640 = vsel %vm3638, %v3639, %v3637
        %v3641 = vclz %v3640
        %v3642 = vsub.s32 %v3641, 2
        %vm3643 = vcmp.gt.s32.totalorder 0, %v3642
        %v3644 = vsel %vm3643, 0, %v3642
        %v3645 = vsub.s32 32, %v3644
        %v3646 = vshll.u32 %v3637, %v3644
        %v3647 = vshrl.u32 %v3629, %v3645
        %v3648 = vor.u32 %v3646, %v3647
        %v3649 = vsub.s32 4294967266, %v3644
        %v3650 = vadd.s32 %v3649, 127
        %v3651 = vshll.u32 %v3650, 23
        %v3652 = vor.u32 4788187, %v3651
        %v3653 = vand.u32 2147483647, %v3652
        %v3655 = vcvt.s32.f32 %v3648
        %v3656 = vmul.f32 %v3655, %v3653
        %v3657 = vxor.u32 %v3656, 2147483648
        %v3658 = vsel %vm3537, %v3657, %v3656
        %v3659 = vsub.s32 4, %v3635
        %v3660 = vsel %vm3537, %v3659, %v3635
        %v3661 = vsel %vm3536, %v2125, %v3658
        %v3662 = vsel %vm3536, 0, %v3660
        %v3663 = vmul.f32 %v3661, %v3661
        %v3664 = vmul.f32 %v3663, -0.001358992
        %v3665 = vadd.f32 %v3664, 0.041655596
        %v3666 = vmul.f32 %v3663, %v3665
        %v3667 = vadd.f32 %v3666, -0.4999988
        %v3668 = vmul.f32 %v3663, %v3667
        %v3669 = vadd.f32 1.0, %v3668
        %v3670 = vmul.f32 %v3661, %v3661
        %v3671 = vmul.f32 %v3670, -0.00019511016
        %v3672 = vadd.f32 %v3671, 0.008332121
        %v3673 = vmul.f32 %v3670, %v3672
        %v3674 = vadd.f32 %v3673, -0.16666654
        %v3675 = vmul.f32 %v3670, %v3674
        %v3676 = vadd.f32 %v3675, 1.0
        %v3677 = vmul.f32 %v3676, %v3661
        %vm3678 = vweird.f32 %v2125
        %v3679 = vadd.s32 %v3662, 3
        %v3680 = vand.u32 %v3679, 3
        %vm3681 = vcmp.lt.s32.totalorder %v3680, 2
        %vm3682 = vcmp.eq.s32.totalorder %v3680, 0
        %v3683 = vxor.u32 %v3677, 2147483648
        %v3684 = vsel %vm3682, %v3669, %v3683
        %vm3685 = vcmp.eq.s32.totalorder %v3680, 2
        %v3686 = vxor.u32 %v3669, 2147483648
        %v3687 = vsel %vm3685, %v3686, %v3677
        %v3688 = vsel %vm3681, %v3684, %v3687
        %v3689 = vsel %vm3678, nan, %v3688
        %v3690 = vand.u32 2147483647, %v2126
        %vm3691 = vcmp.le.f32.partialorder %v3690, 0.7853982
        %vm3692 = vcmp.lt.s32.totalorder %v2126, 0
        %v3693 = vand.u32 %v2126, 2139095040
        %v3694 = vshrl.u32 %v3693, 23
        %v3695 = vsub.s32 %v3694, 127
        %v3696 = vand.u32 2147483647, %v2126
        %v3697 = vand.u32 %v3696, 8388607
        %v3698 = vor.u32 %v3697, 8388608
        %v3699 = vsub.s32 0, %v3698
        %v3700 = vadd.s32 %v3695, 1
        %vm3701 = vcmp.gt.s32.totalorder %v3700, 0
        %v3702 = vsel %vm3701, %v3700, 0
        %v3703 = vshrl.u32 %v3702, 5
        %v3704 = vand.u32 %v3702, 31
        %v3705 = vsub.s32 32, %v3704
        %v3706 = vshrl.u32 683565275, %v3705
        %v3707 = vshll.u32 683565275, %v3704
        %v3708 = vshrl.u32 2475754826, %v3705
        %v3709 = vor.u32 %v3707, %v3708
        %v3710 = vshll.u32 2475754826, %v3704
        %v3711 = vshrl.u32 2131351028, %v3705
        %v3712 = vor.u32 %v3710, %v3711
        %v3713 = vshll.u32 2131351028, %v3704
        %v3714 = vshrl.u32 2102212464, %v3705
        %v3715 = vor.u32 %v3713, %v3714
        %v3716 = vshll.u32 2102212464, %v3704
        %v3717 = vshrl.u32 920167782, %v3705
        %v3718 = vor.u32 %v3716, %v3717
        %v3719 = vshll.u32 920167782, %v3704
        %v3720 = vshrl.u32 1326507024, %v3705
        %v3721 = vor.u32 %v3719, %v3720
        %vm3722 = vcmp.lt.s32.totalorder %v3703, 1
        %vm3723 = vcmp.lt.s32.totalorder %v3703, 2
        %vm3724 = vcmp.lt.s32.totalorder %v3703, 3
        %vm3725 = vcmp.lt.s32.totalorder %v3703, 4
        %v3726 = vsel %vm3722, %v3706, %v3709
        %v3727 = vsel %vm3725, %v3715, 2102212464
        %v3728 = vsel %vm3724, %v3712, %v3727
        %v3729 = vsel %vm3723, %v3726, %v3728
        %v3730 = vsel %vm3722, %v3709, %v3712
        %v3731 = vsel %vm3725, %v3718, 920167782
        %v3732 = vsel %vm3724, %v3715, %v3731
        %v3733 = vsel %vm3723, %v3730, %v3732
        %v3734 = vsel %vm3722, %v3712, %v3715
        %v3735 = vsel %vm3725, %v3721, 1326507024
        %v3736 = vsel %vm3724, %v3718, %v3735
        %v3737 = vsel %vm3723, %v3734, %v3736
        %v3738 = vshll.u32 %v3698, 8
        %v3739 = vand.u32 %v3738, 65535
        %v3740 = vshrl.u32 %v3738, 16
        %v3741 = vand.u32 %v3737, 65535
        %v3742 = vshrl.u32 %v3737, 16
        %v3743 = vmul.u32 %v3739, %v3741
        %v3744 = vmul.u32 %v3739, %v3742
        %v3745 = vmul.u32 %v3740, %v3741
        %v3746 = vmul.u32 %v3740, %v3742
        %v3747 = vshll.u32 %v3744, 16
        %v3748 = vshrl.u32 %v3744, 16
        %v3749 = vshll.u32 %v3745, 16
        %v3750 = vshrl.u32 %v3745, 16
        %vm3751 = vc.u32 %v3743, %v3747
        %v3752 = vsel %vm3751, 1, 0
        %v3753 = vadd.s32 %v3743, %v3747
        %v3754 = vadd.s32 %v3746, %v3752
        %vm3755 = vc.u32 %v3753, %v3749
        %v3756 = vsel %vm3755, 1, 0
        %v3757 = vadd.s32 %v3753, %v3749
        %v3758 = vadd.s32 %v3754, %v3756
        %v3759 = vadd.s32 %v3758, %v3748
        %v3760 = vadd.s32 %v3759, %v3750
        %v3761 = vand.u32 %v3738, 65535
        %v3762 = vshrl.u32 %v3738, 16
        %v3763 = vand.u32 %v3733, 65535
        %v3764 = vshrl.u32 %v3733, 16
        %v3765 = vmul.u32 %v3761, %v3763
        %v3766 = vmul.u32 %v3761, %v3764
        %v3767 = vmul.u32 %v3762, %v3763
        %v3768 = vmul.u32 %v3762, %v3764
        %v3769 = vshll.u32 %v3766, 16
        %v3770 = vshrl.u32 %v3766, 16
        %v3771 = vshll.u32 %v3767, 16
        %v3772 = vshrl.u32 %v3767, 16
        %vm3773 = vc.u32 %v3765, %v3769
        %v3774 = vsel %vm3773, 1, 0
        %v3775 = vadd.s32 %v3765, %v3769
        %v3776 = vadd.s32 %v3768, %v3774
        %vm3777 = vc.u32 %v3775, %v3771
        %v3778 = vsel %vm3777, 1, 0
        %v3779 = vadd.s32 %v3775, %v3771
        %v3780 = vadd.s32 %v3776, %v3778
        %v3781 = vadd.s32 %v3780, %v3770
        %v3782 = vadd.s32 %v3781, %v3772
        %v3783 = vmul.u32 %v3738, %v3729
        %v3784 = vadd.s32 %v3760, %v3779
        %vm3785 = vc.u32 %v3760, %v3779
        %v3786 = vadd.s32 %v3782, 1
        %v3787 = vsel %vm3785, %v3786, %v3782
        %v3788 = vadd.s32 %v3783, %v3787
        %v3789 = vadd.s32 %v3788, 536870912
        %v3790 = vshrl.u32 %v3789, 30
        %v3791 = vshll.u32 %v3790, 30
        %v3792 = vsub.s32 %v3788, %v3791
        %vm3793 = vcmp.lt.s32.totalorder %v3792, 0
        %v3794 = vsub.s32 0, %v3792
        %v3795 = vsel %vm3793, %v3794, %v3792
        %v3796 = vclz %v3795
        %v3797 = vsub.s32 %v3796, 2
        %vm3798 = vcmp.gt.s32.totalorder 0, %v3797
        %v3799 = vsel %vm3798, 0, %v3797
        %v3800 = vsub.s32 32, %v3799
        %v3801 = vshll.u32 %v3792, %v3799
        %v3802 = vshrl.u32 %v3784, %v3800
        %v3803 = vor.u32 %v3801, %v3802
        %v3804 = vsub.s32 4294967266, %v3799
        %v3805 = vadd.s32 %v3804, 127
        %v3806 = vshll.u32 %v3805, 23
        %v3807 = vor.u32 4788187, %v3806
        %v3808 = vand.u32 2147483647, %v3807
        %v3810 = vcvt.s32.f32 %v3803
        %v3811 = vmul.f32 %v3810, %v3808
        %v3812 = vxor.u32 %v3811, 2147483648
        %v3813 = vsel %vm3692, %v3812, %v3811
        %v3814 = vsub.s32 4, %v3790
        %v3815 = vsel %vm3692, %v3814, %v3790
        %v3816 = vsel %vm3691, %v2126, %v3813
        %v3817 = vsel %vm3691, 0, %v3815
        %v3818 = vmul.f32 %v3816, %v3816
        %v3819 = vmul.f32 %v3818, -0.001358992
        %v3820 = vadd.f32 %v3819, 0.041655596
        %v3821 = vmul.f32 %v3818, %v3820
        %v3822 = vadd.f32 %v3821, -0.4999988
        %v3823 = vmul.f32 %v3818, %v3822
        %v3824 = vadd.f32 1.0, %v3823
        %v3825 = vmul.f32 %v3816, %v3816
        %v3826 = vmul.f32 %v3825, -0.00019511016
        %v3827 = vadd.f32 %v3826, 0.008332121
        %v3828 = vmul.f32 %v3825, %v3827
        %v3829 = vadd.f32 %v3828, -0.16666654
        %v3830 = vmul.f32 %v3825, %v3829
        %v3831 = vadd.f32 %v3830, 1.0
        %v3832 = vmul.f32 %v3831, %v3816
        %vm3833 = vweird.f32 %v2126
        %v3834 = vadd.s32 %v3817, 3
        %v3835 = vand.u32 %v3834, 3
        %vm3836 = vcmp.lt.s32.totalorder %v3835, 2
        %vm3837 = vcmp.eq.s32.totalorder %v3835, 0
        %v3838 = vxor.u32 %v3832, 2147483648
        %v3839 = vsel %vm3837, %v3824, %v3838
        %vm3840 = vcmp.eq.s32.totalorder %v3835, 2
        %v3841 = vxor.u32 %v3824, 2147483648
        %v3842 = vsel %vm3840, %v3841, %v3832
        %v3843 = vsel %vm3836, %v3839, %v3842
        %v3844 = vsel %vm3833, nan, %v3843
        %v3845 = vand.u32 2147483647, %v2127
        %vm3846 = vcmp.le.f32.partialorder %v3845, 0.7853982
        %vm3847 = vcmp.lt.s32.totalorder %v2127, 0
        %v3848 = vand.u32 %v2127, 2139095040
        %v3849 = vshrl.u32 %v3848, 23
        %v3850 = vsub.s32 %v3849, 127
        %v3851 = vand.u32 2147483647, %v2127
        %v3852 = vand.u32 %v3851, 8388607
        %v3853 = vor.u32 %v3852, 8388608
        %v3854 = vsub.s32 0, %v3853
        %v3855 = vadd.s32 %v3850, 1
        %vm3856 = vcmp.gt.s32.totalorder %v3855, 0
        %v3857 = vsel %vm3856, %v3855, 0
        %v3858 = vshrl.u32 %v3857, 5
        %v3859 = vand.u32 %v3857, 31
        %v3860 = vsub.s32 32, %v3859
        %v3861 = vshrl.u32 683565275, %v3860
        %v3862 = vshll.u32 683565275, %v3859
        %v3863 = vshrl.u32 2475754826, %v3860
        %v3864 = vor.u32 %v3862, %v3863
        %v3865 = vshll.u32 2475754826, %v3859
        %v3866 = vshrl.u32 2131351028, %v3860
        %v3867 = vor.u32 %v3865, %v3866
        %v3868 = vshll.u32 2131351028, %v3859
        %v3869 = vshrl.u32 2102212464, %v3860
        %v3870 = vor.u32 %v3868, %v3869
        %v3871 = vshll.u32 2102212464, %v3859
        %v3872 = vshrl.u32 920167782, %v3860
        %v3873 = vor.u32 %v3871, %v3872
        %v3874 = vshll.u32 920167782, %v3859
        %v3875 = vshrl.u32 1326507024, %v3860
        %v3876 = vor.u32 %v3874, %v3875
        %vm3877 = vcmp.lt.s32.totalorder %v3858, 1
        %vm3878 = vcmp.lt.s32.totalorder %v3858, 2
        %vm3879 = vcmp.lt.s32.totalorder %v3858, 3
        %vm3880 = vcmp.lt.s32.totalorder %v3858, 4
        %v3881 = vsel %vm3877, %v3861, %v3864
        %v3882 = vsel %vm3880, %v3870, 2102212464
        %v3883 = vsel %vm3879, %v3867, %v3882
        %v3884 = vsel %vm3878, %v3881, %v3883
        %v3885 = vsel %vm3877, %v3864, %v3867
        %v3886 = vsel %vm3880, %v3873, 920167782
        %v3887 = vsel %vm3879, %v3870, %v3886
        %v3888 = vsel %vm3878, %v3885, %v3887
        %v3889 = vsel %vm3877, %v3867, %v3870
        %v3890 = vsel %vm3880, %v3876, 1326507024
        %v3891 = vsel %vm3879, %v3873, %v3890
        %v3892 = vsel %vm3878, %v3889, %v3891
        %v3893 = vshll.u32 %v3853, 8
        %v3894 = vand.u32 %v3893, 65535
        %v3895 = vshrl.u32 %v3893, 16
        %v3896 = vand.u32 %v3892, 65535
        %v3897 = vshrl.u32 %v3892, 16
        %v3898 = vmul.u32 %v3894, %v3896
        %v3899 = vmul.u32 %v3894, %v3897
        %v3900 = vmul.u32 %v3895, %v3896
        %v3901 = vmul.u32 %v3895, %v3897
        %v3902 = vshll.u32 %v3899, 16
        %v3903 = vshrl.u32 %v3899, 16
        %v3904 = vshll.u32 %v3900, 16
        %v3905 = vshrl.u32 %v3900, 16
        %vm3906 = vc.u32 %v3898, %v3902
        %v3907 = vsel %vm3906, 1, 0
        %v3908 = vadd.s32 %v3898, %v3902
        %v3909 = vadd.s32 %v3901, %v3907
        %vm3910 = vc.u32 %v3908, %v3904
        %v3911 = vsel %vm3910, 1, 0
        %v3912 = vadd.s32 %v3908, %v3904
        %v3913 = vadd.s32 %v3909, %v3911
        %v3914 = vadd.s32 %v3913, %v3903
        %v3915 = vadd.s32 %v3914, %v3905
        %v3916 = vand.u32 %v3893, 65535
        %v3917 = vshrl.u32 %v3893, 16
        %v3918 = vand.u32 %v3888, 65535
        %v3919 = vshrl.u32 %v3888, 16
        %v3920 = vmul.u32 %v3916, %v3918
        %v3921 = vmul.u32 %v3916, %v3919
        %v3922 = vmul.u32 %v3917, %v3918
        %v3923 = vmul.u32 %v3917, %v3919
        %v3924 = vshll.u32 %v3921, 16
        %v3925 = vshrl.u32 %v3921, 16
        %v3926 = vshll.u32 %v3922, 16
        %v3927 = vshrl.u32 %v3922, 16
        %vm3928 = vc.u32 %v3920, %v3924
        %v3929 = vsel %vm3928, 1, 0
        %v3930 = vadd.s32 %v3920, %v3924
        %v3931 = vadd.s32 %v3923, %v3929
        %vm3932 = vc.u32 %v3930, %v3926
        %v3933 = vsel %vm3932, 1, 0
        %v3934 = vadd.s32 %v3930, %v3926
        %v3935 = vadd.s32 %v3931, %v3933
        %v3936 = vadd.s32 %v3935, %v3925
        %v3937 = vadd.s32 %v3936, %v3927
        %v3938 = vmul.u32 %v3893, %v3884
        %v3939 = vadd.s32 %v3915, %v3934
        %vm3940 = vc.u32 %v3915, %v3934
        %v3941 = vadd.s32 %v3937, 1
        %v3942 = vsel %vm3940, %v3941, %v3937
        %v3943 = vadd.s32 %v3938, %v3942
        %v3944 = vadd.s32 %v3943, 536870912
        %v3945 = vshrl.u32 %v3944, 30
        %v3946 = vshll.u32 %v3945, 30
        %v3947 = vsub.s32 %v3943, %v3946
        %vm3948 = vcmp.lt.s32.totalorder %v3947, 0
        %v3949 = vsub.s32 0, %v3947
        %v3950 = vsel %vm3948, %v3949, %v3947
        %v3951 = vclz %v3950
        %v3952 = vsub.s32 %v3951, 2
        %vm3953 = vcmp.gt.s32.totalorder 0, %v3952
        %v3954 = vsel %vm3953, 0, %v3952
        %v3955 = vsub.s32 32, %v3954
        %v3956 = vshll.u32 %v3947, %v3954
        %v3957 = vshrl.u32 %v3939, %v3955
        %v3958 = vor.u32 %v3956, %v3957
        %v3959 = vsub.s32 4294967266, %v3954
        %v3960 = vadd.s32 %v3959, 127
        %v3961 = vshll.u32 %v3960, 23
        %v3962 = vor.u32 4788187, %v3961
        %v3963 = vand.u32 2147483647, %v3962
        %v3965 = vcvt.s32.f32 %v3958
        %v3966 = vmul.f32 %v3965, %v3963
        %v3967 = vxor.u32 %v3966, 2147483648
        %v3968 = vsel %vm3847, %v3967, %v3966
        %v3969 = vsub.s32 4, %v3945
        %v3970 = vsel %vm3847, %v3969, %v3945
        %v3971 = vsel %vm3846, %v2127, %v3968
        %v3972 = vsel %vm3846, 0, %v3970
        %v3973 = vmul.f32 %v3971, %v3971
        %v3974 = vmul.f32 %v3973, -0.001358992
        %v3975 = vadd.f32 %v3974, 0.041655596
        %v3976 = vmul.f32 %v3973, %v3975
        %v3977 = vadd.f32 %v3976, -0.4999988
        %v3978 = vmul.f32 %v3973, %v3977
        %v3979 = vadd.f32 1.0, %v3978
        %v3980 = vmul.f32 %v3971, %v3971
        %v3981 = vmul.f32 %v3980, -0.00019511016
        %v3982 = vadd.f32 %v3981, 0.008332121
        %v3983 = vmul.f32 %v3980, %v3982
        %v3984 = vadd.f32 %v3983, -0.16666654
        %v3985 = vmul.f32 %v3980, %v3984
        %v3986 = vadd.f32 %v3985, 1.0
        %v3987 = vmul.f32 %v3986, %v3971
        %vm3988 = vweird.f32 %v2127
        %v3989 = vadd.s32 %v3972, 3
        %v3990 = vand.u32 %v3989, 3
        %vm3991 = vcmp.lt.s32.totalorder %v3990, 2
        %vm3992 = vcmp.eq.s32.totalorder %v3990, 0
        %v3993 = vxor.u32 %v3987, 2147483648
        %v3994 = vsel %vm3992, %v3979, %v3993
        %vm3995 = vcmp.eq.s32.totalorder %v3990, 2
        %v3996 = vxor.u32 %v3979, 2147483648
        %v3997 = vsel %vm3995, %v3996, %v3987
        %v3998 = vsel %vm3991, %v3994, %v3997
        %v3999 = vsel %vm3988, nan, %v3998
        %v4000 = vand.u32 2147483647, %v2128
        %vm4001 = vcmp.le.f32.partialorder %v4000, 0.7853982
        %vm4002 = vcmp.lt.s32.totalorder %v2128, 0
        %v4003 = vand.u32 %v2128, 2139095040
        %v4004 = vshrl.u32 %v4003, 23
        %v4005 = vsub.s32 %v4004, 127
        %v4006 = vand.u32 2147483647, %v2128
        %v4007 = vand.u32 %v4006, 8388607
        %v4008 = vor.u32 %v4007, 8388608
        %v4009 = vsub.s32 0, %v4008
        %v4010 = vadd.s32 %v4005, 1
        %vm4011 = vcmp.gt.s32.totalorder %v4010, 0
        %v4012 = vsel %vm4011, %v4010, 0
        %v4013 = vshrl.u32 %v4012, 5
        %v4014 = vand.u32 %v4012, 31
        %v4015 = vsub.s32 32, %v4014
        %v4016 = vshrl.u32 683565275, %v4015
        %v4017 = vshll.u32 683565275, %v4014
        %v4018 = vshrl.u32 2475754826, %v4015
        %v4019 = vor.u32 %v4017, %v4018
        %v4020 = vshll.u32 2475754826, %v4014
        %v4021 = vshrl.u32 2131351028, %v4015
        %v4022 = vor.u32 %v4020, %v4021
        %v4023 = vshll.u32 2131351028, %v4014
        %v4024 = vshrl.u32 2102212464, %v4015
        %v4025 = vor.u32 %v4023, %v4024
        %v4026 = vshll.u32 2102212464, %v4014
        %v4027 = vshrl.u32 920167782, %v4015
        %v4028 = vor.u32 %v4026, %v4027
        %v4029 = vshll.u32 920167782, %v4014
        %v4030 = vshrl.u32 1326507024, %v4015
        %v4031 = vor.u32 %v4029, %v4030
        %vm4032 = vcmp.lt.s32.totalorder %v4013, 1
        %vm4033 = vcmp.lt.s32.totalorder %v4013, 2
        %vm4034 = vcmp.lt.s32.totalorder %v4013, 3
        %vm4035 = vcmp.lt.s32.totalorder %v4013, 4
        %v4036 = vsel %vm4032, %v4016, %v4019
        %v4037 = vsel %vm4035, %v4025, 2102212464
        %v4038 = vsel %vm4034, %v4022, %v4037
        %v4039 = vsel %vm4033, %v4036, %v4038
        %v4040 = vsel %vm4032, %v4019, %v4022
        %v4041 = vsel %vm4035, %v4028, 920167782
        %v4042 = vsel %vm4034, %v4025, %v4041
        %v4043 = vsel %vm4033, %v4040, %v4042
        %v4044 = vsel %vm4032, %v4022, %v4025
        %v4045 = vsel %vm4035, %v4031, 1326507024
        %v4046 = vsel %vm4034, %v4028, %v4045
        %v4047 = vsel %vm4033, %v4044, %v4046
        %v4048 = vshll.u32 %v4008, 8
        %v4049 = vand.u32 %v4048, 65535
        %v4050 = vshrl.u32 %v4048, 16
        %v4051 = vand.u32 %v4047, 65535
        %v4052 = vshrl.u32 %v4047, 16
        %v4053 = vmul.u32 %v4049, %v4051
        %v4054 = vmul.u32 %v4049, %v4052
        %v4055 = vmul.u32 %v4050, %v4051
        %v4056 = vmul.u32 %v4050, %v4052
        %v4057 = vshll.u32 %v4054, 16
        %v4058 = vshrl.u32 %v4054, 16
        %v4059 = vshll.u32 %v4055, 16
        %v4060 = vshrl.u32 %v4055, 16
        %vm4061 = vc.u32 %v4053, %v4057
        %v4062 = vsel %vm4061, 1, 0
        %v4063 = vadd.s32 %v4053, %v4057
        %v4064 = vadd.s32 %v4056, %v4062
        %vm4065 = vc.u32 %v4063, %v4059
        %v4066 = vsel %vm4065, 1, 0
        %v4067 = vadd.s32 %v4063, %v4059
        %v4068 = vadd.s32 %v4064, %v4066
        %v4069 = vadd.s32 %v4068, %v4058
        %v4070 = vadd.s32 %v4069, %v4060
        %v4071 = vand.u32 %v4048, 65535
        %v4072 = vshrl.u32 %v4048, 16
        %v4073 = vand.u32 %v4043, 65535
        %v4074 = vshrl.u32 %v4043, 16
        %v4075 = vmul.u32 %v4071, %v4073
        %v4076 = vmul.u32 %v4071, %v4074
        %v4077 = vmul.u32 %v4072, %v4073
        %v4078 = vmul.u32 %v4072, %v4074
        %v4079 = vshll.u32 %v4076, 16
        %v4080 = vshrl.u32 %v4076, 16
        %v4081 = vshll.u32 %v4077, 16
        %v4082 = vshrl.u32 %v4077, 16
        %vm4083 = vc.u32 %v4075, %v4079
        %v4084 = vsel %vm4083, 1, 0
        %v4085 = vadd.s32 %v4075, %v4079
        %v4086 = vadd.s32 %v4078, %v4084
        %vm4087 = vc.u32 %v4085, %v4081
        %v4088 = vsel %vm4087, 1, 0
        %v4089 = vadd.s32 %v4085, %v4081
        %v4090 = vadd.s32 %v4086, %v4088
        %v4091 = vadd.s32 %v4090, %v4080
        %v4092 = vadd.s32 %v4091, %v4082
        %v4093 = vmul.u32 %v4048, %v4039
        %v4094 = vadd.s32 %v4070, %v4089
        %vm4095 = vc.u32 %v4070, %v4089
        %v4096 = vadd.s32 %v4092, 1
        %v4097 = vsel %vm4095, %v4096, %v4092
        %v4098 = vadd.s32 %v4093, %v4097
        %v4099 = vadd.s32 %v4098, 536870912
        %v4100 = vshrl.u32 %v4099, 30
        %v4101 = vshll.u32 %v4100, 30
        %v4102 = vsub.s32 %v4098, %v4101
        %vm4103 = vcmp.lt.s32.totalorder %v4102, 0
        %v4104 = vsub.s32 0, %v4102
        %v4105 = vsel %vm4103, %v4104, %v4102
        %v4106 = vclz %v4105
        %v4107 = vsub.s32 %v4106, 2
        %vm4108 = vcmp.gt.s32.totalorder 0, %v4107
        %v4109 = vsel %vm4108, 0, %v4107
        %v4110 = vsub.s32 32, %v4109
        %v4111 = vshll.u32 %v4102, %v4109
        %v4112 = vshrl.u32 %v4094, %v4110
        %v4113 = vor.u32 %v4111, %v4112
        %v4114 = vsub.s32 4294967266, %v4109
        %v4115 = vadd.s32 %v4114, 127
        %v4116 = vshll.u32 %v4115, 23
        %v4117 = vor.u32 4788187, %v4116
        %v4118 = vand.u32 2147483647, %v4117
        %v4120 = vcvt.s32.f32 %v4113
        %v4121 = vmul.f32 %v4120, %v4118
        %v4122 = vxor.u32 %v4121, 2147483648
        %v4123 = vsel %vm4002, %v4122, %v4121
        %v4124 = vsub.s32 4, %v4100
        %v4125 = vsel %vm4002, %v4124, %v4100
        %v4126 = vsel %vm4001, %v2128, %v4123
        %v4127 = vsel %vm4001, 0, %v4125
        %v4128 = vmul.f32 %v4126, %v4126
        %v4129 = vmul.f32 %v4128, -0.001358992
        %v4130 = vadd.f32 %v4129, 0.041655596
        %v4131 = vmul.f32 %v4128, %v4130
        %v4132 = vadd.f32 %v4131, -0.4999988
        %v4133 = vmul.f32 %v4128, %v4132
        %v4134 = vadd.f32 1.0, %v4133
        %v4135 = vmul.f32 %v4126, %v4126
        %v4136 = vmul.f32 %v4135, -0.00019511016
        %v4137 = vadd.f32 %v4136, 0.008332121
        %v4138 = vmul.f32 %v4135, %v4137
        %v4139 = vadd.f32 %v4138, -0.16666654
        %v4140 = vmul.f32 %v4135, %v4139
        %v4141 = vadd.f32 %v4140, 1.0
        %v4142 = vmul.f32 %v4141, %v4126
        %vm4143 = vweird.f32 %v2128
        %v4144 = vadd.s32 %v4127, 3
        %v4145 = vand.u32 %v4144, 3
        %vm4146 = vcmp.lt.s32.totalorder %v4145, 2
        %vm4147 = vcmp.eq.s32.totalorder %v4145, 0
        %v4148 = vxor.u32 %v4142, 2147483648
        %v4149 = vsel %vm4147, %v4134, %v4148
        %vm4150 = vcmp.eq.s32.totalorder %v4145, 2
        %v4151 = vxor.u32 %v4134, 2147483648
        %v4152 = vsel %vm4150, %v4151, %v4142
        %v4153 = vsel %vm4146, %v4149, %v4152
        %v4154 = vsel %vm4143, nan, %v4153
        %v4155 = vand.u32 2147483647, %v2129
        %vm4156 = vcmp.le.f32.partialorder %v4155, 0.7853982
        %vm4157 = vcmp.lt.s32.totalorder %v2129, 0
        %v4158 = vand.u32 %v2129, 2139095040
        %v4159 = vshrl.u32 %v4158, 23
        %v4160 = vsub.s32 %v4159, 127
        %v4161 = vand.u32 2147483647, %v2129
        %v4162 = vand.u32 %v4161, 8388607
        %v4163 = vor.u32 %v4162, 8388608
        %v4164 = vsub.s32 0, %v4163
        %v4165 = vadd.s32 %v4160, 1
        %vm4166 = vcmp.gt.s32.totalorder %v4165, 0
        %v4167 = vsel %vm4166, %v4165, 0
        %v4168 = vshrl.u32 %v4167, 5
        %v4169 = vand.u32 %v4167, 31
        %v4170 = vsub.s32 32, %v4169
        %v4171 = vshrl.u32 683565275, %v4170
        %v4172 = vshll.u32 683565275, %v4169
        %v4173 = vshrl.u32 2475754826, %v4170
        %v4174 = vor.u32 %v4172, %v4173
        %v4175 = vshll.u32 2475754826, %v4169
        %v4176 = vshrl.u32 2131351028, %v4170
        %v4177 = vor.u32 %v4175, %v4176
        %v4178 = vshll.u32 2131351028, %v4169
        %v4179 = vshrl.u32 2102212464, %v4170
        %v4180 = vor.u32 %v4178, %v4179
        %v4181 = vshll.u32 2102212464, %v4169
        %v4182 = vshrl.u32 920167782, %v4170
        %v4183 = vor.u32 %v4181, %v4182
        %v4184 = vshll.u32 920167782, %v4169
        %v4185 = vshrl.u32 1326507024, %v4170
        %v4186 = vor.u32 %v4184, %v4185
        %vm4187 = vcmp.lt.s32.totalorder %v4168, 1
        %vm4188 = vcmp.lt.s32.totalorder %v4168, 2
        %vm4189 = vcmp.lt.s32.totalorder %v4168, 3
        %vm4190 = vcmp.lt.s32.totalorder %v4168, 4
        %v4191 = vsel %vm4187, %v4171, %v4174
        %v4192 = vsel %vm4190, %v4180, 2102212464
        %v4193 = vsel %vm4189, %v4177, %v4192
        %v4194 = vsel %vm4188, %v4191, %v4193
        %v4195 = vsel %vm4187, %v4174, %v4177
        %v4196 = vsel %vm4190, %v4183, 920167782
        %v4197 = vsel %vm4189, %v4180, %v4196
        %v4198 = vsel %vm4188, %v4195, %v4197
        %v4199 = vsel %vm4187, %v4177, %v4180
        %v4200 = vsel %vm4190, %v4186, 1326507024
        %v4201 = vsel %vm4189, %v4183, %v4200
        %v4202 = vsel %vm4188, %v4199, %v4201
        %v4203 = vshll.u32 %v4163, 8
        %v4204 = vand.u32 %v4203, 65535
        %v4205 = vshrl.u32 %v4203, 16
        %v4206 = vand.u32 %v4202, 65535
        %v4207 = vshrl.u32 %v4202, 16
        %v4208 = vmul.u32 %v4204, %v4206
        %v4209 = vmul.u32 %v4204, %v4207
        %v4210 = vmul.u32 %v4205, %v4206
        %v4211 = vmul.u32 %v4205, %v4207
        %v4212 = vshll.u32 %v4209, 16
        %v4213 = vshrl.u32 %v4209, 16
        %v4214 = vshll.u32 %v4210, 16
        %v4215 = vshrl.u32 %v4210, 16
        %vm4216 = vc.u32 %v4208, %v4212
        %v4217 = vsel %vm4216, 1, 0
        %v4218 = vadd.s32 %v4208, %v4212
        %v4219 = vadd.s32 %v4211, %v4217
        %vm4220 = vc.u32 %v4218, %v4214
        %v4221 = vsel %vm4220, 1, 0
        %v4222 = vadd.s32 %v4218, %v4214
        %v4223 = vadd.s32 %v4219, %v4221
        %v4224 = vadd.s32 %v4223, %v4213
        %v4225 = vadd.s32 %v4224, %v4215
        %v4226 = vand.u32 %v4203, 65535
        %v4227 = vshrl.u32 %v4203, 16
        %v4228 = vand.u32 %v4198, 65535
        %v4229 = vshrl.u32 %v4198, 16
        %v4230 = vmul.u32 %v4226, %v4228
        %v4231 = vmul.u32 %v4226, %v4229
        %v4232 = vmul.u32 %v4227, %v4228
        %v4233 = vmul.u32 %v4227, %v4229
        %v4234 = vshll.u32 %v4231, 16
        %v4235 = vshrl.u32 %v4231, 16
        %v4236 = vshll.u32 %v4232, 16
        %v4237 = vshrl.u32 %v4232, 16
        %vm4238 = vc.u32 %v4230, %v4234
        %v4239 = vsel %vm4238, 1, 0
        %v4240 = vadd.s32 %v4230, %v4234
        %v4241 = vadd.s32 %v4233, %v4239
        %vm4242 = vc.u32 %v4240, %v4236
        %v4243 = vsel %vm4242, 1, 0
        %v4244 = vadd.s32 %v4240, %v4236
        %v4245 = vadd.s32 %v4241, %v4243
        %v4246 = vadd.s32 %v4245, %v4235
        %v4247 = vadd.s32 %v4246, %v4237
        %v4248 = vmul.u32 %v4203, %v4194
        %v4249 = vadd.s32 %v4225, %v4244
        %vm4250 = vc.u32 %v4225, %v4244
        %v4251 = vadd.s32 %v4247, 1
        %v4252 = vsel %vm4250, %v4251, %v4247
        %v4253 = vadd.s32 %v4248, %v4252
        %v4254 = vadd.s32 %v4253, 536870912
        %v4255 = vshrl.u32 %v4254, 30
        %v4256 = vshll.u32 %v4255, 30
        %v4257 = vsub.s32 %v4253, %v4256
        %vm4258 = vcmp.lt.s32.totalorder %v4257, 0
        %v4259 = vsub.s32 0, %v4257
        %v4260 = vsel %vm4258, %v4259, %v4257
        %v4261 = vclz %v4260
        %v4262 = vsub.s32 %v4261, 2
        %vm4263 = vcmp.gt.s32.totalorder 0, %v4262
        %v4264 = vsel %vm4263, 0, %v4262
        %v4265 = vsub.s32 32, %v4264
        %v4266 = vshll.u32 %v4257, %v4264
        %v4267 = vshrl.u32 %v4249, %v4265
        %v4268 = vor.u32 %v4266, %v4267
        %v4269 = vsub.s32 4294967266, %v4264
        %v4270 = vadd.s32 %v4269, 127
        %v4271 = vshll.u32 %v4270, 23
        %v4272 = vor.u32 4788187, %v4271
        %v4273 = vand.u32 2147483647, %v4272
        %v4275 = vcvt.s32.f32 %v4268
        %v4276 = vmul.f32 %v4275, %v4273
        %v4277 = vxor.u32 %v4276, 2147483648
        %v4278 = vsel %vm4157, %v4277, %v4276
        %v4279 = vsub.s32 4, %v4255
        %v4280 = vsel %vm4157, %v4279, %v4255
        %v4281 = vsel %vm4156, %v2129, %v4278
        %v4282 = vsel %vm4156, 0, %v4280
        %v4283 = vmul.f32 %v4281, %v4281
        %v4284 = vmul.f32 %v4283, -0.001358992
        %v4285 = vadd.f32 %v4284, 0.041655596
        %v4286 = vmul.f32 %v4283, %v4285
        %v4287 = vadd.f32 %v4286, -0.4999988
        %v4288 = vmul.f32 %v4283, %v4287
        %v4289 = vadd.f32 1.0, %v4288
        %v4290 = vmul.f32 %v4281, %v4281
        %v4291 = vmul.f32 %v4290, -0.00019511016
        %v4292 = vadd.f32 %v4291, 0.008332121
        %v4293 = vmul.f32 %v4290, %v4292
        %v4294 = vadd.f32 %v4293, -0.16666654
        %v4295 = vmul.f32 %v4290, %v4294
        %v4296 = vadd.f32 %v4295, 1.0
        %v4297 = vmul.f32 %v4296, %v4281
        %vm4298 = vweird.f32 %v2129
        %v4299 = vadd.s32 %v4282, 3
        %v4300 = vand.u32 %v4299, 3
        %vm4301 = vcmp.lt.s32.totalorder %v4300, 2
        %vm4302 = vcmp.eq.s32.totalorder %v4300, 0
        %v4303 = vxor.u32 %v4297, 2147483648
        %v4304 = vsel %vm4302, %v4289, %v4303
        %vm4305 = vcmp.eq.s32.totalorder %v4300, 2
        %v4306 = vxor.u32 %v4289, 2147483648
        %v4307 = vsel %vm4305, %v4306, %v4297
        %v4308 = vsel %vm4301, %v4304, %v4307
        %v4309 = vsel %vm4298, nan, %v4308
        %v4310 = vand.u32 2147483647, %v2130
        %vm4311 = vcmp.le.f32.partialorder %v4310, 0.7853982
        %vm4312 = vcmp.lt.s32.totalorder %v2130, 0
        %v4313 = vand.u32 %v2130, 2139095040
        %v4314 = vshrl.u32 %v4313, 23
        %v4315 = vsub.s32 %v4314, 127
        %v4316 = vand.u32 2147483647, %v2130
        %v4317 = vand.u32 %v4316, 8388607
        %v4318 = vor.u32 %v4317, 8388608
        %v4319 = vsub.s32 0, %v4318
        %v4320 = vadd.s32 %v4315, 1
        %vm4321 = vcmp.gt.s32.totalorder %v4320, 0
        %v4322 = vsel %vm4321, %v4320, 0
        %v4323 = vshrl.u32 %v4322, 5
        %v4324 = vand.u32 %v4322, 31
        %v4325 = vsub.s32 32, %v4324
        %v4326 = vshrl.u32 683565275, %v4325
        %v4327 = vshll.u32 683565275, %v4324
        %v4328 = vshrl.u32 2475754826, %v4325
        %v4329 = vor.u32 %v4327, %v4328
        %v4330 = vshll.u32 2475754826, %v4324
        %v4331 = vshrl.u32 2131351028, %v4325
        %v4332 = vor.u32 %v4330, %v4331
        %v4333 = vshll.u32 2131351028, %v4324
        %v4334 = vshrl.u32 2102212464, %v4325
        %v4335 = vor.u32 %v4333, %v4334
        %v4336 = vshll.u32 2102212464, %v4324
        %v4337 = vshrl.u32 920167782, %v4325
        %v4338 = vor.u32 %v4336, %v4337
        %v4339 = vshll.u32 920167782, %v4324
        %v4340 = vshrl.u32 1326507024, %v4325
        %v4341 = vor.u32 %v4339, %v4340
        %vm4342 = vcmp.lt.s32.totalorder %v4323, 1
        %vm4343 = vcmp.lt.s32.totalorder %v4323, 2
        %vm4344 = vcmp.lt.s32.totalorder %v4323, 3
        %vm4345 = vcmp.lt.s32.totalorder %v4323, 4
        %v4346 = vsel %vm4342, %v4326, %v4329
        %v4347 = vsel %vm4345, %v4335, 2102212464
        %v4348 = vsel %vm4344, %v4332, %v4347
        %v4349 = vsel %vm4343, %v4346, %v4348
        %v4350 = vsel %vm4342, %v4329, %v4332
        %v4351 = vsel %vm4345, %v4338, 920167782
        %v4352 = vsel %vm4344, %v4335, %v4351
        %v4353 = vsel %vm4343, %v4350, %v4352
        %v4354 = vsel %vm4342, %v4332, %v4335
        %v4355 = vsel %vm4345, %v4341, 1326507024
        %v4356 = vsel %vm4344, %v4338, %v4355
        %v4357 = vsel %vm4343, %v4354, %v4356
        %v4358 = vshll.u32 %v4318, 8
        %v4359 = vand.u32 %v4358, 65535
        %v4360 = vshrl.u32 %v4358, 16
        %v4361 = vand.u32 %v4357, 65535
        %v4362 = vshrl.u32 %v4357, 16
        %v4363 = vmul.u32 %v4359, %v4361
        %v4364 = vmul.u32 %v4359, %v4362
        %v4365 = vmul.u32 %v4360, %v4361
        %v4366 = vmul.u32 %v4360, %v4362
        %v4367 = vshll.u32 %v4364, 16
        %v4368 = vshrl.u32 %v4364, 16
        %v4369 = vshll.u32 %v4365, 16
        %v4370 = vshrl.u32 %v4365, 16
        %vm4371 = vc.u32 %v4363, %v4367
        %v4372 = vsel %vm4371, 1, 0
        %v4373 = vadd.s32 %v4363, %v4367
        %v4374 = vadd.s32 %v4366, %v4372
        %vm4375 = vc.u32 %v4373, %v4369
        %v4376 = vsel %vm4375, 1, 0
        %v4377 = vadd.s32 %v4373, %v4369
        %v4378 = vadd.s32 %v4374, %v4376
        %v4379 = vadd.s32 %v4378, %v4368
        %v4380 = vadd.s32 %v4379, %v4370
        %v4381 = vand.u32 %v4358, 65535
        %v4382 = vshrl.u32 %v4358, 16
        %v4383 = vand.u32 %v4353, 65535
        %v4384 = vshrl.u32 %v4353, 16
        %v4385 = vmul.u32 %v4381, %v4383
        %v4386 = vmul.u32 %v4381, %v4384
        %v4387 = vmul.u32 %v4382, %v4383
        %v4388 = vmul.u32 %v4382, %v4384
        %v4389 = vshll.u32 %v4386, 16
        %v4390 = vshrl.u32 %v4386, 16
        %v4391 = vshll.u32 %v4387, 16
        %v4392 = vshrl.u32 %v4387, 16
        %vm4393 = vc.u32 %v4385, %v4389
        %v4394 = vsel %vm4393, 1, 0
        %v4395 = vadd.s32 %v4385, %v4389
        %v4396 = vadd.s32 %v4388, %v4394
        %vm4397 = vc.u32 %v4395, %v4391
        %v4398 = vsel %vm4397, 1, 0
        %v4399 = vadd.s32 %v4395, %v4391
        %v4400 = vadd.s32 %v4396, %v4398
        %v4401 = vadd.s32 %v4400, %v4390
        %v4402 = vadd.s32 %v4401, %v4392
        %v4403 = vmul.u32 %v4358, %v4349
        %v4404 = vadd.s32 %v4380, %v4399
        %vm4405 = vc.u32 %v4380, %v4399
        %v4406 = vadd.s32 %v4402, 1
        %v4407 = vsel %vm4405, %v4406, %v4402
        %v4408 = vadd.s32 %v4403, %v4407
        %v4409 = vadd.s32 %v4408, 536870912
        %v4410 = vshrl.u32 %v4409, 30
        %v4411 = vshll.u32 %v4410, 30
        %v4412 = vsub.s32 %v4408, %v4411
        %vm4413 = vcmp.lt.s32.totalorder %v4412, 0
        %v4414 = vsub.s32 0, %v4412
        %v4415 = vsel %vm4413, %v4414, %v4412
        %v4416 = vclz %v4415
        %v4417 = vsub.s32 %v4416, 2
        %vm4418 = vcmp.gt.s32.totalorder 0, %v4417
        %v4419 = vsel %vm4418, 0, %v4417
        %v4420 = vsub.s32 32, %v4419
        %v4421 = vshll.u32 %v4412, %v4419
        %v4422 = vshrl.u32 %v4404, %v4420
        %v4423 = vor.u32 %v4421, %v4422
        %v4424 = vsub.s32 4294967266, %v4419
        %v4425 = vadd.s32 %v4424, 127
        %v4426 = vshll.u32 %v4425, 23
        %v4427 = vor.u32 4788187, %v4426
        %v4428 = vand.u32 2147483647, %v4427
        %v4430 = vcvt.s32.f32 %v4423
        %v4431 = vmul.f32 %v4430, %v4428
        %v4432 = vxor.u32 %v4431, 2147483648
        %v4433 = vsel %vm4312, %v4432, %v4431
        %v4434 = vsub.s32 4, %v4410
        %v4435 = vsel %vm4312, %v4434, %v4410
        %v4436 = vsel %vm4311, %v2130, %v4433
        %v4437 = vsel %vm4311, 0, %v4435
        %v4438 = vmul.f32 %v4436, %v4436
        %v4439 = vmul.f32 %v4438, -0.001358992
        %v4440 = vadd.f32 %v4439, 0.041655596
        %v4441 = vmul.f32 %v4438, %v4440
        %v4442 = vadd.f32 %v4441, -0.4999988
        %v4443 = vmul.f32 %v4438, %v4442
        %v4444 = vadd.f32 1.0, %v4443
        %v4445 = vmul.f32 %v4436, %v4436
        %v4446 = vmul.f32 %v4445, -0.00019511016
        %v4447 = vadd.f32 %v4446, 0.008332121
        %v4448 = vmul.f32 %v4445, %v4447
        %v4449 = vadd.f32 %v4448, -0.16666654
        %v4450 = vmul.f32 %v4445, %v4449
        %v4451 = vadd.f32 %v4450, 1.0
        %v4452 = vmul.f32 %v4451, %v4436
        %vm4453 = vweird.f32 %v2130
        %v4454 = vadd.s32 %v4437, 3
        %v4455 = vand.u32 %v4454, 3
        %vm4456 = vcmp.lt.s32.totalorder %v4455, 2
        %vm4457 = vcmp.eq.s32.totalorder %v4455, 0
        %v4458 = vxor.u32 %v4452, 2147483648
        %v4459 = vsel %vm4457, %v4444, %v4458
        %vm4460 = vcmp.eq.s32.totalorder %v4455, 2
        %v4461 = vxor.u32 %v4444, 2147483648
        %v4462 = vsel %vm4460, %v4461, %v4452
        %v4463 = vsel %vm4456, %v4459, %v4462
        %v4464 = vsel %vm4453, nan, %v4463
        %v4465 = vand.u32 2147483647, %v2131
        %vm4466 = vcmp.le.f32.partialorder %v4465, 0.7853982
        %vm4467 = vcmp.lt.s32.totalorder %v2131, 0
        %v4468 = vand.u32 %v2131, 2139095040
        %v4469 = vshrl.u32 %v4468, 23
        %v4470 = vsub.s32 %v4469, 127
        %v4471 = vand.u32 2147483647, %v2131
        %v4472 = vand.u32 %v4471, 8388607
        %v4473 = vor.u32 %v4472, 8388608
        %v4474 = vsub.s32 0, %v4473
        %v4475 = vadd.s32 %v4470, 1
        %vm4476 = vcmp.gt.s32.totalorder %v4475, 0
        %v4477 = vsel %vm4476, %v4475, 0
        %v4478 = vshrl.u32 %v4477, 5
        %v4479 = vand.u32 %v4477, 31
        %v4480 = vsub.s32 32, %v4479
        %v4481 = vshrl.u32 683565275, %v4480
        %v4482 = vshll.u32 683565275, %v4479
        %v4483 = vshrl.u32 2475754826, %v4480
        %v4484 = vor.u32 %v4482, %v4483
        %v4485 = vshll.u32 2475754826, %v4479
        %v4486 = vshrl.u32 2131351028, %v4480
        %v4487 = vor.u32 %v4485, %v4486
        %v4488 = vshll.u32 2131351028, %v4479
        %v4489 = vshrl.u32 2102212464, %v4480
        %v4490 = vor.u32 %v4488, %v4489
        %v4491 = vshll.u32 2102212464, %v4479
        %v4492 = vshrl.u32 920167782, %v4480
        %v4493 = vor.u32 %v4491, %v4492
        %v4494 = vshll.u32 920167782, %v4479
        %v4495 = vshrl.u32 1326507024, %v4480
        %v4496 = vor.u32 %v4494, %v4495
        %vm4497 = vcmp.lt.s32.totalorder %v4478, 1
        %vm4498 = vcmp.lt.s32.totalorder %v4478, 2
        %vm4499 = vcmp.lt.s32.totalorder %v4478, 3
        %vm4500 = vcmp.lt.s32.totalorder %v4478, 4
        %v4501 = vsel %vm4497, %v4481, %v4484
        %v4502 = vsel %vm4500, %v4490, 2102212464
        %v4503 = vsel %vm4499, %v4487, %v4502
        %v4504 = vsel %vm4498, %v4501, %v4503
        %v4505 = vsel %vm4497, %v4484, %v4487
        %v4506 = vsel %vm4500, %v4493, 920167782
        %v4507 = vsel %vm4499, %v4490, %v4506
        %v4508 = vsel %vm4498, %v4505, %v4507
        %v4509 = vsel %vm4497, %v4487, %v4490
        %v4510 = vsel %vm4500, %v4496, 1326507024
        %v4511 = vsel %vm4499, %v4493, %v4510
        %v4512 = vsel %vm4498, %v4509, %v4511
        %v4513 = vshll.u32 %v4473, 8
        %v4514 = vand.u32 %v4513, 65535
        %v4515 = vshrl.u32 %v4513, 16
        %v4516 = vand.u32 %v4512, 65535
        %v4517 = vshrl.u32 %v4512, 16
        %v4518 = vmul.u32 %v4514, %v4516
        %v4519 = vmul.u32 %v4514, %v4517
        %v4520 = vmul.u32 %v4515, %v4516
        %v4521 = vmul.u32 %v4515, %v4517
        %v4522 = vshll.u32 %v4519, 16
        %v4523 = vshrl.u32 %v4519, 16
        %v4524 = vshll.u32 %v4520, 16
        %v4525 = vshrl.u32 %v4520, 16
        %vm4526 = vc.u32 %v4518, %v4522
        %v4527 = vsel %vm4526, 1, 0
        %v4528 = vadd.s32 %v4518, %v4522
        %v4529 = vadd.s32 %v4521, %v4527
        %vm4530 = vc.u32 %v4528, %v4524
        %v4531 = vsel %vm4530, 1, 0
        %v4532 = vadd.s32 %v4528, %v4524
        %v4533 = vadd.s32 %v4529, %v4531
        %v4534 = vadd.s32 %v4533, %v4523
        %v4535 = vadd.s32 %v4534, %v4525
        %v4536 = vand.u32 %v4513, 65535
        %v4537 = vshrl.u32 %v4513, 16
        %v4538 = vand.u32 %v4508, 65535
        %v4539 = vshrl.u32 %v4508, 16
        %v4540 = vmul.u32 %v4536, %v4538
        %v4541 = vmul.u32 %v4536, %v4539
        %v4542 = vmul.u32 %v4537, %v4538
        %v4543 = vmul.u32 %v4537, %v4539
        %v4544 = vshll.u32 %v4541, 16
        %v4545 = vshrl.u32 %v4541, 16
        %v4546 = vshll.u32 %v4542, 16
        %v4547 = vshrl.u32 %v4542, 16
        %vm4548 = vc.u32 %v4540, %v4544
        %v4549 = vsel %vm4548, 1, 0
        %v4550 = vadd.s32 %v4540, %v4544
        %v4551 = vadd.s32 %v4543, %v4549
        %vm4552 = vc.u32 %v4550, %v4546
        %v4553 = vsel %vm4552, 1, 0
        %v4554 = vadd.s32 %v4550, %v4546
        %v4555 = vadd.s32 %v4551, %v4553
        %v4556 = vadd.s32 %v4555, %v4545
        %v4557 = vadd.s32 %v4556, %v4547
        %v4558 = vmul.u32 %v4513, %v4504
        %v4559 = vadd.s32 %v4535, %v4554
        %vm4560 = vc.u32 %v4535, %v4554
        %v4561 = vadd.s32 %v4557, 1
        %v4562 = vsel %vm4560, %v4561, %v4557
        %v4563 = vadd.s32 %v4558, %v4562
        %v4564 = vadd.s32 %v4563, 536870912
        %v4565 = vshrl.u32 %v4564, 30
        %v4566 = vshll.u32 %v4565, 30
        %v4567 = vsub.s32 %v4563, %v4566
        %vm4568 = vcmp.lt.s32.totalorder %v4567, 0
        %v4569 = vsub.s32 0, %v4567
        %v4570 = vsel %vm4568, %v4569, %v4567
        %v4571 = vclz %v4570
        %v4572 = vsub.s32 %v4571, 2
        %vm4573 = vcmp.gt.s32.totalorder 0, %v4572
        %v4574 = vsel %vm4573, 0, %v4572
        %v4575 = vsub.s32 32, %v4574
        %v4576 = vshll.u32 %v4567, %v4574
        %v4577 = vshrl.u32 %v4559, %v4575
        %v4578 = vor.u32 %v4576, %v4577
        %v4579 = vsub.s32 4294967266, %v4574
        %v4580 = vadd.s32 %v4579, 127
        %v4581 = vshll.u32 %v4580, 23
        %v4582 = vor.u32 4788187, %v4581
        %v4583 = vand.u32 2147483647, %v4582
        %v4585 = vcvt.s32.f32 %v4578
        %v4586 = vmul.f32 %v4585, %v4583
        %v4587 = vxor.u32 %v4586, 2147483648
        %v4588 = vsel %vm4467, %v4587, %v4586
        %v4589 = vsub.s32 4, %v4565
        %v4590 = vsel %vm4467, %v4589, %v4565
        %v4591 = vsel %vm4466, %v2131, %v4588
        %v4592 = vsel %vm4466, 0, %v4590
        %v4593 = vmul.f32 %v4591, %v4591
        %v4594 = vmul.f32 %v4593, -0.001358992
        %v4595 = vadd.f32 %v4594, 0.041655596
        %v4596 = vmul.f32 %v4593, %v4595
        %v4597 = vadd.f32 %v4596, -0.4999988
        %v4598 = vmul.f32 %v4593, %v4597
        %v4599 = vadd.f32 1.0, %v4598
        %v4600 = vmul.f32 %v4591, %v4591
        %v4601 = vmul.f32 %v4600, -0.00019511016
        %v4602 = vadd.f32 %v4601, 0.008332121
        %v4603 = vmul.f32 %v4600, %v4602
        %v4604 = vadd.f32 %v4603, -0.16666654
        %v4605 = vmul.f32 %v4600, %v4604
        %v4606 = vadd.f32 %v4605, 1.0
        %v4607 = vmul.f32 %v4606, %v4591
        %vm4608 = vweird.f32 %v2131
        %v4609 = vadd.s32 %v4592, 3
        %v4610 = vand.u32 %v4609, 3
        %vm4611 = vcmp.lt.s32.totalorder %v4610, 2
        %vm4612 = vcmp.eq.s32.totalorder %v4610, 0
        %v4613 = vxor.u32 %v4607, 2147483648
        %v4614 = vsel %vm4612, %v4599, %v4613
        %vm4615 = vcmp.eq.s32.totalorder %v4610, 2
        %v4616 = vxor.u32 %v4599, 2147483648
        %v4617 = vsel %vm4615, %v4616, %v4607
        %v4618 = vsel %vm4611, %v4614, %v4617
        %v4619 = vsel %vm4608, nan, %v4618
        %v4620 = vmul.f32 %v2116, %v3534
        %v4621 = vmul.f32 %v2117, %v3689
        %v4622 = vmul.f32 %v2118, %v3844
        %v4623 = vmul.f32 %v2119, %v3999
        %v4624 = vmul.f32 %v2120, %v4154
        %v4625 = vmul.f32 %v2121, %v4309
        %v4626 = vmul.f32 %v2122, %v4464
        %v4627 = vmul.f32 %v2123, %v4619
        %4628 = vst [vmem:[%s474] sm:$0xff] %v4620
        %4629 = vst [vmem:[%s474 + $0x8] sm:$0xff] %v4621
        %4630 = vst [vmem:[%s474 + $0x10] sm:$0xff] %v4622
        %4631 = vst [vmem:[%s474 + $0x18] sm:$0xff] %v4623
        %4632 = vst [vmem:[%s474 + $0x20] sm:$0xff] %v4624
        %4633 = vst [vmem:[%s474 + $0x28] sm:$0xff] %v4625
        %4634 = vst [vmem:[%s474 + $0x30] sm:$0xff] %v4626
        %4635 = vst [vmem:[%s474 + $0x38] sm:$0xff] %v4627
      $region72: #{fsda_forward.1} parent=51 // pred_fallthru
        _
      %s4636 = smul.u32 %s27, %s28
      %s4637 = smul.u32 2, %s4636
      %p4638 = scmp.lt.s32.totalorder %s26, 1
      %s4639 = scalar_select %p4638, %s26, 1
      %p4640 = scmp.lt.s32.totalorder %s4637, 1
      %s4641 = scalar_select %p4640, %s4637, 1
      %s4642 = smul.addr %s4639, 8
      %s4643 = sadd.s32 %s4641, %s4642
      %s4644 = smul.addr %s4643, 8
      %s4645 = scalar_lea.vmem %s8, %s4644
      %s4646 = smul.u32 %s27, %s28
      %s4647 = smul.u32 2, %s4646
      %p4648 = scmp.lt.s32.totalorder %s26, 1
      %s4649 = scalar_select %p4648, %s26, 1
      %p4650 = scmp.lt.s32.totalorder %s4647, 1
      %s4651 = scalar_select %p4650, %s4647, 1
      %s4652 = smul.addr %s4649, 8
      %s4653 = sadd.s32 %s4651, %s4652
      %s4654 = smul.addr %s4653, 8
      %s4655 = scalar_lea.vmem %s9, %s4654
      // Predicated region
      $region77: #{fsda_forward.1} parent=51 // pred_check
        %p4656 = pneg %p252
      $region78: #{fsda_forward.1} parent=51 // pred_check_branch
        %4658 = sbr.rel (%p4656) target = $region80
      $region79: #{fsda_forward.1} parent=51 // pred_region
        %s4659 = smul.u32 %s27, %s28
        %s4660 = smul.u32 2, %s4659
      $region80: #{fsda_forward.1} parent=51 // pred_fallthru
        _
      // Predicated region
      $region81: #{fsda_forward.1} parent=51 // pred_check
        %p4661 = pneg %p282
      $region82: #{fsda_forward.1} parent=51 // pred_check_branch
        %4663 = sbr.rel (%p4661) target = $region84
      $region83: #{fsda_forward.1} parent=51 // pred_region
        %s4664 = smul.u32 %s27, %s28
        %s4665 = smul.u32 2, %s4664
      $region84: #{fsda_forward.1} parent=51 // pred_fallthru
        _
    $region52: #{fsda_forward.1} parent=5 // pred_fallthru
      _
    %p4666 = scmp.le.s32.totalorder 2, %s16
    // Predicated region
    $region85: #{fsda_forward.1} parent=5 // pred_check
      %p4667 = pneg %p4666
    $region86: #{fsda_forward.1} parent=5 // pred_check_branch
      %4669 = sbr.rel (%p4667) target = $region88
    $region87: #{fsda_forward.1} parent=5 // pred_region
      %s4670 = ssub.s32 %s16, 2
      // Predicated region
      $region89: #{fsda_forward.1} parent=87 // pred_check
        %p4671 = pneg %p258
      $region90: #{fsda_forward.1} parent=87 // pred_check_branch
        %4673 = sbr.rel (%p4671) target = $region92
      $region91: #{fsda_forward.1} parent=87 // pred_region
        %s4674 = smul.u32 %s30, %s31
        %s4675 = smul.u32 2, %s4674
        %p4676 = scmp.lt.s32.totalorder %s29, 1
        %s4677 = scalar_select %p4676, %s29, 1
        %p4678 = scmp.lt.s32.totalorder %s4675, 1
        %s4679 = scalar_select %p4678, %s4675, 1
        %s4680 = smul.addr %s4677, 8
        %s4681 = sadd.s32 %s4679, %s4680
        %s4682 = smul.addr %s4681, 8
        %s4683 = scalar_lea.vmem %s8, %s4682
      $region92: #{fsda_forward.1} parent=87 // pred_fallthru
        _
      // Predicated region
      $region93: #{fsda_forward.1} parent=87 // pred_check
        %p4684 = pneg %p288
      $region94: #{fsda_forward.1} parent=87 // pred_check_branch
        %4686 = sbr.rel (%p4684) target = $region96
      $region95: #{fsda_forward.1} parent=87 // pred_region
        %s4687 = smul.u32 %s30, %s31
        %s4688 = smul.u32 2, %s4687
        %p4689 = scmp.lt.s32.totalorder %s29, 1
        %s4690 = scalar_select %p4689, %s29, 1
        %p4691 = scmp.lt.s32.totalorder %s4688, 1
        %s4692 = scalar_select %p4691, %s4688, 1
        %s4693 = smul.addr %s4690, 8
        %s4694 = sadd.s32 %s4692, %s4693
        %s4695 = smul.addr %s4694, 8
        %s4696 = scalar_lea.vmem %s9, %s4695
      $region96: #{fsda_forward.1} parent=87 // pred_fallthru
        _
    $region88: #{fsda_forward.1} parent=5 // pred_fallthru
      _
  $region6: #{fsda_forward.1} parent=0 // loop_footer
    %s20 = sadd.s32 1, %s16
  $region7: #{fsda_forward.1} parent=0 // loop_footer_branch
    %15 = sbr.rel target = $region3
  $region8: #{fsda_forward.1} parent=0 // loop_exit
    _

</llo_original>
